<compile_context>
chip_gen: v7x
topology: tpu7x:2x2x1
jax: 0.10.0
libtpu: 0.0.40
codegen_flags: <defaults>
</compile_context>

<pallas_src>
import functools
import math

import jax
import jax.numpy as jnp
from jax.experimental import pallas as pl
from jax.experimental.pallas import tpu as pltpu


# ----------------------------------------------------------------------------
# Fused wavefront kernel: LSTM layer0 + layer1 interleaved, then hidden2tag
# ----------------------------------------------------------------------------
def _ner_lstm_wavefront_kernel(
    x_ref,        # (T*Bp, D)    bf16  time-major, batch-padded inputs
    wih0_ref,     # (D, 4H)      bf16  layer-0 input->gates weights (i,f,g,o)
    b0_ref,       # (1, 4H)      f32   layer-0 combined bias (b_ih + b_hh)
    wfused_ref,   # (2H, 8H)     bf16  [[Whh0, Wih1], [0, Whh1]]
    b1_ref,       # (1, 4H)      f32   layer-1 combined bias
    wtag_ref,     # (H, Cpad)    bf16  head weights, lane-padded
    btag_ref,     # (1, Cpad)    f32   head bias, lane-padded
    out_ref,      # (T*Bp, Cpad) bf16  logits (lane-dense, padded)
    gx0_scr,      # (T*Bp, 4H)   f32   hoisted layer-0 input projection
    h1seq_scr,    # (T*Bp, H)    f32   layer-1 hidden sequence (head input)
    hcat_scr,     # (Bp, 2H)     bf16  [h0 | h1] carries (MXU LHS)
    c0_scr,       # (Bp, H)      f32   layer-0 cell carry
    c1_scr,       # (Bp, H)      f32   layer-1 cell carry
):
    Bp, H2 = hcat_scr.shape
    H = H2 // 2
    T = h1seq_scr.shape[0] // Bp

    # Hoisted layer-0 input projection: one big MXU matmul over all T*Bp rows.
    gx0_scr[...] = (
        jnp.dot(x_ref[...], wih0_ref[...], preferred_element_type=jnp.float32)
        + b0_ref[...]
    )

    hcat_scr[...] = jnp.zeros_like(hcat_scr)
    c0_scr[...] = jnp.zeros_like(c0_scr)
    c1_scr[...] = jnp.zeros_like(c1_scr)

    wfused = wfused_ref[...]
    b1 = b1_ref[...]

    def lstm_cell(gates, c_prev):
        # gates: (Bp, 4H) f32, PyTorch gate order i, f, g, o.
        # i|f are contiguous -> a single wide sigmoid slab (fewer serial EUP pushes).
        sif = jax.nn.sigmoid(gates[:, 0:2 * H])
        i_g = sif[:, 0:H]
        f_g = sif[:, H:2 * H]
        g_g = jnp.tanh(gates[:, 2 * H:3 * H])
        o_g = jax.nn.sigmoid(gates[:, 3 * H:4 * H])
        c_new = f_g * c_prev + i_g * g_g
        h_new = o_g * jnp.tanh(c_new)
        return h_new, c_new

    # Wavefront over both layers: at outer step u compute layer-0 step u and
    # layer-1 step u-1.  Serial chain length ~T+1 instead of 2T.  T is a small
    # compile-time constant here -> fully unrolled static loop (static slices).
    for u in range(T + 1):
        # One fused recurrent matmul per wavefront step:
        #   z[:, 0:4H] = h0_{u-1} @ Whh0
        #   z[:, 4H:8H] = h0_{u-1} @ Wih1 + h1_{u-2} @ Whh1
        z = jnp.dot(hcat_scr[...], wfused, preferred_element_type=jnp.float32)

        if u < T:  # layer-0 step u
            gates0 = gx0_scr[u * Bp:(u + 1) * Bp, :] + z[:, 0:4 * H]
            h0_new, c0_new = lstm_cell(gates0, c0_scr[...])
            c0_scr[...] = c0_new
            hcat_scr[:, 0:H] = h0_new.astype(jnp.bfloat16)   # bf16 carry, written once

        if u >= 1:  # layer-1 step u-1
            gates1 = z[:, 4 * H:8 * H] + b1
            h1_new, c1_new = lstm_cell(gates1, c1_scr[...])
            c1_scr[...] = c1_new
            h1seq_scr[(u - 1) * Bp:u * Bp, :] = h1_new        # full-vreg f32 store
            hcat_scr[:, H:2 * H] = h1_new.astype(jnp.bfloat16)

    # hidden2tag head: one big matmul, lane-dense bf16 output store.
    out_ref[...] = (
        jnp.dot(h1seq_scr[...].astype(jnp.bfloat16), wtag_ref[...],
                preferred_element_type=jnp.float32)
        + btag_ref[...]
    ).astype(out_ref.dtype)


# ----------------------------------------------------------------------------
# Wrapper
# ----------------------------------------------------------------------------
def ner_lstm_forward(params, input_ids):
    """NerLSTM forward (inference). input_ids: (B, T, vec_dim) float32.

    Returns logits of shape (B, T, num_classes) (== `outputs` of the PyTorch module).
    """
    B, T, D = input_ids.shape
    H = params["whh0_t"].shape[0]
    C = params["w_tag_t"].shape[1]
    Bp = ((B + 7) // 8) * 8            # pad batch to a full f32 sublane tile
    Cpad = ((C + 127) // 128) * 128    # lane-dense output width

    # Time-major, batch-padded, flattened, bf16 for the MXU.
    xt = jnp.transpose(input_ids, (1, 0, 2))                       # (T, B, D)
    xt = jnp.pad(xt, ((0, 0), (0, Bp - B), (0, 0)))                # (T, Bp, D)
    x = xt.reshape(T * Bp, D).astype(jnp.bfloat16)

    # Fused recurrent weight block: [[Whh0, Wih1], [0, Whh1]]  (2H, 8H)
    wfused = jnp.concatenate(
        [
            jnp.concatenate([params["whh0_t"], params["wih1_t"]], axis=1),
            jnp.concatenate(
                [jnp.zeros((H, 4 * H), jnp.bfloat16), params["whh1_t"]], axis=1
            ),
        ],
        axis=0,
    )

    # Lane-pad the head so the single HBM writeback is a multiple of 128 lanes.
    wtag_pad = jnp.zeros((H, Cpad), jnp.bfloat16).at[:, :C].set(params["w_tag_t"])
    btag_pad = jnp.zeros((1, Cpad), jnp.float32).at[:, :C].set(params["b_tag"])

    def nbytes(shape, dtype):
        return math.prod(shape) * jnp.dtype(dtype).itemsize

    # Resident footprint: inputs + output + scratch (single grid step, no
    # double buffering).  2x headroom, clamped to 64 MiB (valid on v7x too).
    resident = (
        nbytes((T * Bp, D), jnp.bfloat16)
        + nbytes((D, 4 * H), jnp.bfloat16)
        + nbytes((1, 4 * H), jnp.float32) * 2
        + nbytes((2 * H, 8 * H), jnp.bfloat16)
        + nbytes((H, Cpad), jnp.bfloat16)
        + nbytes((1, Cpad), jnp.float32)
        + nbytes((T * Bp, Cpad), jnp.bfloat16)
        + nbytes((T * Bp, 4 * H), jnp.float32)
        + nbytes((T * Bp, H), jnp.float32)
        + nbytes((Bp, 2 * H), jnp.bfloat16)
        + nbytes((Bp, H), jnp.float32) * 2
    )
    vmem_limit = int(min(max(2 * resident, 8 << 20), 64 << 20))

    full = lambda shape: pl.BlockSpec(shape, lambda: tuple(0 for _ in shape))

    logits_pad = pl.pallas_call(
        _ner_lstm_wavefront_kernel,
        out_shape=jax.ShapeDtypeStruct((T * Bp, Cpad), jnp.bfloat16),
        grid=(),  # single invocation: weights + whole sequence VMEM-resident
        in_specs=[
            full((T * Bp, D)),        # x
            full((D, 4 * H)),         # wih0
            full((1, 4 * H)),         # b0
            full((2 * H, 8 * H)),     # wfused
            full((1, 4 * H)),         # b1
            full((H, Cpad)),          # wtag (padded)
            full((1, Cpad)),          # btag (padded)
        ],
        out_specs=full((T * Bp, Cpad)),
        scratch_shapes=[
            pltpu.VMEM((T * Bp, 4 * H), jnp.float32),   # hoisted layer-0 gates
            pltpu.VMEM((T * Bp, H), jnp.float32),       # layer-1 hidden sequence
            pltpu.VMEM((Bp, 2 * H), jnp.bfloat16),      # [h0 | h1] bf16 carries
            pltpu.VMEM((Bp, H), jnp.float32),           # c0 carry
            pltpu.VMEM((Bp, H), jnp.float32),           # c1 carry
        ],
        compiler_params=pltpu.CompilerParams(vmem_limit_bytes=vmem_limit),
    )(x, params["wih0_t"], params["b0"], wfused, params["b1"],
      wtag_pad, btag_pad)

    logits = logits_pad[:, :C].astype(jnp.float32).reshape(T, Bp, C)[:, :B, :]
    return jnp.transpose(logits, (1, 0, 2))  # (B, T, C)


# ----------------------------------------------------------------------------
# Pure-JAX reference (same bf16 operand / f32 accumulation choices)
# ----------------------------------------------------------------------------
def ner_lstm_ref(params, input_ids):
    B, T, D = input_ids.shape
    H = params["whh0_t"].shape[0]
    xt = jnp.transpose(input_ids, (1, 0, 2)).astype(jnp.bfloat16)  # (T, B, D)

    def layer(xs_bf16, wih, whh, b):
        Tn, Bn, Din = xs_bf16.shape
        gx = (jnp.dot(xs_bf16.reshape(Tn * Bn, Din), wih,
                      preferred_element_type=jnp.float32) + b).reshape(Tn, Bn, 4 * H)

        def step(carry, g_t):
            h_bf16, c = carry
            gates = g_t + jnp.dot(h_bf16, whh, preferred_element_type=jnp.float32)
            i_g = jax.nn.sigmoid(gates[:, 0 * H:1 * H])
            f_g = jax.nn.sigmoid(gates[:, 1 * H:2 * H])
            g_g = jnp.tanh(gates[:, 2 * H:3 * H])
            o_g = jax.nn.sigmoid(gates[:, 3 * H:4 * H])
            c = f_g * c + i_g * g_g
            h = o_g * jnp.tanh(c)
            h_bf16 = h.astype(jnp.bfloat16)
            return (h_bf16, c), h_bf16

        init = (jnp.zeros((Bn, H), jnp.bfloat16), jnp.zeros((Bn, H), jnp.float32))
        _, hs = jax.lax.scan(step, init, gx)
        return hs  # (T, B, H) bf16

    h0 = layer(xt, params["wih0_t"], params["whh0_t"], params["b0"])
    h1 = layer(h0, params["wih1_t"], params["whh1_t"], params["b1"])
    logits = (jnp.dot(h1.reshape(T * B, H), params["w_tag_t"],
                      preferred_element_type=jnp.float32) + params["b_tag"])
    C = logits.shape[-1]
    return jnp.transpose(logits.reshape(T, B, C), (1, 0, 2))


# ----------------------------------------------------------------------------
# Deterministic parameter init (PyTorch-style uniform(-1/sqrt(H), 1/sqrt(H)))
# ----------------------------------------------------------------------------
def init_params(key, vec_dim, hidden_dim, num_classes):
    bound = float(hidden_dim) ** -0.5
    keys = jax.random.split(key, 10)

    def u(k, shape):
        return jax.random.uniform(k, shape, jnp.float32, -bound, bound)

    H = hidden_dim
    return {
        # layer 0: weight_ih_l0 (4H, D) stored transposed as (D, 4H); gate order i,f,g,o
        "wih0_t": u(keys[0], (vec_dim, 4 * H)).astype(jnp.bfloat16),
        "whh0_t": u(keys[1], (H, 4 * H)).astype(jnp.bfloat16),
        "b0": u(keys[2], (1, 4 * H)) + u(keys[3], (1, 4 * H)),  # b_ih + b_hh (f32)
        # layer 1
        "wih1_t": u(keys[4], (H, 4 * H)).astype(jnp.bfloat16),
        "whh1_t": u(keys[5], (H, 4 * H)).astype(jnp.bfloat16),
        "b1": u(keys[6], (1, 4 * H)) + u(keys[7], (1, 4 * H)),
        # hidden2tag: weight (C, H) stored transposed as (H, C)
        "w_tag_t": u(keys[8], (H, num_classes)).astype(jnp.bfloat16),
        "b_tag": u(keys[9], (1, num_classes)),
    }


# ----------------------------------------------------------------------------
# Main
# ----------------------------------------------------------------------------
if __name__ == "__main__":
    B, T = 2, 8           # batch, sequence length
    VEC_DIM = 16          # input embedding dim
    HIDDEN = 128          # hidden_dim (module default; lane-aligned gates)
    NUM_CLASSES = 2       # module's loss uses view(-1, 2) => 2 classes

    key = jax.random.PRNGKey(0)
    k_params, k_x = jax.random.split(key)
    params = init_params(k_params, VEC_DIM, HIDDEN, NUM_CLASSES)
    input_ids = jax.random.normal(k_x, (B, T, VEC_DIM), dtype=jnp.float32)

    fwd = jax.jit(functools.partial(ner_lstm_forward, params))
    out = jax.block_until_ready(fwd(input_ids))

    ref = jax.block_until_ready(ner_lstm_ref(params, input_ids))
    assert out.shape == (B, T, NUM_CLASSES), out.shape
    # bf16 operands / f32 accumulation in both paths (kernel output store is
    # bf16): tolerance covers transcendental / accumulation-order / output-cast
    # differences between Mosaic and XLA.
    assert jnp.allclose(out, ref, atol=2e-2, rtol=2e-2), float(
        jnp.max(jnp.abs(out - ref))
    )

    print("KERNEL_OK")
</pallas_src>

<mosaic_0001>
module attributes {stable_mosaic.version = 11 : i64} {
  func.func @_ner_lstm_wavefront_kernel(%arg0: memref<64x16xbf16, #tpu.memory_space<vmem>>, %arg1: memref<16x512xbf16, #tpu.memory_space<vmem>>, %arg2: memref<1x512xf32, #tpu.memory_space<vmem>>, %arg3: memref<256x1024xbf16, #tpu.memory_space<vmem>>, %arg4: memref<1x512xf32, #tpu.memory_space<vmem>>, %arg5: memref<128x128xbf16, #tpu.memory_space<vmem>>, %arg6: memref<1x128xf32, #tpu.memory_space<vmem>>, %arg7: memref<64x128xbf16, #tpu.memory_space<vmem>>, %arg8: memref<64x512xf32, #tpu.memory_space<vmem>>, %arg9: memref<64x128xf32, #tpu.memory_space<vmem>>, %arg10: memref<8x256xbf16, #tpu.memory_space<vmem>>, %arg11: memref<8x128xf32, #tpu.memory_space<vmem>>, %arg12: memref<8x128xf32, #tpu.memory_space<vmem>>) attributes {dimension_semantics = [], scalar_prefetch = 0 : i64, scratch_operands = 5 : i64, tpu.core_type = #tpu.core_type<tc>} {
    %c0 = arith.constant 0 : index
    %c0_0 = arith.constant 0 : index
    %0 = vector.load %arg0[%c0, %c0_0] : memref<64x16xbf16, #tpu.memory_space<vmem>>, vector<64x16xbf16>
    %c0_1 = arith.constant 0 : index
    %c0_2 = arith.constant 0 : index
    %1 = vector.load %arg1[%c0_1, %c0_2] : memref<16x512xbf16, #tpu.memory_space<vmem>>, vector<16x512xbf16>
    %cst = arith.constant dense<0.000000e+00> : vector<64x512xf32>
    %2 = tpu.matmul %0, %1, %cst {dimension_numbers = #tpu.dot_dimension_numbers<[1], [0], [0], [1], [0, 0, 1, 1], [], []>} : vector<64x16xbf16>, vector<16x512xbf16>, vector<64x512xf32> -> vector<64x512xf32>
    %c0_3 = arith.constant 0 : index
    %c0_4 = arith.constant 0 : index
    %3 = vector.load %arg2[%c0_3, %c0_4] : memref<1x512xf32, #tpu.memory_space<vmem>>, vector<1x512xf32>
    %4 = vector.broadcast %3 : vector<1x512xf32> to vector<64x512xf32>
    %5 = arith.addf %2, %4 : vector<64x512xf32>
    %c0_5 = arith.constant 0 : index
    %c0_6 = arith.constant 0 : index
    %6 = vector.load %arg8[%c0_5, %c0_6] : memref<64x512xf32, #tpu.memory_space<vmem>>, vector<64x512xf32>
    tpu.vector_store %arg8[%c0_5, %c0_6], %5 {strides = array<i32>} : memref<64x512xf32, #tpu.memory_space<vmem>>, vector<64x512xf32>,
    %cst_7 = arith.constant 0.000000e+00 : bf16
    %7 = vector.broadcast %cst_7 : bf16 to vector<8x256xbf16>
    %c0_8 = arith.constant 0 : index
    %c0_9 = arith.constant 0 : index
    %8 = vector.load %arg10[%c0_8, %c0_9] : memref<8x256xbf16, #tpu.memory_space<vmem>>, vector<8x256xbf16>
    tpu.vector_store %arg10[%c0_8, %c0_9], %7 {strides = array<i32>} : memref<8x256xbf16, #tpu.memory_space<vmem>>, vector<8x256xbf16>,
    %cst_10 = arith.constant 0.000000e+00 : f32
    %9 = vector.broadcast %cst_10 : f32 to vector<8x128xf32>
    %c0_11 = arith.constant 0 : index
    %c0_12 = arith.constant 0 : index
    %10 = vector.load %arg11[%c0_11, %c0_12] : memref<8x128xf32, #tpu.memory_space<vmem>>, vector<8x128xf32>
    tpu.vector_store %arg11[%c0_11, %c0_12], %9 {strides = array<i32>} : memref<8x128xf32, #tpu.memory_space<vmem>>, vector<8x128xf32>,
    %cst_13 = arith.constant 0.000000e+00 : f32
    %11 = vector.broadcast %cst_13 : f32 to vector<8x128xf32>
    %c0_14 = arith.constant 0 : index
    %c0_15 = arith.constant 0 : index
    %12 = vector.load %arg12[%c0_14, %c0_15] : memref<8x128xf32, #tpu.memory_space<vmem>>, vector<8x128xf32>
    tpu.vector_store %arg12[%c0_14, %c0_15], %11 {strides = array<i32>} : memref<8x128xf32, #tpu.memory_space<vmem>>, vector<8x128xf32>,
    %c0_16 = arith.constant 0 : index
    %c0_17 = arith.constant 0 : index
    %13 = vector.load %arg3[%c0_16, %c0_17] : memref<256x1024xbf16, #tpu.memory_space<vmem>>, vector<256x1024xbf16>
    %c0_18 = arith.constant 0 : index
    %c0_19 = arith.constant 0 : index
    %14 = vector.load %arg4[%c0_18, %c0_19] : memref<1x512xf32, #tpu.memory_space<vmem>>, vector<1x512xf32>
    %c0_20 = arith.constant 0 : index
    %c0_21 = arith.constant 0 : index
    %15 = vector.load %arg10[%c0_20, %c0_21] : memref<8x256xbf16, #tpu.memory_space<vmem>>, vector<8x256xbf16>
    %cst_22 = arith.constant dense<0.000000e+00> : vector<8x1024xf32>
    %16 = tpu.matmul %15, %13, %cst_22 {dimension_numbers = #tpu.dot_dimension_numbers<[1], [0], [0], [1], [0, 0, 1, 1], [], []>} : vector<8x256xbf16>, vector<256x1024xbf16>, vector<8x1024xf32> -> vector<8x1024xf32>
    %c0_23 = arith.constant 0 : index
    %c0_24 = arith.constant 0 : index
    %17 = vector.load %arg8[%c0_23, %c0_24] : memref<64x512xf32, #tpu.memory_space<vmem>>, vector<8x512xf32>
    %18 = vector.extract_strided_slice %16 {offsets = [0, 0], sizes = [8, 512], strides = [1, 1]} : vector<8x1024xf32> to vector<8x512xf32>
    %19 = arith.addf %17, %18 : vector<8x512xf32>
    %c0_25 = arith.constant 0 : index
    %c0_26 = arith.constant 0 : index
    %20 = vector.load %arg11[%c0_25, %c0_26] : memref<8x128xf32, #tpu.memory_space<vmem>>, vector<8x128xf32>
    %21 = vector.extract_strided_slice %19 {offsets = [0, 0], sizes = [8, 256], strides = [1, 1]} : vector<8x512xf32> to vector<8x256xf32>
    %22 = arith.negf %21 : vector<8x256xf32>
    %23 = math.exp %22 : vector<8x256xf32>
    %cst_27 = arith.constant 1.000000e+00 : f32
    %24 = vector.broadcast %cst_27 : f32 to vector<8x256xf32>
    %25 = arith.addf %24, %23 : vector<8x256xf32>
    %26 = arith.divf %24, %25 : vector<8x256xf32>
    %27 = vector.extract_strided_slice %26 {offsets = [0, 0], sizes = [8, 128], strides = [1, 1]} : vector<8x256xf32> to vector<8x128xf32>
    %28 = vector.extract_strided_slice %26 {offsets = [0, 128], sizes = [8, 128], strides = [1, 1]} : vector<8x256xf32> to vector<8x128xf32>
    %29 = vector.extract_strided_slice %19 {offsets = [0, 256], sizes = [8, 128], strides = [1, 1]} : vector<8x512xf32> to vector<8x128xf32>
    %30 = math.tanh %29 : vector<8x128xf32>
    %31 = vector.extract_strided_slice %19 {offsets = [0, 384], sizes = [8, 128], strides = [1, 1]} : vector<8x512xf32> to vector<8x128xf32>
    %32 = arith.negf %31 : vector<8x128xf32>
    %33 = math.exp %32 : vector<8x128xf32>
    %cst_28 = arith.constant 1.000000e+00 : f32
    %34 = vector.broadcast %cst_28 : f32 to vector<8x128xf32>
    %35 = arith.addf %34, %33 : vector<8x128xf32>
    %36 = arith.divf %34, %35 : vector<8x128xf32>
    %37 = arith.mulf %28, %20 : vector<8x128xf32>
    %38 = arith.mulf %27, %30 : vector<8x128xf32>
    %39 = arith.addf %37, %38 : vector<8x128xf32>
    %40 = math.tanh %39 : vector<8x128xf32>
    %41 = arith.mulf %36, %40 : vector<8x128xf32>
    %c0_29 = arith.constant 0 : index
    %c0_30 = arith.constant 0 : index
    %42 = vector.load %arg11[%c0_29, %c0_30] : memref<8x128xf32, #tpu.memory_space<vmem>>, vector<8x128xf32>
    tpu.vector_store %arg11[%c0_29, %c0_30], %39 {strides = array<i32>} : memref<8x128xf32, #tpu.memory_space<vmem>>, vector<8x128xf32>,
    %43 = arith.truncf %41 : vector<8x128xf32> to vector<8x128xbf16>
    %c0_31 = arith.constant 0 : index
    %c0_32 = arith.constant 0 : index
    %44 = vector.load %arg10[%c0_31, %c0_32] : memref<8x256xbf16, #tpu.memory_space<vmem>>, vector<8x128xbf16>
    tpu.vector_store %arg10[%c0_31, %c0_32], %43 {strides = array<i32>} : memref<8x256xbf16, #tpu.memory_space<vmem>>, vector<8x128xbf16>,
    %c0_33 = arith.constant 0 : index
    %c0_34 = arith.constant 0 : index
    %45 = vector.load %arg10[%c0_33, %c0_34] : memref<8x256xbf16, #tpu.memory_space<vmem>>, vector<8x256xbf16>
    %cst_35 = arith.constant dense<0.000000e+00> : vector<8x1024xf32>
    %46 = tpu.matmul %45, %13, %cst_35 {dimension_numbers = #tpu.dot_dimension_numbers<[1], [0], [0], [1], [0, 0, 1, 1], [], []>} : vector<8x256xbf16>, vector<256x1024xbf16>, vector<8x1024xf32> -> vector<8x1024xf32>
    %c8 = arith.constant 8 : index
    %c0_36 = arith.constant 0 : index
    %47 = vector.load %arg8[%c8, %c0_36] : memref<64x512xf32, #tpu.memory_space<vmem>>, vector<8x512xf32>
    %48 = vector.extract_strided_slice %46 {offsets = [0, 0], sizes = [8, 512], strides = [1, 1]} : vector<8x1024xf32> to vector<8x512xf32>
    %49 = arith.addf %47, %48 : vector<8x512xf32>
    %c0_37 = arith.constant 0 : index
    %c0_38 = arith.constant 0 : index
    %50 = vector.load %arg11[%c0_37, %c0_38] : memref<8x128xf32, #tpu.memory_space<vmem>>, vector<8x128xf32>
    %51 = vector.extract_strided_slice %49 {offsets = [0, 0], sizes = [8, 256], strides = [1, 1]} : vector<8x512xf32> to vector<8x256xf32>
    %52 = arith.negf %51 : vector<8x256xf32>
    %53 = math.exp %52 : vector<8x256xf32>
    %cst_39 = arith.constant 1.000000e+00 : f32
    %54 = vector.broadcast %cst_39 : f32 to vector<8x256xf32>
    %55 = arith.addf %54, %53 : vector<8x256xf32>
    %56 = arith.divf %54, %55 : vector<8x256xf32>
    %57 = vector.extract_strided_slice %56 {offsets = [0, 0], sizes = [8, 128], strides = [1, 1]} : vector<8x256xf32> to vector<8x128xf32>
    %58 = vector.extract_strided_slice %56 {offsets = [0, 128], sizes = [8, 128], strides = [1, 1]} : vector<8x256xf32> to vector<8x128xf32>
    %59 = vector.extract_strided_slice %49 {offsets = [0, 256], sizes = [8, 128], strides = [1, 1]} : vector<8x512xf32> to vector<8x128xf32>
    %60 = math.tanh %59 : vector<8x128xf32>
    %61 = vector.extract_strided_slice %49 {offsets = [0, 384], sizes = [8, 128], strides = [1, 1]} : vector<8x512xf32> to vector<8x128xf32>
    %62 = arith.negf %61 : vector<8x128xf32>
    %63 = math.exp %62 : vector<8x128xf32>
    %cst_40 = arith.constant 1.000000e+00 : f32
    %64 = vector.broadcast %cst_40 : f32 to vector<8x128xf32>
    %65 = arith.addf %64, %63 : vector<8x128xf32>
    %66 = arith.divf %64, %65 : vector<8x128xf32>
    %67 = arith.mulf %58, %50 : vector<8x128xf32>
    %68 = arith.mulf %57, %60 : vector<8x128xf32>
    %69 = arith.addf %67, %68 : vector<8x128xf32>
    %70 = math.tanh %69 : vector<8x128xf32>
    %71 = arith.mulf %66, %70 : vector<8x128xf32>
    %c0_41 = arith.constant 0 : index
    %c0_42 = arith.constant 0 : index
    %72 = vector.load %arg11[%c0_41, %c0_42] : memref<8x128xf32, #tpu.memory_space<vmem>>, vector<8x128xf32>
    tpu.vector_store %arg11[%c0_41, %c0_42], %69 {strides = array<i32>} : memref<8x128xf32, #tpu.memory_space<vmem>>, vector<8x128xf32>,
    %73 = arith.truncf %71 : vector<8x128xf32> to vector<8x128xbf16>
    %c0_43 = arith.constant 0 : index
    %c0_44 = arith.constant 0 : index
    %74 = vector.load %arg10[%c0_43, %c0_44] : memref<8x256xbf16, #tpu.memory_space<vmem>>, vector<8x128xbf16>
    tpu.vector_store %arg10[%c0_43, %c0_44], %73 {strides = array<i32>} : memref<8x256xbf16, #tpu.memory_space<vmem>>, vector<8x128xbf16>,
    %75 = vector.extract_strided_slice %46 {offsets = [0, 512], sizes = [8, 512], strides = [1, 1]} : vector<8x1024xf32> to vector<8x512xf32>
    %76 = vector.broadcast %14 : vector<1x512xf32> to vector<8x512xf32>
    %77 = arith.addf %75, %76 : vector<8x512xf32>
    %c0_45 = arith.constant 0 : index
    %c0_46 = arith.constant 0 : index
    %78 = vector.load %arg12[%c0_45, %c0_46] : memref<8x128xf32, #tpu.memory_space<vmem>>, vector<8x128xf32>
    %79 = vector.extract_strided_slice %77 {offsets = [0, 0], sizes = [8, 256], strides = [1, 1]} : vector<8x512xf32> to vector<8x256xf32>
    %80 = arith.negf %79 : vector<8x256xf32>
    %81 = math.exp %80 : vector<8x256xf32>
    %cst_47 = arith.constant 1.000000e+00 : f32
    %82 = vector.broadcast %cst_47 : f32 to vector<8x256xf32>
    %83 = arith.addf %82, %81 : vector<8x256xf32>
    %84 = arith.divf %82, %83 : vector<8x256xf32>
    %85 = vector.extract_strided_slice %84 {offsets = [0, 0], sizes = [8, 128], strides = [1, 1]} : vector<8x256xf32> to vector<8x128xf32>
    %86 = vector.extract_strided_slice %84 {offsets = [0, 128], sizes = [8, 128], strides = [1, 1]} : vector<8x256xf32> to vector<8x128xf32>
    %87 = vector.extract_strided_slice %77 {offsets = [0, 256], sizes = [8, 128], strides = [1, 1]} : vector<8x512xf32> to vector<8x128xf32>
    %88 = math.tanh %87 : vector<8x128xf32>
    %89 = vector.extract_strided_slice %77 {offsets = [0, 384], sizes = [8, 128], strides = [1, 1]} : vector<8x512xf32> to vector<8x128xf32>
    %90 = arith.negf %89 : vector<8x128xf32>
    %91 = math.exp %90 : vector<8x128xf32>
    %cst_48 = arith.constant 1.000000e+00 : f32
    %92 = vector.broadcast %cst_48 : f32 to vector<8x128xf32>
    %93 = arith.addf %92, %91 : vector<8x128xf32>
    %94 = arith.divf %92, %93 : vector<8x128xf32>
    %95 = arith.mulf %86, %78 : vector<8x128xf32>
    %96 = arith.mulf %85, %88 : vector<8x128xf32>
    %97 = arith.addf %95, %96 : vector<8x128xf32>
    %98 = math.tanh %97 : vector<8x128xf32>
    %99 = arith.mulf %94, %98 : vector<8x128xf32>
    %c0_49 = arith.constant 0 : index
    %c0_50 = arith.constant 0 : index
    %100 = vector.load %arg12[%c0_49, %c0_50] : memref<8x128xf32, #tpu.memory_space<vmem>>, vector<8x128xf32>
    tpu.vector_store %arg12[%c0_49, %c0_50], %97 {strides = array<i32>} : memref<8x128xf32, #tpu.memory_space<vmem>>, vector<8x128xf32>,
    %c0_51 = arith.constant 0 : index
    %c0_52 = arith.constant 0 : index
    %101 = vector.load %arg9[%c0_51, %c0_52] : memref<64x128xf32, #tpu.memory_space<vmem>>, vector<8x128xf32>
    tpu.vector_store %arg9[%c0_51, %c0_52], %99 {strides = array<i32>} : memref<64x128xf32, #tpu.memory_space<vmem>>, vector<8x128xf32>,
    %102 = arith.truncf %99 : vector<8x128xf32> to vector<8x128xbf16>
    %c0_53 = arith.constant 0 : index
    %c128 = arith.constant 128 : index
    %103 = vector.load %arg10[%c0_53, %c128] : memref<8x256xbf16, #tpu.memory_space<vmem>>, vector<8x128xbf16>
    tpu.vector_store %arg10[%c0_53, %c128], %102 {strides = array<i32>} : memref<8x256xbf16, #tpu.memory_space<vmem>>, vector<8x128xbf16>,
    %c0_54 = arith.constant 0 : index
    %c0_55 = arith.constant 0 : index
    %104 = vector.load %arg10[%c0_54, %c0_55] : memref<8x256xbf16, #tpu.memory_space<vmem>>, vector<8x256xbf16>
    %cst_56 = arith.constant dense<0.000000e+00> : vector<8x1024xf32>
    %105 = tpu.matmul %104, %13, %cst_56 {dimension_numbers = #tpu.dot_dimension_numbers<[1], [0], [0], [1], [0, 0, 1, 1], [], []>} : vector<8x256xbf16>, vector<256x1024xbf16>, vector<8x1024xf32> -> vector<8x1024xf32>
    %c16 = arith.constant 16 : index
    %c0_57 = arith.constant 0 : index
    %106 = vector.load %arg8[%c16, %c0_57] : memref<64x512xf32, #tpu.memory_space<vmem>>, vector<8x512xf32>
    %107 = vector.extract_strided_slice %105 {offsets = [0, 0], sizes = [8, 512], strides = [1, 1]} : vector<8x1024xf32> to vector<8x512xf32>
    %108 = arith.addf %106, %107 : vector<8x512xf32>
    %c0_58 = arith.constant 0 : index
    %c0_59 = arith.constant 0 : index
    %109 = vector.load %arg11[%c0_58, %c0_59] : memref<8x128xf32, #tpu.memory_space<vmem>>, vector<8x128xf32>
    %110 = vector.extract_strided_slice %108 {offsets = [0, 0], sizes = [8, 256], strides = [1, 1]} : vector<8x512xf32> to vector<8x256xf32>
    %111 = arith.negf %110 : vector<8x256xf32>
    %112 = math.exp %111 : vector<8x256xf32>
    %cst_60 = arith.constant 1.000000e+00 : f32
    %113 = vector.broadcast %cst_60 : f32 to vector<8x256xf32>
    %114 = arith.addf %113, %112 : vector<8x256xf32>
    %115 = arith.divf %113, %114 : vector<8x256xf32>
    %116 = vector.extract_strided_slice %115 {offsets = [0, 0], sizes = [8, 128], strides = [1, 1]} : vector<8x256xf32> to vector<8x128xf32>
    %117 = vector.extract_strided_slice %115 {offsets = [0, 128], sizes = [8, 128], strides = [1, 1]} : vector<8x256xf32> to vector<8x128xf32>
    %118 = vector.extract_strided_slice %108 {offsets = [0, 256], sizes = [8, 128], strides = [1, 1]} : vector<8x512xf32> to vector<8x128xf32>
    %119 = math.tanh %118 : vector<8x128xf32>
    %120 = vector.extract_strided_slice %108 {offsets = [0, 384], sizes = [8, 128], strides = [1, 1]} : vector<8x512xf32> to vector<8x128xf32>
    %121 = arith.negf %120 : vector<8x128xf32>
    %122 = math.exp %121 : vector<8x128xf32>
    %cst_61 = arith.constant 1.000000e+00 : f32
    %123 = vector.broadcast %cst_61 : f32 to vector<8x128xf32>
    %124 = arith.addf %123, %122 : vector<8x128xf32>
    %125 = arith.divf %123, %124 : vector<8x128xf32>
    %126 = arith.mulf %117, %109 : vector<8x128xf32>
    %127 = arith.mulf %116, %119 : vector<8x128xf32>
    %128 = arith.addf %126, %127 : vector<8x128xf32>
    %129 = math.tanh %128 : vector<8x128xf32>
    %130 = arith.mulf %125, %129 : vector<8x128xf32>
    %c0_62 = arith.constant 0 : index
    %c0_63 = arith.constant 0 : index
    %131 = vector.load %arg11[%c0_62, %c0_63] : memref<8x128xf32, #tpu.memory_space<vmem>>, vector<8x128xf32>
    tpu.vector_store %arg11[%c0_62, %c0_63], %128 {strides = array<i32>} : memref<8x128xf32, #tpu.memory_space<vmem>>, vector<8x128xf32>,
    %132 = arith.truncf %130 : vector<8x128xf32> to vector<8x128xbf16>
    %c0_64 = arith.constant 0 : index
    %c0_65 = arith.constant 0 : index
    %133 = vector.load %arg10[%c0_64, %c0_65] : memref<8x256xbf16, #tpu.memory_space<vmem>>, vector<8x128xbf16>
    tpu.vector_store %arg10[%c0_64, %c0_65], %132 {strides = array<i32>} : memref<8x256xbf16, #tpu.memory_space<vmem>>, vector<8x128xbf16>,
    %134 = vector.extract_strided_slice %105 {offsets = [0, 512], sizes = [8, 512], strides = [1, 1]} : vector<8x1024xf32> to vector<8x512xf32>
    %135 = vector.broadcast %14 : vector<1x512xf32> to vector<8x512xf32>
    %136 = arith.addf %134, %135 : vector<8x512xf32>
    %c0_66 = arith.constant 0 : index
    %c0_67 = arith.constant 0 : index
    %137 = vector.load %arg12[%c0_66, %c0_67] : memref<8x128xf32, #tpu.memory_space<vmem>>, vector<8x128xf32>
    %138 = vector.extract_strided_slice %136 {offsets = [0, 0], sizes = [8, 256], strides = [1, 1]} : vector<8x512xf32> to vector<8x256xf32>
    %139 = arith.negf %138 : vector<8x256xf32>
    %140 = math.exp %139 : vector<8x256xf32>
    %cst_68 = arith.constant 1.000000e+00 : f32
    %141 = vector.broadcast %cst_68 : f32 to vector<8x256xf32>
    %142 = arith.addf %141, %140 : vector<8x256xf32>
    %143 = arith.divf %141, %142 : vector<8x256xf32>
    %144 = vector.extract_strided_slice %143 {offsets = [0, 0], sizes = [8, 128], strides = [1, 1]} : vector<8x256xf32> to vector<8x128xf32>
    %145 = vector.extract_strided_slice %143 {offsets = [0, 128], sizes = [8, 128], strides = [1, 1]} : vector<8x256xf32> to vector<8x128xf32>
    %146 = vector.extract_strided_slice %136 {offsets = [0, 256], sizes = [8, 128], strides = [1, 1]} : vector<8x512xf32> to vector<8x128xf32>
    %147 = math.tanh %146 : vector<8x128xf32>
    %148 = vector.extract_strided_slice %136 {offsets = [0, 384], sizes = [8, 128], strides = [1, 1]} : vector<8x512xf32> to vector<8x128xf32>
    %149 = arith.negf %148 : vector<8x128xf32>
    %150 = math.exp %149 : vector<8x128xf32>
    %cst_69 = arith.constant 1.000000e+00 : f32
    %151 = vector.broadcast %cst_69 : f32 to vector<8x128xf32>
    %152 = arith.addf %151, %150 : vector<8x128xf32>
    %153 = arith.divf %151, %152 : vector<8x128xf32>
    %154 = arith.mulf %145, %137 : vector<8x128xf32>
    %155 = arith.mulf %144, %147 : vector<8x128xf32>
    %156 = arith.addf %154, %155 : vector<8x128xf32>
    %157 = math.tanh %156 : vector<8x128xf32>
    %158 = arith.mulf %153, %157 : vector<8x128xf32>
    %c0_70 = arith.constant 0 : index
    %c0_71 = arith.constant 0 : index
    %159 = vector.load %arg12[%c0_70, %c0_71] : memref<8x128xf32, #tpu.memory_space<vmem>>, vector<8x128xf32>
    tpu.vector_store %arg12[%c0_70, %c0_71], %156 {strides = array<i32>} : memref<8x128xf32, #tpu.memory_space<vmem>>, vector<8x128xf32>,
    %c8_72 = arith.constant 8 : index
    %c0_73 = arith.constant 0 : index
    %160 = vector.load %arg9[%c8_72, %c0_73] : memref<64x128xf32, #tpu.memory_space<vmem>>, vector<8x128xf32>
    tpu.vector_store %arg9[%c8_72, %c0_73], %158 {strides = array<i32>} : memref<64x128xf32, #tpu.memory_space<vmem>>, vector<8x128xf32>,
    %161 = arith.truncf %158 : vector<8x128xf32> to vector<8x128xbf16>
    %c0_74 = arith.constant 0 : index
    %c128_75 = arith.constant 128 : index
    %162 = vector.load %arg10[%c0_74, %c128_75] : memref<8x256xbf16, #tpu.memory_space<vmem>>, vector<8x128xbf16>
    tpu.vector_store %arg10[%c0_74, %c128_75], %161 {strides = array<i32>} : memref<8x256xbf16, #tpu.memory_space<vmem>>, vector<8x128xbf16>,
    %c0_76 = arith.constant 0 : index
    %c0_77 = arith.constant 0 : index
    %163 = vector.load %arg10[%c0_76, %c0_77] : memref<8x256xbf16, #tpu.memory_space<vmem>>, vector<8x256xbf16>
    %cst_78 = arith.constant dense<0.000000e+00> : vector<8x1024xf32>
    %164 = tpu.matmul %163, %13, %cst_78 {dimension_numbers = #tpu.dot_dimension_numbers<[1], [0], [0], [1], [0, 0, 1, 1], [], []>} : vector<8x256xbf16>, vector<256x1024xbf16>, vector<8x1024xf32> -> vector<8x1024xf32>
    %c24 = arith.constant 24 : index
    %c0_79 = arith.constant 0 : index
    %165 = vector.load %arg8[%c24, %c0_79] : memref<64x512xf32, #tpu.memory_space<vmem>>, vector<8x512xf32>
    %166 = vector.extract_strided_slice %164 {offsets = [0, 0], sizes = [8, 512], strides = [1, 1]} : vector<8x1024xf32> to vector<8x512xf32>
    %167 = arith.addf %165, %166 : vector<8x512xf32>
    %c0_80 = arith.constant 0 : index
    %c0_81 = arith.constant 0 : index
    %168 = vector.load %arg11[%c0_80, %c0_81] : memref<8x128xf32, #tpu.memory_space<vmem>>, vector<8x128xf32>
    %169 = vector.extract_strided_slice %167 {offsets = [0, 0], sizes = [8, 256], strides = [1, 1]} : vector<8x512xf32> to vector<8x256xf32>
    %170 = arith.negf %169 : vector<8x256xf32>
    %171 = math.exp %170 : vector<8x256xf32>
    %cst_82 = arith.constant 1.000000e+00 : f32
    %172 = vector.broadcast %cst_82 : f32 to vector<8x256xf32>
    %173 = arith.addf %172, %171 : vector<8x256xf32>
    %174 = arith.divf %172, %173 : vector<8x256xf32>
    %175 = vector.extract_strided_slice %174 {offsets = [0, 0], sizes = [8, 128], strides = [1, 1]} : vector<8x256xf32> to vector<8x128xf32>
    %176 = vector.extract_strided_slice %174 {offsets = [0, 128], sizes = [8, 128], strides = [1, 1]} : vector<8x256xf32> to vector<8x128xf32>
    %177 = vector.extract_strided_slice %167 {offsets = [0, 256], sizes = [8, 128], strides = [1, 1]} : vector<8x512xf32> to vector<8x128xf32>
    %178 = math.tanh %177 : vector<8x128xf32>
    %179 = vector.extract_strided_slice %167 {offsets = [0, 384], sizes = [8, 128], strides = [1, 1]} : vector<8x512xf32> to vector<8x128xf32>
    %180 = arith.negf %179 : vector<8x128xf32>
    %181 = math.exp %180 : vector<8x128xf32>
    %cst_83 = arith.constant 1.000000e+00 : f32
    %182 = vector.broadcast %cst_83 : f32 to vector<8x128xf32>
    %183 = arith.addf %182, %181 : vector<8x128xf32>
    %184 = arith.divf %182, %183 : vector<8x128xf32>
    %185 = arith.mulf %176, %168 : vector<8x128xf32>
    %186 = arith.mulf %175, %178 : vector<8x128xf32>
    %187 = arith.addf %185, %186 : vector<8x128xf32>
    %188 = math.tanh %187 : vector<8x128xf32>
    %189 = arith.mulf %184, %188 : vector<8x128xf32>
    %c0_84 = arith.constant 0 : index
    %c0_85 = arith.constant 0 : index
    %190 = vector.load %arg11[%c0_84, %c0_85] : memref<8x128xf32, #tpu.memory_space<vmem>>, vector<8x128xf32>
    tpu.vector_store %arg11[%c0_84, %c0_85], %187 {strides = array<i32>} : memref<8x128xf32, #tpu.memory_space<vmem>>, vector<8x128xf32>,
    %191 = arith.truncf %189 : vector<8x128xf32> to vector<8x128xbf16>
    %c0_86 = arith.constant 0 : index
    %c0_87 = arith.constant 0 : index
    %192 = vector.load %arg10[%c0_86, %c0_87] : memref<8x256xbf16, #tpu.memory_space<vmem>>, vector<8x128xbf16>
    tpu.vector_store %arg10[%c0_86, %c0_87], %191 {strides = array<i32>} : memref<8x256xbf16, #tpu.memory_space<vmem>>, vector<8x128xbf16>,
    %193 = vector.extract_strided_slice %164 {offsets = [0, 512], sizes = [8, 512], strides = [1, 1]} : vector<8x1024xf32> to vector<8x512xf32>
    %194 = vector.broadcast %14 : vector<1x512xf32> to vector<8x512xf32>
    %195 = arith.addf %193, %194 : vector<8x512xf32>
    %c0_88 = arith.constant 0 : index
    %c0_89 = arith.constant 0 : index
    %196 = vector.load %arg12[%c0_88, %c0_89] : memref<8x128xf32, #tpu.memory_space<vmem>>, vector<8x128xf32>
    %197 = vector.extract_strided_slice %195 {offsets = [0, 0], sizes = [8, 256], strides = [1, 1]} : vector<8x512xf32> to vector<8x256xf32>
    %198 = arith.negf %197 : vector<8x256xf32>
    %199 = math.exp %198 : vector<8x256xf32>
    %cst_90 = arith.constant 1.000000e+00 : f32
    %200 = vector.broadcast %cst_90 : f32 to vector<8x256xf32>
    %201 = arith.addf %200, %199 : vector<8x256xf32>
    %202 = arith.divf %200, %201 : vector<8x256xf32>
    %203 = vector.extract_strided_slice %202 {offsets = [0, 0], sizes = [8, 128], strides = [1, 1]} : vector<8x256xf32> to vector<8x128xf32>
    %204 = vector.extract_strided_slice %202 {offsets = [0, 128], sizes = [8, 128], strides = [1, 1]} : vector<8x256xf32> to vector<8x128xf32>
    %205 = vector.extract_strided_slice %195 {offsets = [0, 256], sizes = [8, 128], strides = [1, 1]} : vector<8x512xf32> to vector<8x128xf32>
    %206 = math.tanh %205 : vector<8x128xf32>
    %207 = vector.extract_strided_slice %195 {offsets = [0, 384], sizes = [8, 128], strides = [1, 1]} : vector<8x512xf32> to vector<8x128xf32>
    %208 = arith.negf %207 : vector<8x128xf32>
    %209 = math.exp %208 : vector<8x128xf32>
    %cst_91 = arith.constant 1.000000e+00 : f32
    %210 = vector.broadcast %cst_91 : f32 to vector<8x128xf32>
    %211 = arith.addf %210, %209 : vector<8x128xf32>
    %212 = arith.divf %210, %211 : vector<8x128xf32>
    %213 = arith.mulf %204, %196 : vector<8x128xf32>
    %214 = arith.mulf %203, %206 : vector<8x128xf32>
    %215 = arith.addf %213, %214 : vector<8x128xf32>
    %216 = math.tanh %215 : vector<8x128xf32>
    %217 = arith.mulf %212, %216 : vector<8x128xf32>
    %c0_92 = arith.constant 0 : index
    %c0_93 = arith.constant 0 : index
    %218 = vector.load %arg12[%c0_92, %c0_93] : memref<8x128xf32, #tpu.memory_space<vmem>>, vector<8x128xf32>
    tpu.vector_store %arg12[%c0_92, %c0_93], %215 {strides = array<i32>} : memref<8x128xf32, #tpu.memory_space<vmem>>, vector<8x128xf32>,
    %c16_94 = arith.constant 16 : index
    %c0_95 = arith.constant 0 : index
    %219 = vector.load %arg9[%c16_94, %c0_95] : memref<64x128xf32, #tpu.memory_space<vmem>>, vector<8x128xf32>
    tpu.vector_store %arg9[%c16_94, %c0_95], %217 {strides = array<i32>} : memref<64x128xf32, #tpu.memory_space<vmem>>, vector<8x128xf32>,
    %220 = arith.truncf %217 : vector<8x128xf32> to vector<8x128xbf16>
    %c0_96 = arith.constant 0 : index
    %c128_97 = arith.constant 128 : index
    %221 = vector.load %arg10[%c0_96, %c128_97] : memref<8x256xbf16, #tpu.memory_space<vmem>>, vector<8x128xbf16>
    tpu.vector_store %arg10[%c0_96, %c128_97], %220 {strides = array<i32>} : memref<8x256xbf16, #tpu.memory_space<vmem>>, vector<8x128xbf16>,
    %c0_98 = arith.constant 0 : index
    %c0_99 = arith.constant 0 : index
    %222 = vector.load %arg10[%c0_98, %c0_99] : memref<8x256xbf16, #tpu.memory_space<vmem>>, vector<8x256xbf16>
    %cst_100 = arith.constant dense<0.000000e+00> : vector<8x1024xf32>
    %223 = tpu.matmul %222, %13, %cst_100 {dimension_numbers = #tpu.dot_dimension_numbers<[1], [0], [0], [1], [0, 0, 1, 1], [], []>} : vector<8x256xbf16>, vector<256x1024xbf16>, vector<8x1024xf32> -> vector<8x1024xf32>
    %c32 = arith.constant 32 : index
    %c0_101 = arith.constant 0 : index
    %224 = vector.load %arg8[%c32, %c0_101] : memref<64x512xf32, #tpu.memory_space<vmem>>, vector<8x512xf32>
    %225 = vector.extract_strided_slice %223 {offsets = [0, 0], sizes = [8, 512], strides = [1, 1]} : vector<8x1024xf32> to vector<8x512xf32>
    %226 = arith.addf %224, %225 : vector<8x512xf32>
    %c0_102 = arith.constant 0 : index
    %c0_103 = arith.constant 0 : index
    %227 = vector.load %arg11[%c0_102, %c0_103] : memref<8x128xf32, #tpu.memory_space<vmem>>, vector<8x128xf32>
    %228 = vector.extract_strided_slice %226 {offsets = [0, 0], sizes = [8, 256], strides = [1, 1]} : vector<8x512xf32> to vector<8x256xf32>
    %229 = arith.negf %228 : vector<8x256xf32>
    %230 = math.exp %229 : vector<8x256xf32>
    %cst_104 = arith.constant 1.000000e+00 : f32
    %231 = vector.broadcast %cst_104 : f32 to vector<8x256xf32>
    %232 = arith.addf %231, %230 : vector<8x256xf32>
    %233 = arith.divf %231, %232 : vector<8x256xf32>
    %234 = vector.extract_strided_slice %233 {offsets = [0, 0], sizes = [8, 128], strides = [1, 1]} : vector<8x256xf32> to vector<8x128xf32>
    %235 = vector.extract_strided_slice %233 {offsets = [0, 128], sizes = [8, 128], strides = [1, 1]} : vector<8x256xf32> to vector<8x128xf32>
    %236 = vector.extract_strided_slice %226 {offsets = [0, 256], sizes = [8, 128], strides = [1, 1]} : vector<8x512xf32> to vector<8x128xf32>
    %237 = math.tanh %236 : vector<8x128xf32>
    %238 = vector.extract_strided_slice %226 {offsets = [0, 384], sizes = [8, 128], strides = [1, 1]} : vector<8x512xf32> to vector<8x128xf32>
    %239 = arith.negf %238 : vector<8x128xf32>
    %240 = math.exp %239 : vector<8x128xf32>
    %cst_105 = arith.constant 1.000000e+00 : f32
    %241 = vector.broadcast %cst_105 : f32 to vector<8x128xf32>
    %242 = arith.addf %241, %240 : vector<8x128xf32>
    %243 = arith.divf %241, %242 : vector<8x128xf32>
    %244 = arith.mulf %235, %227 : vector<8x128xf32>
    %245 = arith.mulf %234, %237 : vector<8x128xf32>
    %246 = arith.addf %244, %245 : vector<8x128xf32>
    %247 = math.tanh %246 : vector<8x128xf32>
    %248 = arith.mulf %243, %247 : vector<8x128xf32>
    %c0_106 = arith.constant 0 : index
    %c0_107 = arith.constant 0 : index
    %249 = vector.load %arg11[%c0_106, %c0_107] : memref<8x128xf32, #tpu.memory_space<vmem>>, vector<8x128xf32>
    tpu.vector_store %arg11[%c0_106, %c0_107], %246 {strides = array<i32>} : memref<8x128xf32, #tpu.memory_space<vmem>>, vector<8x128xf32>,
    %250 = arith.truncf %248 : vector<8x128xf32> to vector<8x128xbf16>
    %c0_108 = arith.constant 0 : index
    %c0_109 = arith.constant 0 : index
    %251 = vector.load %arg10[%c0_108, %c0_109] : memref<8x256xbf16, #tpu.memory_space<vmem>>, vector<8x128xbf16>
    tpu.vector_store %arg10[%c0_108, %c0_109], %250 {strides = array<i32>} : memref<8x256xbf16, #tpu.memory_space<vmem>>, vector<8x128xbf16>,
    %252 = vector.extract_strided_slice %223 {offsets = [0, 512], sizes = [8, 512], strides = [1, 1]} : vector<8x1024xf32> to vector<8x512xf32>
    %253 = vector.broadcast %14 : vector<1x512xf32> to vector<8x512xf32>
    %254 = arith.addf %252, %253 : vector<8x512xf32>
    %c0_110 = arith.constant 0 : index
    %c0_111 = arith.constant 0 : index
    %255 = vector.load %arg12[%c0_110, %c0_111] : memref<8x128xf32, #tpu.memory_space<vmem>>, vector<8x128xf32>
    %256 = vector.extract_strided_slice %254 {offsets = [0, 0], sizes = [8, 256], strides = [1, 1]} : vector<8x512xf32> to vector<8x256xf32>
    %257 = arith.negf %256 : vector<8x256xf32>
    %258 = math.exp %257 : vector<8x256xf32>
    %cst_112 = arith.constant 1.000000e+00 : f32
    %259 = vector.broadcast %cst_112 : f32 to vector<8x256xf32>
    %260 = arith.addf %259, %258 : vector<8x256xf32>
    %261 = arith.divf %259, %260 : vector<8x256xf32>
    %262 = vector.extract_strided_slice %261 {offsets = [0, 0], sizes = [8, 128], strides = [1, 1]} : vector<8x256xf32> to vector<8x128xf32>
    %263 = vector.extract_strided_slice %261 {offsets = [0, 128], sizes = [8, 128], strides = [1, 1]} : vector<8x256xf32> to vector<8x128xf32>
    %264 = vector.extract_strided_slice %254 {offsets = [0, 256], sizes = [8, 128], strides = [1, 1]} : vector<8x512xf32> to vector<8x128xf32>
    %265 = math.tanh %264 : vector<8x128xf32>
    %266 = vector.extract_strided_slice %254 {offsets = [0, 384], sizes = [8, 128], strides = [1, 1]} : vector<8x512xf32> to vector<8x128xf32>
    %267 = arith.negf %266 : vector<8x128xf32>
    %268 = math.exp %267 : vector<8x128xf32>
    %cst_113 = arith.constant 1.000000e+00 : f32
    %269 = vector.broadcast %cst_113 : f32 to vector<8x128xf32>
    %270 = arith.addf %269, %268 : vector<8x128xf32>
    %271 = arith.divf %269, %270 : vector<8x128xf32>
    %272 = arith.mulf %263, %255 : vector<8x128xf32>
    %273 = arith.mulf %262, %265 : vector<8x128xf32>
    %274 = arith.addf %272, %273 : vector<8x128xf32>
    %275 = math.tanh %274 : vector<8x128xf32>
    %276 = arith.mulf %271, %275 : vector<8x128xf32>
    %c0_114 = arith.constant 0 : index
    %c0_115 = arith.constant 0 : index
    %277 = vector.load %arg12[%c0_114, %c0_115] : memref<8x128xf32, #tpu.memory_space<vmem>>, vector<8x128xf32>
    tpu.vector_store %arg12[%c0_114, %c0_115], %274 {strides = array<i32>} : memref<8x128xf32, #tpu.memory_space<vmem>>, vector<8x128xf32>,
    %c24_116 = arith.constant 24 : index
    %c0_117 = arith.constant 0 : index
    %278 = vector.load %arg9[%c24_116, %c0_117] : memref<64x128xf32, #tpu.memory_space<vmem>>, vector<8x128xf32>
    tpu.vector_store %arg9[%c24_116, %c0_117], %276 {strides = array<i32>} : memref<64x128xf32, #tpu.memory_space<vmem>>, vector<8x128xf32>,
    %279 = arith.truncf %276 : vector<8x128xf32> to vector<8x128xbf16>
    %c0_118 = arith.constant 0 : index
    %c128_119 = arith.constant 128 : index
    %280 = vector.load %arg10[%c0_118, %c128_119] : memref<8x256xbf16, #tpu.memory_space<vmem>>, vector<8x128xbf16>
    tpu.vector_store %arg10[%c0_118, %c128_119], %279 {strides = array<i32>} : memref<8x256xbf16, #tpu.memory_space<vmem>>, vector<8x128xbf16>,
    %c0_120 = arith.constant 0 : index
    %c0_121 = arith.constant 0 : index
    %281 = vector.load %arg10[%c0_120, %c0_121] : memref<8x256xbf16, #tpu.memory_space<vmem>>, vector<8x256xbf16>
    %cst_122 = arith.constant dense<0.000000e+00> : vector<8x1024xf32>
    %282 = tpu.matmul %281, %13, %cst_122 {dimension_numbers = #tpu.dot_dimension_numbers<[1], [0], [0], [1], [0, 0, 1, 1], [], []>} : vector<8x256xbf16>, vector<256x1024xbf16>, vector<8x1024xf32> -> vector<8x1024xf32>
    %c40 = arith.constant 40 : index
    %c0_123 = arith.constant 0 : index
    %283 = vector.load %arg8[%c40, %c0_123] : memref<64x512xf32, #tpu.memory_space<vmem>>, vector<8x512xf32>
    %284 = vector.extract_strided_slice %282 {offsets = [0, 0], sizes = [8, 512], strides = [1, 1]} : vector<8x1024xf32> to vector<8x512xf32>
    %285 = arith.addf %283, %284 : vector<8x512xf32>
    %c0_124 = arith.constant 0 : index
    %c0_125 = arith.constant 0 : index
    %286 = vector.load %arg11[%c0_124, %c0_125] : memref<8x128xf32, #tpu.memory_space<vmem>>, vector<8x128xf32>
    %287 = vector.extract_strided_slice %285 {offsets = [0, 0], sizes = [8, 256], strides = [1, 1]} : vector<8x512xf32> to vector<8x256xf32>
    %288 = arith.negf %287 : vector<8x256xf32>
    %289 = math.exp %288 : vector<8x256xf32>
    %cst_126 = arith.constant 1.000000e+00 : f32
    %290 = vector.broadcast %cst_126 : f32 to vector<8x256xf32>
    %291 = arith.addf %290, %289 : vector<8x256xf32>
    %292 = arith.divf %290, %291 : vector<8x256xf32>
    %293 = vector.extract_strided_slice %292 {offsets = [0, 0], sizes = [8, 128], strides = [1, 1]} : vector<8x256xf32> to vector<8x128xf32>
    %294 = vector.extract_strided_slice %292 {offsets = [0, 128], sizes = [8, 128], strides = [1, 1]} : vector<8x256xf32> to vector<8x128xf32>
    %295 = vector.extract_strided_slice %285 {offsets = [0, 256], sizes = [8, 128], strides = [1, 1]} : vector<8x512xf32> to vector<8x128xf32>
    %296 = math.tanh %295 : vector<8x128xf32>
    %297 = vector.extract_strided_slice %285 {offsets = [0, 384], sizes = [8, 128], strides = [1, 1]} : vector<8x512xf32> to vector<8x128xf32>
    %298 = arith.negf %297 : vector<8x128xf32>
    %299 = math.exp %298 : vector<8x128xf32>
    %cst_127 = arith.constant 1.000000e+00 : f32
    %300 = vector.broadcast %cst_127 : f32 to vector<8x128xf32>
    %301 = arith.addf %300, %299 : vector<8x128xf32>
    %302 = arith.divf %300, %301 : vector<8x128xf32>
    %303 = arith.mulf %294, %286 : vector<8x128xf32>
    %304 = arith.mulf %293, %296 : vector<8x128xf32>
    %305 = arith.addf %303, %304 : vector<8x128xf32>
    %306 = math.tanh %305 : vector<8x128xf32>
    %307 = arith.mulf %302, %306 : vector<8x128xf32>
    %c0_128 = arith.constant 0 : index
    %c0_129 = arith.constant 0 : index
    %308 = vector.load %arg11[%c0_128, %c0_129] : memref<8x128xf32, #tpu.memory_space<vmem>>, vector<8x128xf32>
    tpu.vector_store %arg11[%c0_128, %c0_129], %305 {strides = array<i32>} : memref<8x128xf32, #tpu.memory_space<vmem>>, vector<8x128xf32>,
    %309 = arith.truncf %307 : vector<8x128xf32> to vector<8x128xbf16>
    %c0_130 = arith.constant 0 : index
    %c0_131 = arith.constant 0 : index
    %310 = vector.load %arg10[%c0_130, %c0_131] : memref<8x256xbf16, #tpu.memory_space<vmem>>, vector<8x128xbf16>
    tpu.vector_store %arg10[%c0_130, %c0_131], %309 {strides = array<i32>} : memref<8x256xbf16, #tpu.memory_space<vmem>>, vector<8x128xbf16>,
    %311 = vector.extract_strided_slice %282 {offsets = [0, 512], sizes = [8, 512], strides = [1, 1]} : vector<8x1024xf32> to vector<8x512xf32>
    %312 = vector.broadcast %14 : vector<1x512xf32> to vector<8x512xf32>
    %313 = arith.addf %311, %312 : vector<8x512xf32>
    %c0_132 = arith.constant 0 : index
    %c0_133 = arith.constant 0 : index
    %314 = vector.load %arg12[%c0_132, %c0_133] : memref<8x128xf32, #tpu.memory_space<vmem>>, vector<8x128xf32>
    %315 = vector.extract_strided_slice %313 {offsets = [0, 0], sizes = [8, 256], strides = [1, 1]} : vector<8x512xf32> to vector<8x256xf32>
    %316 = arith.negf %315 : vector<8x256xf32>
    %317 = math.exp %316 : vector<8x256xf32>
    %cst_134 = arith.constant 1.000000e+00 : f32
    %318 = vector.broadcast %cst_134 : f32 to vector<8x256xf32>
    %319 = arith.addf %318, %317 : vector<8x256xf32>
    %320 = arith.divf %318, %319 : vector<8x256xf32>
    %321 = vector.extract_strided_slice %320 {offsets = [0, 0], sizes = [8, 128], strides = [1, 1]} : vector<8x256xf32> to vector<8x128xf32>
    %322 = vector.extract_strided_slice %320 {offsets = [0, 128], sizes = [8, 128], strides = [1, 1]} : vector<8x256xf32> to vector<8x128xf32>
    %323 = vector.extract_strided_slice %313 {offsets = [0, 256], sizes = [8, 128], strides = [1, 1]} : vector<8x512xf32> to vector<8x128xf32>
    %324 = math.tanh %323 : vector<8x128xf32>
    %325 = vector.extract_strided_slice %313 {offsets = [0, 384], sizes = [8, 128], strides = [1, 1]} : vector<8x512xf32> to vector<8x128xf32>
    %326 = arith.negf %325 : vector<8x128xf32>
    %327 = math.exp %326 : vector<8x128xf32>
    %cst_135 = arith.constant 1.000000e+00 : f32
    %328 = vector.broadcast %cst_135 : f32 to vector<8x128xf32>
    %329 = arith.addf %328, %327 : vector<8x128xf32>
    %330 = arith.divf %328, %329 : vector<8x128xf32>
    %331 = arith.mulf %322, %314 : vector<8x128xf32>
    %332 = arith.mulf %321, %324 : vector<8x128xf32>
    %333 = arith.addf %331, %332 : vector<8x128xf32>
    %334 = math.tanh %333 : vector<8x128xf32>
    %335 = arith.mulf %330, %334 : vector<8x128xf32>
    %c0_136 = arith.constant 0 : index
    %c0_137 = arith.constant 0 : index
    %336 = vector.load %arg12[%c0_136, %c0_137] : memref<8x128xf32, #tpu.memory_space<vmem>>, vector<8x128xf32>
    tpu.vector_store %arg12[%c0_136, %c0_137], %333 {strides = array<i32>} : memref<8x128xf32, #tpu.memory_space<vmem>>, vector<8x128xf32>,
    %c32_138 = arith.constant 32 : index
    %c0_139 = arith.constant 0 : index
    %337 = vector.load %arg9[%c32_138, %c0_139] : memref<64x128xf32, #tpu.memory_space<vmem>>, vector<8x128xf32>
    tpu.vector_store %arg9[%c32_138, %c0_139], %335 {strides = array<i32>} : memref<64x128xf32, #tpu.memory_space<vmem>>, vector<8x128xf32>,
    %338 = arith.truncf %335 : vector<8x128xf32> to vector<8x128xbf16>
    %c0_140 = arith.constant 0 : index
    %c128_141 = arith.constant 128 : index
    %339 = vector.load %arg10[%c0_140, %c128_141] : memref<8x256xbf16, #tpu.memory_space<vmem>>, vector<8x128xbf16>
    tpu.vector_store %arg10[%c0_140, %c128_141], %338 {strides = array<i32>} : memref<8x256xbf16, #tpu.memory_space<vmem>>, vector<8x128xbf16>,
    %c0_142 = arith.constant 0 : index
    %c0_143 = arith.constant 0 : index
    %340 = vector.load %arg10[%c0_142, %c0_143] : memref<8x256xbf16, #tpu.memory_space<vmem>>, vector<8x256xbf16>
    %cst_144 = arith.constant dense<0.000000e+00> : vector<8x1024xf32>
    %341 = tpu.matmul %340, %13, %cst_144 {dimension_numbers = #tpu.dot_dimension_numbers<[1], [0], [0], [1], [0, 0, 1, 1], [], []>} : vector<8x256xbf16>, vector<256x1024xbf16>, vector<8x1024xf32> -> vector<8x1024xf32>
    %c48 = arith.constant 48 : index
    %c0_145 = arith.constant 0 : index
    %342 = vector.load %arg8[%c48, %c0_145] : memref<64x512xf32, #tpu.memory_space<vmem>>, vector<8x512xf32>
    %343 = vector.extract_strided_slice %341 {offsets = [0, 0], sizes = [8, 512], strides = [1, 1]} : vector<8x1024xf32> to vector<8x512xf32>
    %344 = arith.addf %342, %343 : vector<8x512xf32>
    %c0_146 = arith.constant 0 : index
    %c0_147 = arith.constant 0 : index
    %345 = vector.load %arg11[%c0_146, %c0_147] : memref<8x128xf32, #tpu.memory_space<vmem>>, vector<8x128xf32>
    %346 = vector.extract_strided_slice %344 {offsets = [0, 0], sizes = [8, 256], strides = [1, 1]} : vector<8x512xf32> to vector<8x256xf32>
    %347 = arith.negf %346 : vector<8x256xf32>
    %348 = math.exp %347 : vector<8x256xf32>
    %cst_148 = arith.constant 1.000000e+00 : f32
    %349 = vector.broadcast %cst_148 : f32 to vector<8x256xf32>
    %350 = arith.addf %349, %348 : vector<8x256xf32>
    %351 = arith.divf %349, %350 : vector<8x256xf32>
    %352 = vector.extract_strided_slice %351 {offsets = [0, 0], sizes = [8, 128], strides = [1, 1]} : vector<8x256xf32> to vector<8x128xf32>
    %353 = vector.extract_strided_slice %351 {offsets = [0, 128], sizes = [8, 128], strides = [1, 1]} : vector<8x256xf32> to vector<8x128xf32>
    %354 = vector.extract_strided_slice %344 {offsets = [0, 256], sizes = [8, 128], strides = [1, 1]} : vector<8x512xf32> to vector<8x128xf32>
    %355 = math.tanh %354 : vector<8x128xf32>
    %356 = vector.extract_strided_slice %344 {offsets = [0, 384], sizes = [8, 128], strides = [1, 1]} : vector<8x512xf32> to vector<8x128xf32>
    %357 = arith.negf %356 : vector<8x128xf32>
    %358 = math.exp %357 : vector<8x128xf32>
    %cst_149 = arith.constant 1.000000e+00 : f32
    %359 = vector.broadcast %cst_149 : f32 to vector<8x128xf32>
    %360 = arith.addf %359, %358 : vector<8x128xf32>
    %361 = arith.divf %359, %360 : vector<8x128xf32>
    %362 = arith.mulf %353, %345 : vector<8x128xf32>
    %363 = arith.mulf %352, %355 : vector<8x128xf32>
    %364 = arith.addf %362, %363 : vector<8x128xf32>
    %365 = math.tanh %364 : vector<8x128xf32>
    %366 = arith.mulf %361, %365 : vector<8x128xf32>
    %c0_150 = arith.constant 0 : index
    %c0_151 = arith.constant 0 : index
    %367 = vector.load %arg11[%c0_150, %c0_151] : memref<8x128xf32, #tpu.memory_space<vmem>>, vector<8x128xf32>
    tpu.vector_store %arg11[%c0_150, %c0_151], %364 {strides = array<i32>} : memref<8x128xf32, #tpu.memory_space<vmem>>, vector<8x128xf32>,
    %368 = arith.truncf %366 : vector<8x128xf32> to vector<8x128xbf16>
    %c0_152 = arith.constant 0 : index
    %c0_153 = arith.constant 0 : index
    %369 = vector.load %arg10[%c0_152, %c0_153] : memref<8x256xbf16, #tpu.memory_space<vmem>>, vector<8x128xbf16>
    tpu.vector_store %arg10[%c0_152, %c0_153], %368 {strides = array<i32>} : memref<8x256xbf16, #tpu.memory_space<vmem>>, vector<8x128xbf16>,
    %370 = vector.extract_strided_slice %341 {offsets = [0, 512], sizes = [8, 512], strides = [1, 1]} : vector<8x1024xf32> to vector<8x512xf32>
    %371 = vector.broadcast %14 : vector<1x512xf32> to vector<8x512xf32>
    %372 = arith.addf %370, %371 : vector<8x512xf32>
    %c0_154 = arith.constant 0 : index
    %c0_155 = arith.constant 0 : index
    %373 = vector.load %arg12[%c0_154, %c0_155] : memref<8x128xf32, #tpu.memory_space<vmem>>, vector<8x128xf32>
    %374 = vector.extract_strided_slice %372 {offsets = [0, 0], sizes = [8, 256], strides = [1, 1]} : vector<8x512xf32> to vector<8x256xf32>
    %375 = arith.negf %374 : vector<8x256xf32>
    %376 = math.exp %375 : vector<8x256xf32>
    %cst_156 = arith.constant 1.000000e+00 : f32
    %377 = vector.broadcast %cst_156 : f32 to vector<8x256xf32>
    %378 = arith.addf %377, %376 : vector<8x256xf32>
    %379 = arith.divf %377, %378 : vector<8x256xf32>
    %380 = vector.extract_strided_slice %379 {offsets = [0, 0], sizes = [8, 128], strides = [1, 1]} : vector<8x256xf32> to vector<8x128xf32>
    %381 = vector.extract_strided_slice %379 {offsets = [0, 128], sizes = [8, 128], strides = [1, 1]} : vector<8x256xf32> to vector<8x128xf32>
    %382 = vector.extract_strided_slice %372 {offsets = [0, 256], sizes = [8, 128], strides = [1, 1]} : vector<8x512xf32> to vector<8x128xf32>
    %383 = math.tanh %382 : vector<8x128xf32>
    %384 = vector.extract_strided_slice %372 {offsets = [0, 384], sizes = [8, 128], strides = [1, 1]} : vector<8x512xf32> to vector<8x128xf32>
    %385 = arith.negf %384 : vector<8x128xf32>
    %386 = math.exp %385 : vector<8x128xf32>
    %cst_157 = arith.constant 1.000000e+00 : f32
    %387 = vector.broadcast %cst_157 : f32 to vector<8x128xf32>
    %388 = arith.addf %387, %386 : vector<8x128xf32>
    %389 = arith.divf %387, %388 : vector<8x128xf32>
    %390 = arith.mulf %381, %373 : vector<8x128xf32>
    %391 = arith.mulf %380, %383 : vector<8x128xf32>
    %392 = arith.addf %390, %391 : vector<8x128xf32>
    %393 = math.tanh %392 : vector<8x128xf32>
    %394 = arith.mulf %389, %393 : vector<8x128xf32>
    %c0_158 = arith.constant 0 : index
    %c0_159 = arith.constant 0 : index
    %395 = vector.load %arg12[%c0_158, %c0_159] : memref<8x128xf32, #tpu.memory_space<vmem>>, vector<8x128xf32>
    tpu.vector_store %arg12[%c0_158, %c0_159], %392 {strides = array<i32>} : memref<8x128xf32, #tpu.memory_space<vmem>>, vector<8x128xf32>,
    %c40_160 = arith.constant 40 : index
    %c0_161 = arith.constant 0 : index
    %396 = vector.load %arg9[%c40_160, %c0_161] : memref<64x128xf32, #tpu.memory_space<vmem>>, vector<8x128xf32>
    tpu.vector_store %arg9[%c40_160, %c0_161], %394 {strides = array<i32>} : memref<64x128xf32, #tpu.memory_space<vmem>>, vector<8x128xf32>,
    %397 = arith.truncf %394 : vector<8x128xf32> to vector<8x128xbf16>
    %c0_162 = arith.constant 0 : index
    %c128_163 = arith.constant 128 : index
    %398 = vector.load %arg10[%c0_162, %c128_163] : memref<8x256xbf16, #tpu.memory_space<vmem>>, vector<8x128xbf16>
    tpu.vector_store %arg10[%c0_162, %c128_163], %397 {strides = array<i32>} : memref<8x256xbf16, #tpu.memory_space<vmem>>, vector<8x128xbf16>,
    %c0_164 = arith.constant 0 : index
    %c0_165 = arith.constant 0 : index
    %399 = vector.load %arg10[%c0_164, %c0_165] : memref<8x256xbf16, #tpu.memory_space<vmem>>, vector<8x256xbf16>
    %cst_166 = arith.constant dense<0.000000e+00> : vector<8x1024xf32>
    %400 = tpu.matmul %399, %13, %cst_166 {dimension_numbers = #tpu.dot_dimension_numbers<[1], [0], [0], [1], [0, 0, 1, 1], [], []>} : vector<8x256xbf16>, vector<256x1024xbf16>, vector<8x1024xf32> -> vector<8x1024xf32>
    %c56 = arith.constant 56 : index
    %c0_167 = arith.constant 0 : index
    %401 = vector.load %arg8[%c56, %c0_167] : memref<64x512xf32, #tpu.memory_space<vmem>>, vector<8x512xf32>
    %402 = vector.extract_strided_slice %400 {offsets = [0, 0], sizes = [8, 512], strides = [1, 1]} : vector<8x1024xf32> to vector<8x512xf32>
    %403 = arith.addf %401, %402 : vector<8x512xf32>
    %c0_168 = arith.constant 0 : index
    %c0_169 = arith.constant 0 : index
    %404 = vector.load %arg11[%c0_168, %c0_169] : memref<8x128xf32, #tpu.memory_space<vmem>>, vector<8x128xf32>
    %405 = vector.extract_strided_slice %403 {offsets = [0, 0], sizes = [8, 256], strides = [1, 1]} : vector<8x512xf32> to vector<8x256xf32>
    %406 = arith.negf %405 : vector<8x256xf32>
    %407 = math.exp %406 : vector<8x256xf32>
    %cst_170 = arith.constant 1.000000e+00 : f32
    %408 = vector.broadcast %cst_170 : f32 to vector<8x256xf32>
    %409 = arith.addf %408, %407 : vector<8x256xf32>
    %410 = arith.divf %408, %409 : vector<8x256xf32>
    %411 = vector.extract_strided_slice %410 {offsets = [0, 0], sizes = [8, 128], strides = [1, 1]} : vector<8x256xf32> to vector<8x128xf32>
    %412 = vector.extract_strided_slice %410 {offsets = [0, 128], sizes = [8, 128], strides = [1, 1]} : vector<8x256xf32> to vector<8x128xf32>
    %413 = vector.extract_strided_slice %403 {offsets = [0, 256], sizes = [8, 128], strides = [1, 1]} : vector<8x512xf32> to vector<8x128xf32>
    %414 = math.tanh %413 : vector<8x128xf32>
    %415 = vector.extract_strided_slice %403 {offsets = [0, 384], sizes = [8, 128], strides = [1, 1]} : vector<8x512xf32> to vector<8x128xf32>
    %416 = arith.negf %415 : vector<8x128xf32>
    %417 = math.exp %416 : vector<8x128xf32>
    %cst_171 = arith.constant 1.000000e+00 : f32
    %418 = vector.broadcast %cst_171 : f32 to vector<8x128xf32>
    %419 = arith.addf %418, %417 : vector<8x128xf32>
    %420 = arith.divf %418, %419 : vector<8x128xf32>
    %421 = arith.mulf %412, %404 : vector<8x128xf32>
    %422 = arith.mulf %411, %414 : vector<8x128xf32>
    %423 = arith.addf %421, %422 : vector<8x128xf32>
    %424 = math.tanh %423 : vector<8x128xf32>
    %425 = arith.mulf %420, %424 : vector<8x128xf32>
    %c0_172 = arith.constant 0 : index
    %c0_173 = arith.constant 0 : index
    %426 = vector.load %arg11[%c0_172, %c0_173] : memref<8x128xf32, #tpu.memory_space<vmem>>, vector<8x128xf32>
    tpu.vector_store %arg11[%c0_172, %c0_173], %423 {strides = array<i32>} : memref<8x128xf32, #tpu.memory_space<vmem>>, vector<8x128xf32>,
    %427 = arith.truncf %425 : vector<8x128xf32> to vector<8x128xbf16>
    %c0_174 = arith.constant 0 : index
    %c0_175 = arith.constant 0 : index
    %428 = vector.load %arg10[%c0_174, %c0_175] : memref<8x256xbf16, #tpu.memory_space<vmem>>, vector<8x128xbf16>
    tpu.vector_store %arg10[%c0_174, %c0_175], %427 {strides = array<i32>} : memref<8x256xbf16, #tpu.memory_space<vmem>>, vector<8x128xbf16>,
    %429 = vector.extract_strided_slice %400 {offsets = [0, 512], sizes = [8, 512], strides = [1, 1]} : vector<8x1024xf32> to vector<8x512xf32>
    %430 = vector.broadcast %14 : vector<1x512xf32> to vector<8x512xf32>
    %431 = arith.addf %429, %430 : vector<8x512xf32>
    %c0_176 = arith.constant 0 : index
    %c0_177 = arith.constant 0 : index
    %432 = vector.load %arg12[%c0_176, %c0_177] : memref<8x128xf32, #tpu.memory_space<vmem>>, vector<8x128xf32>
    %433 = vector.extract_strided_slice %431 {offsets = [0, 0], sizes = [8, 256], strides = [1, 1]} : vector<8x512xf32> to vector<8x256xf32>
    %434 = arith.negf %433 : vector<8x256xf32>
    %435 = math.exp %434 : vector<8x256xf32>
    %cst_178 = arith.constant 1.000000e+00 : f32
    %436 = vector.broadcast %cst_178 : f32 to vector<8x256xf32>
    %437 = arith.addf %436, %435 : vector<8x256xf32>
    %438 = arith.divf %436, %437 : vector<8x256xf32>
    %439 = vector.extract_strided_slice %438 {offsets = [0, 0], sizes = [8, 128], strides = [1, 1]} : vector<8x256xf32> to vector<8x128xf32>
    %440 = vector.extract_strided_slice %438 {offsets = [0, 128], sizes = [8, 128], strides = [1, 1]} : vector<8x256xf32> to vector<8x128xf32>
    %441 = vector.extract_strided_slice %431 {offsets = [0, 256], sizes = [8, 128], strides = [1, 1]} : vector<8x512xf32> to vector<8x128xf32>
    %442 = math.tanh %441 : vector<8x128xf32>
    %443 = vector.extract_strided_slice %431 {offsets = [0, 384], sizes = [8, 128], strides = [1, 1]} : vector<8x512xf32> to vector<8x128xf32>
    %444 = arith.negf %443 : vector<8x128xf32>
    %445 = math.exp %444 : vector<8x128xf32>
    %cst_179 = arith.constant 1.000000e+00 : f32
    %446 = vector.broadcast %cst_179 : f32 to vector<8x128xf32>
    %447 = arith.addf %446, %445 : vector<8x128xf32>
    %448 = arith.divf %446, %447 : vector<8x128xf32>
    %449 = arith.mulf %440, %432 : vector<8x128xf32>
    %450 = arith.mulf %439, %442 : vector<8x128xf32>
    %451 = arith.addf %449, %450 : vector<8x128xf32>
    %452 = math.tanh %451 : vector<8x128xf32>
    %453 = arith.mulf %448, %452 : vector<8x128xf32>
    %c0_180 = arith.constant 0 : index
    %c0_181 = arith.constant 0 : index
    %454 = vector.load %arg12[%c0_180, %c0_181] : memref<8x128xf32, #tpu.memory_space<vmem>>, vector<8x128xf32>
    tpu.vector_store %arg12[%c0_180, %c0_181], %451 {strides = array<i32>} : memref<8x128xf32, #tpu.memory_space<vmem>>, vector<8x128xf32>,
    %c48_182 = arith.constant 48 : index
    %c0_183 = arith.constant 0 : index
    %455 = vector.load %arg9[%c48_182, %c0_183] : memref<64x128xf32, #tpu.memory_space<vmem>>, vector<8x128xf32>
    tpu.vector_store %arg9[%c48_182, %c0_183], %453 {strides = array<i32>} : memref<64x128xf32, #tpu.memory_space<vmem>>, vector<8x128xf32>,
    %456 = arith.truncf %453 : vector<8x128xf32> to vector<8x128xbf16>
    %c0_184 = arith.constant 0 : index
    %c128_185 = arith.constant 128 : index
    %457 = vector.load %arg10[%c0_184, %c128_185] : memref<8x256xbf16, #tpu.memory_space<vmem>>, vector<8x128xbf16>
    tpu.vector_store %arg10[%c0_184, %c128_185], %456 {strides = array<i32>} : memref<8x256xbf16, #tpu.memory_space<vmem>>, vector<8x128xbf16>,
    %c0_186 = arith.constant 0 : index
    %c0_187 = arith.constant 0 : index
    %458 = vector.load %arg10[%c0_186, %c0_187] : memref<8x256xbf16, #tpu.memory_space<vmem>>, vector<8x256xbf16>
    %cst_188 = arith.constant dense<0.000000e+00> : vector<8x1024xf32>
    %459 = tpu.matmul %458, %13, %cst_188 {dimension_numbers = #tpu.dot_dimension_numbers<[1], [0], [0], [1], [0, 0, 1, 1], [], []>} : vector<8x256xbf16>, vector<256x1024xbf16>, vector<8x1024xf32> -> vector<8x1024xf32>
    %460 = vector.extract_strided_slice %459 {offsets = [0, 512], sizes = [8, 512], strides = [1, 1]} : vector<8x1024xf32> to vector<8x512xf32>
    %461 = vector.broadcast %14 : vector<1x512xf32> to vector<8x512xf32>
    %462 = arith.addf %460, %461 : vector<8x512xf32>
    %c0_189 = arith.constant 0 : index
    %c0_190 = arith.constant 0 : index
    %463 = vector.load %arg12[%c0_189, %c0_190] : memref<8x128xf32, #tpu.memory_space<vmem>>, vector<8x128xf32>
    %464 = vector.extract_strided_slice %462 {offsets = [0, 0], sizes = [8, 256], strides = [1, 1]} : vector<8x512xf32> to vector<8x256xf32>
    %465 = arith.negf %464 : vector<8x256xf32>
    %466 = math.exp %465 : vector<8x256xf32>
    %cst_191 = arith.constant 1.000000e+00 : f32
    %467 = vector.broadcast %cst_191 : f32 to vector<8x256xf32>
    %468 = arith.addf %467, %466 : vector<8x256xf32>
    %469 = arith.divf %467, %468 : vector<8x256xf32>
    %470 = vector.extract_strided_slice %469 {offsets = [0, 0], sizes = [8, 128], strides = [1, 1]} : vector<8x256xf32> to vector<8x128xf32>
    %471 = vector.extract_strided_slice %469 {offsets = [0, 128], sizes = [8, 128], strides = [1, 1]} : vector<8x256xf32> to vector<8x128xf32>
    %472 = vector.extract_strided_slice %462 {offsets = [0, 256], sizes = [8, 128], strides = [1, 1]} : vector<8x512xf32> to vector<8x128xf32>
    %473 = math.tanh %472 : vector<8x128xf32>
    %474 = vector.extract_strided_slice %462 {offsets = [0, 384], sizes = [8, 128], strides = [1, 1]} : vector<8x512xf32> to vector<8x128xf32>
    %475 = arith.negf %474 : vector<8x128xf32>
    %476 = math.exp %475 : vector<8x128xf32>
    %cst_192 = arith.constant 1.000000e+00 : f32
    %477 = vector.broadcast %cst_192 : f32 to vector<8x128xf32>
    %478 = arith.addf %477, %476 : vector<8x128xf32>
    %479 = arith.divf %477, %478 : vector<8x128xf32>
    %480 = arith.mulf %471, %463 : vector<8x128xf32>
    %481 = arith.mulf %470, %473 : vector<8x128xf32>
    %482 = arith.addf %480, %481 : vector<8x128xf32>
    %483 = math.tanh %482 : vector<8x128xf32>
    %484 = arith.mulf %479, %483 : vector<8x128xf32>
    %c0_193 = arith.constant 0 : index
    %c0_194 = arith.constant 0 : index
    %485 = vector.load %arg12[%c0_193, %c0_194] : memref<8x128xf32, #tpu.memory_space<vmem>>, vector<8x128xf32>
    tpu.vector_store %arg12[%c0_193, %c0_194], %482 {strides = array<i32>} : memref<8x128xf32, #tpu.memory_space<vmem>>, vector<8x128xf32>,
    %c56_195 = arith.constant 56 : index
    %c0_196 = arith.constant 0 : index
    %486 = vector.load %arg9[%c56_195, %c0_196] : memref<64x128xf32, #tpu.memory_space<vmem>>, vector<8x128xf32>
    tpu.vector_store %arg9[%c56_195, %c0_196], %484 {strides = array<i32>} : memref<64x128xf32, #tpu.memory_space<vmem>>, vector<8x128xf32>,
    %487 = arith.truncf %484 : vector<8x128xf32> to vector<8x128xbf16>
    %c0_197 = arith.constant 0 : index
    %c128_198 = arith.constant 128 : index
    %488 = vector.load %arg10[%c0_197, %c128_198] : memref<8x256xbf16, #tpu.memory_space<vmem>>, vector<8x128xbf16>
    tpu.vector_store %arg10[%c0_197, %c128_198], %487 {strides = array<i32>} : memref<8x256xbf16, #tpu.memory_space<vmem>>, vector<8x128xbf16>,
    %c0_199 = arith.constant 0 : index
    %c0_200 = arith.constant 0 : index
    %489 = vector.load %arg9[%c0_199, %c0_200] : memref<64x128xf32, #tpu.memory_space<vmem>>, vector<64x128xf32>
    %490 = arith.truncf %489 : vector<64x128xf32> to vector<64x128xbf16>
    %c0_201 = arith.constant 0 : index
    %c0_202 = arith.constant 0 : index
    %491 = vector.load %arg5[%c0_201, %c0_202] : memref<128x128xbf16, #tpu.memory_space<vmem>>, vector<128x128xbf16>
    %cst_203 = arith.constant dense<0.000000e+00> : vector<64x128xf32>
    %492 = tpu.matmul %490, %491, %cst_203 {dimension_numbers = #tpu.dot_dimension_numbers<[1], [0], [0], [1], [0, 0, 1, 1], [], []>} : vector<64x128xbf16>, vector<128x128xbf16>, vector<64x128xf32> -> vector<64x128xf32>
    %c0_204 = arith.constant 0 : index
    %c0_205 = arith.constant 0 : index
    %493 = vector.load %arg6[%c0_204, %c0_205] : memref<1x128xf32, #tpu.memory_space<vmem>>, vector<1x128xf32>
    %494 = vector.broadcast %493 : vector<1x128xf32> to vector<64x128xf32>
    %495 = arith.addf %492, %494 : vector<64x128xf32>
    %496 = arith.truncf %495 : vector<64x128xf32> to vector<64x128xbf16>
    %c0_206 = arith.constant 0 : index
    %c0_207 = arith.constant 0 : index
    %497 = vector.load %arg7[%c0_206, %c0_207] : memref<64x128xbf16, #tpu.memory_space<vmem>>, vector<64x128xbf16>
    tpu.vector_store %arg7[%c0_206, %c0_207], %496 {strides = array<i32>} : memref<64x128xbf16, #tpu.memory_space<vmem>>, vector<64x128xbf16>,
    return
  }
}

</mosaic_0001>

<llo_original>
// kernel: ner_lstm_forward.1
$region0: #{ner_lstm_forward.1}
  #allocation0 [shape = 'u32[]', space=smem, size = 0x4, offset = 0x4, fixed_abs, tag = 'smem constant byte address 0x4 - core index']
  #allocation1 [shape = 'u32[144,128]{1,0:T(1,128)}', space=vmem, size = 0x12000, scoped, tag = 'internal scratch']
  #allocation2 [shape = 'f32[64,512]{1,0:T(8,128)}', space=vmem, size = 0x20000, scoped, tag = 'scratch operand']
  #allocation3 [shape = 'f32[64,128]{1,0:T(8,128)}', space=vmem, size = 0x8000, scoped, tag = 'scratch operand']
  #allocation4 [shape = 'bf16[8,256]{1,0:T(8,128)(2,1)}', space=vmem, size = 0x1000, scoped, tag = 'scratch operand']
  #allocation5 [shape = 'f32[8,128]{1,0:T(8,128)}', space=vmem, size = 0x1000, scoped, tag = 'scratch operand']
  #allocation6 [shape = 'f32[8,128]{1,0:T(8,128)}', space=vmem, size = 0x1000, scoped, tag = 'scratch operand']
  %s0 = inlined_call_operand.vmem [shape: bf16[64,16], index: 0, kind: input, shape index: {}]
  %s1 = inlined_call_operand.vmem [shape: bf16[16,512], index: 1, kind: input, shape index: {}]
  %s2 = inlined_call_operand.vmem [shape: f32[1,512], index: 2, kind: input, shape index: {}]
  %s3 = inlined_call_operand.vmem [shape: bf16[256,1024], index: 3, kind: input, shape index: {}]
  %s4 = inlined_call_operand.vmem [shape: f32[1,512], index: 4, kind: input, shape index: {}]
  %s5 = inlined_call_operand.vmem [shape: bf16[128,128], index: 5, kind: input, shape index: {}]
  %s6 = inlined_call_operand.vmem [shape: f32[1,128], index: 6, kind: input, shape index: {}]
  %s7 = inlined_call_operand.vmem [shape: bf16[64,128], index: 7, kind: output, shape index: {}]
  %s8 = sld [smem:[#allocation0]]
  $region38: #{ner_lstm_forward.1} parent=0
    _
  %s10 = ssub.s32 1, %s8
  %s11 = scalar_select 0, %s10, %s8
  // Predicated region
  $region2: #{ner_lstm_forward.1} parent=0 // pred_check
    _
  $region3: #{ner_lstm_forward.1} parent=0 // pred_check_branch
    %13 = sbr.rel (0) target = $region5
  $region4: #{ner_lstm_forward.1} parent=0 // pred_region
    _
  $region5: #{ner_lstm_forward.1} parent=0 // pred_fallthru
    _
  // Predicated region
  $region6: #{ner_lstm_forward.1} parent=0 // pred_check
    _
  $region7: #{ner_lstm_forward.1} parent=0 // pred_check_branch
    %15 = sbr.rel (0) target = $region9
  $region8: #{ner_lstm_forward.1} parent=0 // pred_region
    _
  $region9: #{ner_lstm_forward.1} parent=0 // pred_fallthru
    _
  // Predicated region
  $region10: #{ner_lstm_forward.1} parent=0 // pred_check
    _
  $region11: #{ner_lstm_forward.1} parent=0 // pred_check_branch
    %17 = sbr.rel (0) target = $region13
  $region12: #{ner_lstm_forward.1} parent=0 // pred_region
    _
  $region13: #{ner_lstm_forward.1} parent=0 // pred_fallthru
    _
  // Predicated region
  $region14: #{ner_lstm_forward.1} parent=0 // pred_check
    _
  $region15: #{ner_lstm_forward.1} parent=0 // pred_check_branch
    %19 = sbr.rel (0) target = $region17
  $region16: #{ner_lstm_forward.1} parent=0 // pred_region
    _
  $region17: #{ner_lstm_forward.1} parent=0 // pred_fallthru
    _
  // Predicated region
  $region18: #{ner_lstm_forward.1} parent=0 // pred_check
    _
  $region19: #{ner_lstm_forward.1} parent=0 // pred_check_branch
    %21 = sbr.rel (0) target = $region21
  $region20: #{ner_lstm_forward.1} parent=0 // pred_region
    _
  $region21: #{ner_lstm_forward.1} parent=0 // pred_fallthru
    _
  // Predicated region
  $region22: #{ner_lstm_forward.1} parent=0 // pred_check
    _
  $region23: #{ner_lstm_forward.1} parent=0 // pred_check_branch
    %23 = sbr.rel (0) target = $region25
  $region24: #{ner_lstm_forward.1} parent=0 // pred_region
    _
  $region25: #{ner_lstm_forward.1} parent=0 // pred_fallthru
    _
  // Predicated region
  $region26: #{ner_lstm_forward.1} parent=0 // pred_check
    _
  $region27: #{ner_lstm_forward.1} parent=0 // pred_check_branch
    %25 = sbr.rel (0) target = $region29
  $region28: #{ner_lstm_forward.1} parent=0 // pred_region
    _
  $region29: #{ner_lstm_forward.1} parent=0 // pred_fallthru
    _
  %v27 = vld [vmem:[%s0] sm:$0xf]
  %v28 = vld [vmem:[%s0 + $0x4] sm:$0xf]
  %v29 = vld [vmem:[%s0 + $0x8] sm:$0xf]
  %v30 = vld [vmem:[%s0 + $0xc] sm:$0xf]
  %v31 = vld [vmem:[%s0 + $0x10] sm:$0xf]
  %v32 = vld [vmem:[%s0 + $0x14] sm:$0xf]
  %v33 = vld [vmem:[%s0 + $0x18] sm:$0xf]
  %v34 = vld [vmem:[%s0 + $0x1c] sm:$0xf]
  %v35 = vld [vmem:[%s1] sm:$0xff]
  %v36 = vld [vmem:[%s1 + $0x8] sm:$0xff]
  %v37 = vld [vmem:[%s1 + $0x10] sm:$0xff]
  %v38 = vld [vmem:[%s1 + $0x18] sm:$0xff]
  %v39 = vld [vmem:[%s2] sm:$0xf]
  %v41 = vlaneseq
  %v42 = vshrl.u32 %v41, 7
  %v43 = vsub.s32 0, %v42
  %v44 = vrot.slane %v39, %v43
  %v45 = vlaneseq
  %v46 = vshrl.u32 %v45, 7
  %v47 = vsub.s32 1, %v46
  %v48 = vrot.slane %v39, %v47
  %v49 = vlaneseq
  %v50 = vshrl.u32 %v49, 7
  %v51 = vsub.s32 2, %v50
  %v52 = vrot.slane %v39, %v51
  %v53 = vlaneseq
  %v54 = vshrl.u32 %v53, 7
  %v55 = vsub.s32 3, %v54
  %v56 = vrot.slane %v39, %v55
  %v69 = vunpack.c.l.b16 %v27
  %v70 = vunpack.c.l.b16 %v28
  %v71 = vunpack.c.l.b16 %v29
  %v72 = vunpack.c.l.b16 %v30
  %v73 = vunpack.c.l.b16 %v31
  %v74 = vunpack.c.l.b16 %v32
  %v75 = vunpack.c.l.b16 %v33
  %v76 = vunpack.c.l.b16 %v34
  %v77 = vpack.c.b16 %v70, %v69
  %v78 = vpack.c.b16 %v72, %v71
  %v79 = vpack.c.b16 %v74, %v73
  %v80 = vpack.c.b16 %v76, %v75
  %v85 = vunpack.c.l.b16 %v35
  %v86 = vunpack.c.h.b16 %v35
  %v87 = vunpack.c.l.b16 %v36
  %v88 = vunpack.c.h.b16 %v36
  %v89 = vunpack.c.l.b16 %v37
  %v90 = vunpack.c.h.b16 %v37
  %v91 = vunpack.c.l.b16 %v38
  %v92 = vunpack.c.h.b16 %v38
  %v93 = vpack.c.b16 %v89, %v85
  %v94 = vpack.c.b16 %v90, %v86
  %v95 = vpack.c.b16 %v91, %v87
  %v96 = vpack.c.b16 %v92, %v88
  %vm101 = vcmask 130048
  %v103 = vsel %vm101, %v77, 0
  %v106 = vsel %vm101, %v78, 0
  %v109 = vsel %vm101, %v79, 0
  %v112 = vsel %vm101, %v80, 0
  %114 = vmatprep.subr.bf16.mxu0 %v94
  %115 = vmatpush1.bf16.msra.mxu0 %v93
  %116 = vmatprep.subr.bf16.mxu0 0
  %117 = vmatpush1.bf16.msra.mxu0 0
  %118 = vmatprep.subr.bf16.mxu0 0
  %119 = vmatpush1.bf16.msra.mxu0 0
  %120 = vmatprep.subr.bf16.mxu0 0
  %121 = vmatpush1.bf16.msra.mxu0 0
  %122 = vmatprep.subr.bf16.mxu0 0
  %123 = vmatpush1.bf16.msra.mxu0 0
  %124 = vmatprep.subr.bf16.mxu0 0
  %125 = vmatpush1.bf16.msra.mxu0 0
  %126 = vmatprep.subr.bf16.mxu0 0
  %127 = vmatpush1.bf16.msra.mxu0 0
  %128 = vmatprep.subr.bf16.mxu0 0
  %129 = vmatpush1.bf16.msra.mxu0 0
  %130 = vmatprep.subr.bf16.mxu0 0
  %131 = vmatpush1.bf16.msra.mxu0 0
  %132 = vmatprep.subr.bf16.mxu0 0
  %133 = vmatpush1.bf16.msra.mxu0 0
  %134 = vmatprep.subr.bf16.mxu0 0
  %135 = vmatpush1.bf16.msra.mxu0 0
  %136 = vmatprep.subr.bf16.mxu0 0
  %137 = vmatpush1.bf16.msra.mxu0 0
  %138 = vmatprep.subr.bf16.mxu0 0
  %139 = vmatpush1.bf16.msra.mxu0 0
  %140 = vmatprep.subr.bf16.mxu0 0
  %141 = vmatpush1.bf16.msra.mxu0 0
  %142 = vmatprep.subr.bf16.mxu0 0
  %143 = vmatpush1.bf16.msra.mxu0 0
  %144 = vmatprep.subr.bf16.mxu0 0
  %145 = vmatpush1.bf16.msra.mxu0 0
  %146 = vmatprep.mubr.bf16.mxu0 0
  %147 = vmatmul.mubr.bf16.gmra.mrb[0].mxu0 %v103
  %v148 = vpop.f32.mrb[0].mxu0
  %v149 = vadd.f32 %v44, %v148
  %v150 = vpop.f32.mrb[0].mxu0
  %v151 = vadd.f32 %v48, %v150
  %v152 = vpop.f32.mrb[0].mxu0
  %v153 = vadd.f32 %v44, %v152
  %v154 = vpop.f32.mrb[0].mxu0
  %v155 = vadd.f32 %v48, %v154
  %156 = vmatprep.mubr.bf16.mxu0 0
  %157 = vmatmul.mubr.bf16.gmra.mrb[0].mxu0 %v106
  %v158 = vpop.f32.mrb[0].mxu0
  %v159 = vadd.f32 %v44, %v158
  %v160 = vpop.f32.mrb[0].mxu0
  %v161 = vadd.f32 %v48, %v160
  %v162 = vpop.f32.mrb[0].mxu0
  %v163 = vadd.f32 %v44, %v162
  %v164 = vpop.f32.mrb[0].mxu0
  %v165 = vadd.f32 %v48, %v164
  %166 = vmatprep.mubr.bf16.mxu0 0
  %167 = vmatmul.mubr.bf16.gmra.mrb[0].mxu0 %v109
  %v168 = vpop.f32.mrb[0].mxu0
  %v169 = vadd.f32 %v44, %v168
  %v170 = vpop.f32.mrb[0].mxu0
  %v171 = vadd.f32 %v48, %v170
  %v172 = vpop.f32.mrb[0].mxu0
  %v173 = vadd.f32 %v44, %v172
  %v174 = vpop.f32.mrb[0].mxu0
  %v175 = vadd.f32 %v48, %v174
  %176 = vmatprep.mubr.bf16.mxu0 0
  %177 = vmatmul.mubr.bf16.gmra.mrb[0].mxu0 %v112
  %v178 = vpop.f32.mrb[0].mxu0
  %v179 = vadd.f32 %v44, %v178
  %v180 = vpop.f32.mrb[0].mxu0
  %v181 = vadd.f32 %v48, %v180
  %v182 = vpop.f32.mrb[0].mxu0
  %v183 = vadd.f32 %v44, %v182
  %v184 = vpop.f32.mrb[0].mxu0
  %v185 = vadd.f32 %v48, %v184
  %186 = vdwg.mxu0
  %187 = vmatprep.subr.bf16.mxu0 %v96
  %188 = vmatpush1.bf16.msra.mxu0 %v95
  %189 = vmatprep.subr.bf16.mxu0 0
  %190 = vmatpush1.bf16.msra.mxu0 0
  %191 = vmatprep.subr.bf16.mxu0 0
  %192 = vmatpush1.bf16.msra.mxu0 0
  %193 = vmatprep.subr.bf16.mxu0 0
  %194 = vmatpush1.bf16.msra.mxu0 0
  %195 = vmatprep.subr.bf16.mxu0 0
  %196 = vmatpush1.bf16.msra.mxu0 0
  %197 = vmatprep.subr.bf16.mxu0 0
  %198 = vmatpush1.bf16.msra.mxu0 0
  %199 = vmatprep.subr.bf16.mxu0 0
  %200 = vmatpush1.bf16.msra.mxu0 0
  %201 = vmatprep.subr.bf16.mxu0 0
  %202 = vmatpush1.bf16.msra.mxu0 0
  %203 = vmatprep.subr.bf16.mxu0 0
  %204 = vmatpush1.bf16.msra.mxu0 0
  %205 = vmatprep.subr.bf16.mxu0 0
  %206 = vmatpush1.bf16.msra.mxu0 0
  %207 = vmatprep.subr.bf16.mxu0 0
  %208 = vmatpush1.bf16.msra.mxu0 0
  %209 = vmatprep.subr.bf16.mxu0 0
  %210 = vmatpush1.bf16.msra.mxu0 0
  %211 = vmatprep.subr.bf16.mxu0 0
  %212 = vmatpush1.bf16.msra.mxu0 0
  %213 = vmatprep.subr.bf16.mxu0 0
  %214 = vmatpush1.bf16.msra.mxu0 0
  %215 = vmatprep.subr.bf16.mxu0 0
  %216 = vmatpush1.bf16.msra.mxu0 0
  %217 = vmatprep.subr.bf16.mxu0 0
  %218 = vmatpush1.bf16.msra.mxu0 0
  %219 = vmatprep.mubr.bf16.mxu0 0
  %220 = vmatmul.mubr.bf16.gmra.mrb[0].mxu0 %v103
  %v221 = vpop.f32.mrb[0].mxu0
  %v222 = vadd.f32 %v52, %v221
  %v223 = vpop.f32.mrb[0].mxu0
  %v224 = vadd.f32 %v56, %v223
  %v225 = vpop.f32.mrb[0].mxu0
  %v226 = vadd.f32 %v52, %v225
  %v227 = vpop.f32.mrb[0].mxu0
  %v228 = vadd.f32 %v56, %v227
  %229 = vmatprep.mubr.bf16.mxu0 0
  %230 = vmatmul.mubr.bf16.gmra.mrb[0].mxu0 %v106
  %v231 = vpop.f32.mrb[0].mxu0
  %v232 = vadd.f32 %v52, %v231
  %v233 = vpop.f32.mrb[0].mxu0
  %v234 = vadd.f32 %v56, %v233
  %v235 = vpop.f32.mrb[0].mxu0
  %v236 = vadd.f32 %v52, %v235
  %v237 = vpop.f32.mrb[0].mxu0
  %v238 = vadd.f32 %v56, %v237
  %239 = vmatprep.mubr.bf16.mxu0 0
  %240 = vmatmul.mubr.bf16.gmra.mrb[0].mxu0 %v109
  %v241 = vpop.f32.mrb[0].mxu0
  %v242 = vadd.f32 %v52, %v241
  %v243 = vpop.f32.mrb[0].mxu0
  %v244 = vadd.f32 %v56, %v243
  %v245 = vpop.f32.mrb[0].mxu0
  %v246 = vadd.f32 %v52, %v245
  %v247 = vpop.f32.mrb[0].mxu0
  %v248 = vadd.f32 %v56, %v247
  %249 = vmatprep.mubr.bf16.mxu0 0
  %250 = vmatmul.mubr.bf16.gmra.mrb[0].mxu0 %v112
  %v251 = vpop.f32.mrb[0].mxu0
  %v252 = vadd.f32 %v52, %v251
  %v253 = vpop.f32.mrb[0].mxu0
  %v254 = vadd.f32 %v56, %v253
  %v255 = vpop.f32.mrb[0].mxu0
  %v256 = vadd.f32 %v52, %v255
  %v257 = vpop.f32.mrb[0].mxu0
  %v258 = vadd.f32 %v56, %v257
  %259 = vdwg.mxu0
  %260 = vst [vmem:[#allocation2] sm:$0xff] %v149
  %261 = vst [vmem:[#allocation2 + $0x8] sm:$0xff] %v151
  %262 = vst [vmem:[#allocation2 + $0x10] sm:$0xff] %v222
  %263 = vst [vmem:[#allocation2 + $0x18] sm:$0xff] %v224
  %264 = vst [vmem:[#allocation2 + $0x20] sm:$0xff] %v153
  %265 = vst [vmem:[#allocation2 + $0x28] sm:$0xff] %v155
  %266 = vst [vmem:[#allocation2 + $0x30] sm:$0xff] %v226
  %267 = vst [vmem:[#allocation2 + $0x38] sm:$0xff] %v228
  %268 = vst [vmem:[#allocation2 + $0x40] sm:$0xff] %v159
  %269 = vst [vmem:[#allocation2 + $0x48] sm:$0xff] %v161
  %270 = vst [vmem:[#allocation2 + $0x50] sm:$0xff] %v232
  %271 = vst [vmem:[#allocation2 + $0x58] sm:$0xff] %v234
  %272 = vst [vmem:[#allocation2 + $0x60] sm:$0xff] %v163
  %273 = vst [vmem:[#allocation2 + $0x68] sm:$0xff] %v165
  %274 = vst [vmem:[#allocation2 + $0x70] sm:$0xff] %v236
  %275 = vst [vmem:[#allocation2 + $0x78] sm:$0xff] %v238
  %276 = vst [vmem:[#allocation2 + $0x80] sm:$0xff] %v169
  %277 = vst [vmem:[#allocation2 + $0x88] sm:$0xff] %v171
  %278 = vst [vmem:[#allocation2 + $0x90] sm:$0xff] %v242
  %279 = vst [vmem:[#allocation2 + $0x98] sm:$0xff] %v244
  %280 = vst [vmem:[#allocation2 + $0xa0] sm:$0xff] %v173
  %281 = vst [vmem:[#allocation2 + $0xa8] sm:$0xff] %v175
  %282 = vst [vmem:[#allocation2 + $0xb0] sm:$0xff] %v246
  %283 = vst [vmem:[#allocation2 + $0xb8] sm:$0xff] %v248
  %284 = vst [vmem:[#allocation2 + $0xc0] sm:$0xff] %v179
  %285 = vst [vmem:[#allocation2 + $0xc8] sm:$0xff] %v181
  %286 = vst [vmem:[#allocation2 + $0xd0] sm:$0xff] %v252
  %287 = vst [vmem:[#allocation2 + $0xd8] sm:$0xff] %v254
  %288 = vst [vmem:[#allocation2 + $0xe0] sm:$0xff] %v183
  %289 = vst [vmem:[#allocation2 + $0xe8] sm:$0xff] %v185
  %290 = vst [vmem:[#allocation2 + $0xf0] sm:$0xff] %v256
  %291 = vst [vmem:[#allocation2 + $0xf8] sm:$0xff] %v258
  %292 = vst [vmem:[#allocation4] sm:$0xff] 0
  %293 = vst [vmem:[#allocation5] sm:$0xff] 0.0
  %294 = vst [vmem:[#allocation6] sm:$0xff] 0.0
  %v295 = vld [vmem:[%s3] sm:$0xff]
  %v296 = vld [vmem:[%s3 + $0x8] sm:$0xff]
  %v297 = vld [vmem:[%s3 + $0x10] sm:$0xff]
  %v298 = vld [vmem:[%s3 + $0x18] sm:$0xff]
  %v299 = vld [vmem:[%s3 + $0x20] sm:$0xff]
  %v300 = vld [vmem:[%s3 + $0x28] sm:$0xff]
  %v301 = vld [vmem:[%s3 + $0x30] sm:$0xff]
  %v302 = vld [vmem:[%s3 + $0x38] sm:$0xff]
  %v303 = vld [vmem:[%s3 + $0x40] sm:$0xff]
  %v304 = vld [vmem:[%s3 + $0x48] sm:$0xff]
  %v305 = vld [vmem:[%s3 + $0x50] sm:$0xff]
  %v306 = vld [vmem:[%s3 + $0x58] sm:$0xff]
  %v307 = vld [vmem:[%s3 + $0x60] sm:$0xff]
  %v308 = vld [vmem:[%s3 + $0x68] sm:$0xff]
  %v309 = vld [vmem:[%s3 + $0x70] sm:$0xff]
  %v310 = vld [vmem:[%s3 + $0x78] sm:$0xff]
  %v311 = vld [vmem:[%s3 + $0x80] sm:$0xff]
  %v312 = vld [vmem:[%s3 + $0x88] sm:$0xff]
  %v313 = vld [vmem:[%s3 + $0x90] sm:$0xff]
  %v314 = vld [vmem:[%s3 + $0x98] sm:$0xff]
  %v315 = vld [vmem:[%s3 + $0xa0] sm:$0xff]
  %v316 = vld [vmem:[%s3 + $0xa8] sm:$0xff]
  %v317 = vld [vmem:[%s3 + $0xb0] sm:$0xff]
  %v318 = vld [vmem:[%s3 + $0xb8] sm:$0xff]
  %v319 = vld [vmem:[%s3 + $0xc0] sm:$0xff]
  %v320 = vld [vmem:[%s3 + $0xc8] sm:$0xff]
  %v321 = vld [vmem:[%s3 + $0xd0] sm:$0xff]
  %v322 = vld [vmem:[%s3 + $0xd8] sm:$0xff]
  %v323 = vld [vmem:[%s3 + $0xe0] sm:$0xff]
  %v324 = vld [vmem:[%s3 + $0xe8] sm:$0xff]
  %v325 = vld [vmem:[%s3 + $0xf0] sm:$0xff]
  %v326 = vld [vmem:[%s3 + $0xf8] sm:$0xff]
  %v327 = vld [vmem:[%s3 + $0x100] sm:$0xff]
  %v328 = vld [vmem:[%s3 + $0x108] sm:$0xff]
  %v329 = vld [vmem:[%s3 + $0x110] sm:$0xff]
  %v330 = vld [vmem:[%s3 + $0x118] sm:$0xff]
  %v331 = vld [vmem:[%s3 + $0x120] sm:$0xff]
  %v332 = vld [vmem:[%s3 + $0x128] sm:$0xff]
  %v333 = vld [vmem:[%s3 + $0x130] sm:$0xff]
  %v334 = vld [vmem:[%s3 + $0x138] sm:$0xff]
  %v335 = vld [vmem:[%s3 + $0x140] sm:$0xff]
  %v336 = vld [vmem:[%s3 + $0x148] sm:$0xff]
  %v337 = vld [vmem:[%s3 + $0x150] sm:$0xff]
  %v338 = vld [vmem:[%s3 + $0x158] sm:$0xff]
  %v339 = vld [vmem:[%s3 + $0x160] sm:$0xff]
  %v340 = vld [vmem:[%s3 + $0x168] sm:$0xff]
  %v341 = vld [vmem:[%s3 + $0x170] sm:$0xff]
  %v342 = vld [vmem:[%s3 + $0x178] sm:$0xff]
  %v343 = vld [vmem:[%s3 + $0x180] sm:$0xff]
  %v344 = vld [vmem:[%s3 + $0x188] sm:$0xff]
  %v345 = vld [vmem:[%s3 + $0x190] sm:$0xff]
  %v346 = vld [vmem:[%s3 + $0x198] sm:$0xff]
  %v347 = vld [vmem:[%s3 + $0x1a0] sm:$0xff]
  %v348 = vld [vmem:[%s3 + $0x1a8] sm:$0xff]
  %v349 = vld [vmem:[%s3 + $0x1b0] sm:$0xff]
  %v350 = vld [vmem:[%s3 + $0x1b8] sm:$0xff]
  %v351 = vld [vmem:[%s3 + $0x1c0] sm:$0xff]
  %v352 = vld [vmem:[%s3 + $0x1c8] sm:$0xff]
  %v353 = vld [vmem:[%s3 + $0x1d0] sm:$0xff]
  %v354 = vld [vmem:[%s3 + $0x1d8] sm:$0xff]
  %v355 = vld [vmem:[%s3 + $0x1e0] sm:$0xff]
  %v356 = vld [vmem:[%s3 + $0x1e8] sm:$0xff]
  %v357 = vld [vmem:[%s3 + $0x1f0] sm:$0xff]
  %v358 = vld [vmem:[%s3 + $0x1f8] sm:$0xff]
  %v359 = vld [vmem:[%s3 + $0x200] sm:$0xff]
  %v360 = vld [vmem:[%s3 + $0x208] sm:$0xff]
  %v361 = vld [vmem:[%s3 + $0x210] sm:$0xff]
  %v362 = vld [vmem:[%s3 + $0x218] sm:$0xff]
  %v363 = vld [vmem:[%s3 + $0x220] sm:$0xff]
  %v364 = vld [vmem:[%s3 + $0x228] sm:$0xff]
  %v365 = vld [vmem:[%s3 + $0x230] sm:$0xff]
  %v366 = vld [vmem:[%s3 + $0x238] sm:$0xff]
  %v367 = vld [vmem:[%s3 + $0x240] sm:$0xff]
  %v368 = vld [vmem:[%s3 + $0x248] sm:$0xff]
  %v369 = vld [vmem:[%s3 + $0x250] sm:$0xff]
  %v370 = vld [vmem:[%s3 + $0x258] sm:$0xff]
  %v371 = vld [vmem:[%s3 + $0x260] sm:$0xff]
  %v372 = vld [vmem:[%s3 + $0x268] sm:$0xff]
  %v373 = vld [vmem:[%s3 + $0x270] sm:$0xff]
  %v374 = vld [vmem:[%s3 + $0x278] sm:$0xff]
  %v375 = vld [vmem:[%s3 + $0x280] sm:$0xff]
  %v376 = vld [vmem:[%s3 + $0x288] sm:$0xff]
  %v377 = vld [vmem:[%s3 + $0x290] sm:$0xff]
  %v378 = vld [vmem:[%s3 + $0x298] sm:$0xff]
  %v379 = vld [vmem:[%s3 + $0x2a0] sm:$0xff]
  %v380 = vld [vmem:[%s3 + $0x2a8] sm:$0xff]
  %v381 = vld [vmem:[%s3 + $0x2b0] sm:$0xff]
  %v382 = vld [vmem:[%s3 + $0x2b8] sm:$0xff]
  %v383 = vld [vmem:[%s3 + $0x2c0] sm:$0xff]
  %v384 = vld [vmem:[%s3 + $0x2c8] sm:$0xff]
  %v385 = vld [vmem:[%s3 + $0x2d0] sm:$0xff]
  %v386 = vld [vmem:[%s3 + $0x2d8] sm:$0xff]
  %v387 = vld [vmem:[%s3 + $0x2e0] sm:$0xff]
  %v388 = vld [vmem:[%s3 + $0x2e8] sm:$0xff]
  %v389 = vld [vmem:[%s3 + $0x2f0] sm:$0xff]
  %v390 = vld [vmem:[%s3 + $0x2f8] sm:$0xff]
  %v391 = vld [vmem:[%s3 + $0x300] sm:$0xff]
  %v392 = vld [vmem:[%s3 + $0x308] sm:$0xff]
  %v393 = vld [vmem:[%s3 + $0x310] sm:$0xff]
  %v394 = vld [vmem:[%s3 + $0x318] sm:$0xff]
  %v395 = vld [vmem:[%s3 + $0x320] sm:$0xff]
  %v396 = vld [vmem:[%s3 + $0x328] sm:$0xff]
  %v397 = vld [vmem:[%s3 + $0x330] sm:$0xff]
  %v398 = vld [vmem:[%s3 + $0x338] sm:$0xff]
  %v399 = vld [vmem:[%s3 + $0x340] sm:$0xff]
  %v400 = vld [vmem:[%s3 + $0x348] sm:$0xff]
  %v401 = vld [vmem:[%s3 + $0x350] sm:$0xff]
  %v402 = vld [vmem:[%s3 + $0x358] sm:$0xff]
  %v403 = vld [vmem:[%s3 + $0x360] sm:$0xff]
  %v404 = vld [vmem:[%s3 + $0x368] sm:$0xff]
  %v405 = vld [vmem:[%s3 + $0x370] sm:$0xff]
  %v406 = vld [vmem:[%s3 + $0x378] sm:$0xff]
  %v407 = vld [vmem:[%s3 + $0x380] sm:$0xff]
  %v408 = vld [vmem:[%s3 + $0x388] sm:$0xff]
  %v409 = vld [vmem:[%s3 + $0x390] sm:$0xff]
  %v410 = vld [vmem:[%s3 + $0x398] sm:$0xff]
  %v411 = vld [vmem:[%s3 + $0x3a0] sm:$0xff]
  %v412 = vld [vmem:[%s3 + $0x3a8] sm:$0xff]
  %v413 = vld [vmem:[%s3 + $0x3b0] sm:$0xff]
  %v414 = vld [vmem:[%s3 + $0x3b8] sm:$0xff]
  %v415 = vld [vmem:[%s3 + $0x3c0] sm:$0xff]
  %v416 = vld [vmem:[%s3 + $0x3c8] sm:$0xff]
  %v417 = vld [vmem:[%s3 + $0x3d0] sm:$0xff]
  %v418 = vld [vmem:[%s3 + $0x3d8] sm:$0xff]
  %v419 = vld [vmem:[%s3 + $0x3e0] sm:$0xff]
  %v420 = vld [vmem:[%s3 + $0x3e8] sm:$0xff]
  %v421 = vld [vmem:[%s3 + $0x3f0] sm:$0xff]
  %v422 = vld [vmem:[%s3 + $0x3f8] sm:$0xff]
  %v423 = vld [vmem:[%s4] sm:$0xf]
  %v424 = vld [vmem:[#allocation4] sm:$0xff]
  %v426 = vunpack.c.l.b16 %v424
  %v427 = vunpack.c.h.b16 %v424
  %v428 = vpack.c.b16 %v426, %v426
  %v429 = vpack.c.b16 %v427, %v427
  %v496 = vunpack.c.l.b16 %v295
  %v497 = vunpack.c.h.b16 %v295
  %v498 = vunpack.c.l.b16 %v296
  %v499 = vunpack.c.h.b16 %v296
  %v500 = vunpack.c.l.b16 %v299
  %v501 = vunpack.c.h.b16 %v299
  %v502 = vunpack.c.l.b16 %v300
  %v503 = vunpack.c.h.b16 %v300
  %v504 = vunpack.c.l.b16 %v303
  %v505 = vunpack.c.h.b16 %v303
  %v506 = vunpack.c.l.b16 %v304
  %v507 = vunpack.c.h.b16 %v304
  %v508 = vunpack.c.l.b16 %v307
  %v509 = vunpack.c.h.b16 %v307
  %v510 = vunpack.c.l.b16 %v308
  %v511 = vunpack.c.h.b16 %v308
  %v512 = vunpack.c.l.b16 %v311
  %v513 = vunpack.c.h.b16 %v311
  %v514 = vunpack.c.l.b16 %v312
  %v515 = vunpack.c.h.b16 %v312
  %v516 = vunpack.c.l.b16 %v315
  %v517 = vunpack.c.h.b16 %v315
  %v518 = vunpack.c.l.b16 %v316
  %v519 = vunpack.c.h.b16 %v316
  %v520 = vunpack.c.l.b16 %v319
  %v521 = vunpack.c.h.b16 %v319
  %v522 = vunpack.c.l.b16 %v320
  %v523 = vunpack.c.h.b16 %v320
  %v524 = vunpack.c.l.b16 %v323
  %v525 = vunpack.c.h.b16 %v323
  %v526 = vunpack.c.l.b16 %v324
  %v527 = vunpack.c.h.b16 %v324
  %v528 = vunpack.c.l.b16 %v327
  %v529 = vunpack.c.h.b16 %v327
  %v530 = vunpack.c.l.b16 %v328
  %v531 = vunpack.c.h.b16 %v328
  %v532 = vunpack.c.l.b16 %v331
  %v533 = vunpack.c.h.b16 %v331
  %v534 = vunpack.c.l.b16 %v332
  %v535 = vunpack.c.h.b16 %v332
  %v536 = vunpack.c.l.b16 %v335
  %v537 = vunpack.c.h.b16 %v335
  %v538 = vunpack.c.l.b16 %v336
  %v539 = vunpack.c.h.b16 %v336
  %v540 = vunpack.c.l.b16 %v339
  %v541 = vunpack.c.h.b16 %v339
  %v542 = vunpack.c.l.b16 %v340
  %v543 = vunpack.c.h.b16 %v340
  %v544 = vunpack.c.l.b16 %v343
  %v545 = vunpack.c.h.b16 %v343
  %v546 = vunpack.c.l.b16 %v344
  %v547 = vunpack.c.h.b16 %v344
  %v548 = vunpack.c.l.b16 %v347
  %v549 = vunpack.c.h.b16 %v347
  %v550 = vunpack.c.l.b16 %v348
  %v551 = vunpack.c.h.b16 %v348
  %v552 = vunpack.c.l.b16 %v351
  %v553 = vunpack.c.h.b16 %v351
  %v554 = vunpack.c.l.b16 %v352
  %v555 = vunpack.c.h.b16 %v352
  %v556 = vunpack.c.l.b16 %v355
  %v557 = vunpack.c.h.b16 %v355
  %v558 = vunpack.c.l.b16 %v356
  %v559 = vunpack.c.h.b16 %v356
  %v560 = vunpack.c.l.b16 %v359
  %v561 = vunpack.c.h.b16 %v359
  %v562 = vunpack.c.l.b16 %v360
  %v563 = vunpack.c.h.b16 %v360
  %v564 = vunpack.c.l.b16 %v363
  %v565 = vunpack.c.h.b16 %v363
  %v566 = vunpack.c.l.b16 %v364
  %v567 = vunpack.c.h.b16 %v364
  %v568 = vunpack.c.l.b16 %v367
  %v569 = vunpack.c.h.b16 %v367
  %v570 = vunpack.c.l.b16 %v368
  %v571 = vunpack.c.h.b16 %v368
  %v572 = vunpack.c.l.b16 %v371
  %v573 = vunpack.c.h.b16 %v371
  %v574 = vunpack.c.l.b16 %v372
  %v575 = vunpack.c.h.b16 %v372
  %v576 = vunpack.c.l.b16 %v375
  %v577 = vunpack.c.h.b16 %v375
  %v578 = vunpack.c.l.b16 %v376
  %v579 = vunpack.c.h.b16 %v376
  %v580 = vunpack.c.l.b16 %v379
  %v581 = vunpack.c.h.b16 %v379
  %v582 = vunpack.c.l.b16 %v380
  %v583 = vunpack.c.h.b16 %v380
  %v584 = vunpack.c.l.b16 %v383
  %v585 = vunpack.c.h.b16 %v383
  %v586 = vunpack.c.l.b16 %v384
  %v587 = vunpack.c.h.b16 %v384
  %v588 = vunpack.c.l.b16 %v387
  %v589 = vunpack.c.h.b16 %v387
  %v590 = vunpack.c.l.b16 %v388
  %v591 = vunpack.c.h.b16 %v388
  %v592 = vunpack.c.l.b16 %v391
  %v593 = vunpack.c.h.b16 %v391
  %v594 = vunpack.c.l.b16 %v392
  %v595 = vunpack.c.h.b16 %v392
  %v596 = vunpack.c.l.b16 %v395
  %v597 = vunpack.c.h.b16 %v395
  %v598 = vunpack.c.l.b16 %v396
  %v599 = vunpack.c.h.b16 %v396
  %v600 = vunpack.c.l.b16 %v399
  %v601 = vunpack.c.h.b16 %v399
  %v602 = vunpack.c.l.b16 %v400
  %v603 = vunpack.c.h.b16 %v400
  %v604 = vunpack.c.l.b16 %v403
  %v605 = vunpack.c.h.b16 %v403
  %v606 = vunpack.c.l.b16 %v404
  %v607 = vunpack.c.h.b16 %v404
  %v608 = vunpack.c.l.b16 %v407
  %v609 = vunpack.c.h.b16 %v407
  %v610 = vunpack.c.l.b16 %v408
  %v611 = vunpack.c.h.b16 %v408
  %v612 = vunpack.c.l.b16 %v411
  %v613 = vunpack.c.h.b16 %v411
  %v614 = vunpack.c.l.b16 %v412
  %v615 = vunpack.c.h.b16 %v412
  %v616 = vunpack.c.l.b16 %v415
  %v617 = vunpack.c.h.b16 %v415
  %v618 = vunpack.c.l.b16 %v416
  %v619 = vunpack.c.h.b16 %v416
  %v620 = vunpack.c.l.b16 %v419
  %v621 = vunpack.c.h.b16 %v419
  %v622 = vunpack.c.l.b16 %v420
  %v623 = vunpack.c.h.b16 %v420
  %v624 = vpack.c.b16 %v500, %v496
  %v625 = vpack.c.b16 %v501, %v497
  %v626 = vpack.c.b16 %v502, %v498
  %v627 = vpack.c.b16 %v503, %v499
  %v628 = vpack.c.b16 %v508, %v504
  %v629 = vpack.c.b16 %v509, %v505
  %v630 = vpack.c.b16 %v510, %v506
  %v631 = vpack.c.b16 %v511, %v507
  %v632 = vpack.c.b16 %v516, %v512
  %v633 = vpack.c.b16 %v517, %v513
  %v634 = vpack.c.b16 %v518, %v514
  %v635 = vpack.c.b16 %v519, %v515
  %v636 = vpack.c.b16 %v524, %v520
  %v637 = vpack.c.b16 %v525, %v521
  %v638 = vpack.c.b16 %v526, %v522
  %v639 = vpack.c.b16 %v527, %v523
  %v640 = vpack.c.b16 %v532, %v528
  %v641 = vpack.c.b16 %v533, %v529
  %v642 = vpack.c.b16 %v534, %v530
  %v643 = vpack.c.b16 %v535, %v531
  %v644 = vpack.c.b16 %v540, %v536
  %v645 = vpack.c.b16 %v541, %v537
  %v646 = vpack.c.b16 %v542, %v538
  %v647 = vpack.c.b16 %v543, %v539
  %v648 = vpack.c.b16 %v548, %v544
  %v649 = vpack.c.b16 %v549, %v545
  %v650 = vpack.c.b16 %v550, %v546
  %v651 = vpack.c.b16 %v551, %v547
  %v652 = vpack.c.b16 %v556, %v552
  %v653 = vpack.c.b16 %v557, %v553
  %v654 = vpack.c.b16 %v558, %v554
  %v655 = vpack.c.b16 %v559, %v555
  %v656 = vpack.c.b16 %v564, %v560
  %v657 = vpack.c.b16 %v565, %v561
  %v658 = vpack.c.b16 %v566, %v562
  %v659 = vpack.c.b16 %v567, %v563
  %v660 = vpack.c.b16 %v572, %v568
  %v661 = vpack.c.b16 %v573, %v569
  %v662 = vpack.c.b16 %v574, %v570
  %v663 = vpack.c.b16 %v575, %v571
  %v664 = vpack.c.b16 %v580, %v576
  %v665 = vpack.c.b16 %v581, %v577
  %v666 = vpack.c.b16 %v582, %v578
  %v667 = vpack.c.b16 %v583, %v579
  %v668 = vpack.c.b16 %v588, %v584
  %v669 = vpack.c.b16 %v589, %v585
  %v670 = vpack.c.b16 %v590, %v586
  %v671 = vpack.c.b16 %v591, %v587
  %v672 = vpack.c.b16 %v596, %v592
  %v673 = vpack.c.b16 %v597, %v593
  %v674 = vpack.c.b16 %v598, %v594
  %v675 = vpack.c.b16 %v599, %v595
  %v676 = vpack.c.b16 %v604, %v600
  %v677 = vpack.c.b16 %v605, %v601
  %v678 = vpack.c.b16 %v606, %v602
  %v679 = vpack.c.b16 %v607, %v603
  %v680 = vpack.c.b16 %v612, %v608
  %v681 = vpack.c.b16 %v613, %v609
  %v682 = vpack.c.b16 %v614, %v610
  %v683 = vpack.c.b16 %v615, %v611
  %v684 = vpack.c.b16 %v620, %v616
  %v685 = vpack.c.b16 %v621, %v617
  %v686 = vpack.c.b16 %v622, %v618
  %v687 = vpack.c.b16 %v623, %v619
  %752 = vmatprep.subr.bf16.mxu0 %v625
  %753 = vmatpush1.bf16.msra.mxu0 %v624
  %754 = vmatprep.subr.bf16.mxu0 %v629
  %755 = vmatpush1.bf16.msra.mxu0 %v628
  %756 = vmatprep.subr.bf16.mxu0 %v633
  %757 = vmatpush1.bf16.msra.mxu0 %v632
  %758 = vmatprep.subr.bf16.mxu0 %v637
  %759 = vmatpush1.bf16.msra.mxu0 %v636
  %760 = vmatprep.subr.bf16.mxu0 %v641
  %761 = vmatpush1.bf16.msra.mxu0 %v640
  %762 = vmatprep.subr.bf16.mxu0 %v645
  %763 = vmatpush1.bf16.msra.mxu0 %v644
  %764 = vmatprep.subr.bf16.mxu0 %v649
  %765 = vmatpush1.bf16.msra.mxu0 %v648
  %766 = vmatprep.subr.bf16.mxu0 %v653
  %767 = vmatpush1.bf16.msra.mxu0 %v652
  %768 = vmatprep.subr.bf16.mxu0 %v657
  %769 = vmatpush1.bf16.msra.mxu0 %v656
  %770 = vmatprep.subr.bf16.mxu0 %v661
  %771 = vmatpush1.bf16.msra.mxu0 %v660
  %772 = vmatprep.subr.bf16.mxu0 %v665
  %773 = vmatpush1.bf16.msra.mxu0 %v664
  %774 = vmatprep.subr.bf16.mxu0 %v669
  %775 = vmatpush1.bf16.msra.mxu0 %v668
  %776 = vmatprep.subr.bf16.mxu0 %v673
  %777 = vmatpush1.bf16.msra.mxu0 %v672
  %778 = vmatprep.subr.bf16.mxu0 %v677
  %779 = vmatpush1.bf16.msra.mxu0 %v676
  %780 = vmatprep.subr.bf16.mxu0 %v681
  %781 = vmatpush1.bf16.msra.mxu0 %v680
  %782 = vmatprep.subr.bf16.mxu0 %v685
  %783 = vmatpush1.bf16.msra.mxu0 %v684
  %784 = vmatprep.mubr.bf16.mxu0 %v429
  %785 = vmatmul.mubr.bf16.gmra.mrb[0].mxu0 %v428
  %v786 = vpop.f32.mrb[0].mxu0
  %v787 = vadd.f32 0.0, %v786
  %v788 = vpop.f32.mrb[0].mxu0
  %v789 = vadd.f32 0.0, %v788
  %v790 = vpop.f32.mrb[0].mxu0
  %v791 = vpop.f32.mrb[0].mxu0
  %792 = vdwg.mxu0
  %793 = vmatprep.subr.bf16.mxu0 %v627
  %794 = vmatpush1.bf16.msra.mxu0 %v626
  %795 = vmatprep.subr.bf16.mxu0 %v631
  %796 = vmatpush1.bf16.msra.mxu0 %v630
  %797 = vmatprep.subr.bf16.mxu0 %v635
  %798 = vmatpush1.bf16.msra.mxu0 %v634
  %799 = vmatprep.subr.bf16.mxu0 %v639
  %800 = vmatpush1.bf16.msra.mxu0 %v638
  %801 = vmatprep.subr.bf16.mxu0 %v643
  %802 = vmatpush1.bf16.msra.mxu0 %v642
  %803 = vmatprep.subr.bf16.mxu0 %v647
  %804 = vmatpush1.bf16.msra.mxu0 %v646
  %805 = vmatprep.subr.bf16.mxu0 %v651
  %806 = vmatpush1.bf16.msra.mxu0 %v650
  %807 = vmatprep.subr.bf16.mxu0 %v655
  %808 = vmatpush1.bf16.msra.mxu0 %v654
  %809 = vmatprep.subr.bf16.mxu0 %v659
  %810 = vmatpush1.bf16.msra.mxu0 %v658
  %811 = vmatprep.subr.bf16.mxu0 %v663
  %812 = vmatpush1.bf16.msra.mxu0 %v662
  %813 = vmatprep.subr.bf16.mxu0 %v667
  %814 = vmatpush1.bf16.msra.mxu0 %v666
  %815 = vmatprep.subr.bf16.mxu0 %v671
  %816 = vmatpush1.bf16.msra.mxu0 %v670
  %817 = vmatprep.subr.bf16.mxu0 %v675
  %818 = vmatpush1.bf16.msra.mxu0 %v674
  %819 = vmatprep.subr.bf16.mxu0 %v679
  %820 = vmatpush1.bf16.msra.mxu0 %v678
  %821 = vmatprep.subr.bf16.mxu0 %v683
  %822 = vmatpush1.bf16.msra.mxu0 %v682
  %823 = vmatprep.subr.bf16.mxu0 %v687
  %824 = vmatpush1.bf16.msra.mxu0 %v686
  %825 = vmatprep.mubr.bf16.mxu0 %v429
  %826 = vmatmul.mubr.bf16.gmra.mrb[0].mxu0 %v428
  %v827 = vpop.f32.mrb[0].mxu0
  %v828 = vadd.f32 0.0, %v827
  %v829 = vpop.f32.mrb[0].mxu0
  %v830 = vadd.f32 0.0, %v829
  %v831 = vpop.f32.mrb[0].mxu0
  %v832 = vpop.f32.mrb[0].mxu0
  %833 = vdwg.mxu0
  %v834 = vld [vmem:[#allocation2] sm:$0xff]
  %v835 = vld [vmem:[#allocation2 + $0x8] sm:$0xff]
  %v836 = vld [vmem:[#allocation2 + $0x10] sm:$0xff]
  %v837 = vld [vmem:[#allocation2 + $0x18] sm:$0xff]
  %v838 = vadd.f32 %v834, %v787
  %v839 = vadd.f32 %v835, %v789
  %v840 = vadd.f32 %v836, %v828
  %v841 = vadd.f32 %v837, %v830
  %v842 = vld [vmem:[#allocation5] sm:$0xff]
  %v843 = vxor.u32 %v838, 2147483648
  %v844 = vxor.u32 %v839, 2147483648
  %v845 = vmul.f32 %v843, 1.442695
  %v846 = vpow.pop %v845
  %v847 = vmul.f32 %v844, 1.442695
  %v848 = vpow.pop %v847
  %v849 = vadd.f32 %v846, 1.0
  %v850 = vadd.f32 %v848, 1.0
  %v851 = vrcp.pop %v849
  %v852 = vmul.f32 1.0, %v851
  %v853 = vrcp.pop %v850
  %v854 = vmul.f32 1.0, %v853
  %v855 = vtanh.pop %v840
  %v856 = vxor.u32 %v841, 2147483648
  %v857 = vmul.f32 %v856, 1.442695
  %v858 = vpow.pop %v857
  %v859 = vadd.f32 %v858, 1.0
  %v860 = vrcp.pop %v859
  %v861 = vmul.f32 1.0, %v860
  %v862 = vmul.f32 %v854, %v842
  %v863 = vmul.f32 %v852, %v855
  %v864 = vadd.f32 %v862, %v863
  %v865 = vtanh.pop %v864
  %v866 = vmul.f32 %v861, %v865
  %867 = vst [vmem:[#allocation5] sm:$0xff] %v864
  %v868 = vpack.c.bf16 %v866, %v866
  %869 = vst [vmem:[#allocation4] sm:$0xf] %v868
  %v870 = vld [vmem:[#allocation4] sm:$0xff]
  %v872 = vunpack.c.l.b16 %v870
  %v873 = vunpack.c.h.b16 %v870
  %v874 = vpack.c.b16 %v872, %v872
  %v875 = vpack.c.b16 %v873, %v873
  %v942 = vunpack.c.l.b16 %v297
  %v943 = vunpack.c.h.b16 %v297
  %v944 = vunpack.c.l.b16 %v298
  %v945 = vunpack.c.h.b16 %v298
  %v946 = vunpack.c.l.b16 %v301
  %v947 = vunpack.c.h.b16 %v301
  %v948 = vunpack.c.l.b16 %v302
  %v949 = vunpack.c.h.b16 %v302
  %v950 = vunpack.c.l.b16 %v305
  %v951 = vunpack.c.h.b16 %v305
  %v952 = vunpack.c.l.b16 %v306
  %v953 = vunpack.c.h.b16 %v306
  %v954 = vunpack.c.l.b16 %v309
  %v955 = vunpack.c.h.b16 %v309
  %v956 = vunpack.c.l.b16 %v310
  %v957 = vunpack.c.h.b16 %v310
  %v958 = vunpack.c.l.b16 %v313
  %v959 = vunpack.c.h.b16 %v313
  %v960 = vunpack.c.l.b16 %v314
  %v961 = vunpack.c.h.b16 %v314
  %v962 = vunpack.c.l.b16 %v317
  %v963 = vunpack.c.h.b16 %v317
  %v964 = vunpack.c.l.b16 %v318
  %v965 = vunpack.c.h.b16 %v318
  %v966 = vunpack.c.l.b16 %v321
  %v967 = vunpack.c.h.b16 %v321
  %v968 = vunpack.c.l.b16 %v322
  %v969 = vunpack.c.h.b16 %v322
  %v970 = vunpack.c.l.b16 %v325
  %v971 = vunpack.c.h.b16 %v325
  %v972 = vunpack.c.l.b16 %v326
  %v973 = vunpack.c.h.b16 %v326
  %v974 = vunpack.c.l.b16 %v329
  %v975 = vunpack.c.h.b16 %v329
  %v976 = vunpack.c.l.b16 %v330
  %v977 = vunpack.c.h.b16 %v330
  %v978 = vunpack.c.l.b16 %v333
  %v979 = vunpack.c.h.b16 %v333
  %v980 = vunpack.c.l.b16 %v334
  %v981 = vunpack.c.h.b16 %v334
  %v982 = vunpack.c.l.b16 %v337
  %v983 = vunpack.c.h.b16 %v337
  %v984 = vunpack.c.l.b16 %v338
  %v985 = vunpack.c.h.b16 %v338
  %v986 = vunpack.c.l.b16 %v341
  %v987 = vunpack.c.h.b16 %v341
  %v988 = vunpack.c.l.b16 %v342
  %v989 = vunpack.c.h.b16 %v342
  %v990 = vunpack.c.l.b16 %v345
  %v991 = vunpack.c.h.b16 %v345
  %v992 = vunpack.c.l.b16 %v346
  %v993 = vunpack.c.h.b16 %v346
  %v994 = vunpack.c.l.b16 %v349
  %v995 = vunpack.c.h.b16 %v349
  %v996 = vunpack.c.l.b16 %v350
  %v997 = vunpack.c.h.b16 %v350
  %v998 = vunpack.c.l.b16 %v353
  %v999 = vunpack.c.h.b16 %v353
  %v1000 = vunpack.c.l.b16 %v354
  %v1001 = vunpack.c.h.b16 %v354
  %v1002 = vunpack.c.l.b16 %v357
  %v1003 = vunpack.c.h.b16 %v357
  %v1004 = vunpack.c.l.b16 %v358
  %v1005 = vunpack.c.h.b16 %v358
  %v1006 = vunpack.c.l.b16 %v361
  %v1007 = vunpack.c.h.b16 %v361
  %v1008 = vunpack.c.l.b16 %v362
  %v1009 = vunpack.c.h.b16 %v362
  %v1010 = vunpack.c.l.b16 %v365
  %v1011 = vunpack.c.h.b16 %v365
  %v1012 = vunpack.c.l.b16 %v366
  %v1013 = vunpack.c.h.b16 %v366
  %v1014 = vunpack.c.l.b16 %v369
  %v1015 = vunpack.c.h.b16 %v369
  %v1016 = vunpack.c.l.b16 %v370
  %v1017 = vunpack.c.h.b16 %v370
  %v1018 = vunpack.c.l.b16 %v373
  %v1019 = vunpack.c.h.b16 %v373
  %v1020 = vunpack.c.l.b16 %v374
  %v1021 = vunpack.c.h.b16 %v374
  %v1022 = vunpack.c.l.b16 %v377
  %v1023 = vunpack.c.h.b16 %v377
  %v1024 = vunpack.c.l.b16 %v378
  %v1025 = vunpack.c.h.b16 %v378
  %v1026 = vunpack.c.l.b16 %v381
  %v1027 = vunpack.c.h.b16 %v381
  %v1028 = vunpack.c.l.b16 %v382
  %v1029 = vunpack.c.h.b16 %v382
  %v1030 = vunpack.c.l.b16 %v385
  %v1031 = vunpack.c.h.b16 %v385
  %v1032 = vunpack.c.l.b16 %v386
  %v1033 = vunpack.c.h.b16 %v386
  %v1034 = vunpack.c.l.b16 %v389
  %v1035 = vunpack.c.h.b16 %v389
  %v1036 = vunpack.c.l.b16 %v390
  %v1037 = vunpack.c.h.b16 %v390
  %v1038 = vunpack.c.l.b16 %v393
  %v1039 = vunpack.c.h.b16 %v393
  %v1040 = vunpack.c.l.b16 %v394
  %v1041 = vunpack.c.h.b16 %v394
  %v1042 = vunpack.c.l.b16 %v397
  %v1043 = vunpack.c.h.b16 %v397
  %v1044 = vunpack.c.l.b16 %v398
  %v1045 = vunpack.c.h.b16 %v398
  %v1046 = vunpack.c.l.b16 %v401
  %v1047 = vunpack.c.h.b16 %v401
  %v1048 = vunpack.c.l.b16 %v402
  %v1049 = vunpack.c.h.b16 %v402
  %v1050 = vunpack.c.l.b16 %v405
  %v1051 = vunpack.c.h.b16 %v405
  %v1052 = vunpack.c.l.b16 %v406
  %v1053 = vunpack.c.h.b16 %v406
  %v1054 = vunpack.c.l.b16 %v409
  %v1055 = vunpack.c.h.b16 %v409
  %v1056 = vunpack.c.l.b16 %v410
  %v1057 = vunpack.c.h.b16 %v410
  %v1058 = vunpack.c.l.b16 %v413
  %v1059 = vunpack.c.h.b16 %v413
  %v1060 = vunpack.c.l.b16 %v414
  %v1061 = vunpack.c.h.b16 %v414
  %v1062 = vunpack.c.l.b16 %v417
  %v1063 = vunpack.c.h.b16 %v417
  %v1064 = vunpack.c.l.b16 %v418
  %v1065 = vunpack.c.h.b16 %v418
  %v1066 = vunpack.c.l.b16 %v421
  %v1067 = vunpack.c.h.b16 %v421
  %v1068 = vunpack.c.l.b16 %v422
  %v1069 = vunpack.c.h.b16 %v422
  %v1070 = vpack.c.b16 %v946, %v942
  %v1071 = vpack.c.b16 %v947, %v943
  %v1072 = vpack.c.b16 %v948, %v944
  %v1073 = vpack.c.b16 %v949, %v945
  %v1074 = vpack.c.b16 %v954, %v950
  %v1075 = vpack.c.b16 %v955, %v951
  %v1076 = vpack.c.b16 %v956, %v952
  %v1077 = vpack.c.b16 %v957, %v953
  %v1078 = vpack.c.b16 %v962, %v958
  %v1079 = vpack.c.b16 %v963, %v959
  %v1080 = vpack.c.b16 %v964, %v960
  %v1081 = vpack.c.b16 %v965, %v961
  %v1082 = vpack.c.b16 %v970, %v966
  %v1083 = vpack.c.b16 %v971, %v967
  %v1084 = vpack.c.b16 %v972, %v968
  %v1085 = vpack.c.b16 %v973, %v969
  %v1086 = vpack.c.b16 %v978, %v974
  %v1087 = vpack.c.b16 %v979, %v975
  %v1088 = vpack.c.b16 %v980, %v976
  %v1089 = vpack.c.b16 %v981, %v977
  %v1090 = vpack.c.b16 %v986, %v982
  %v1091 = vpack.c.b16 %v987, %v983
  %v1092 = vpack.c.b16 %v988, %v984
  %v1093 = vpack.c.b16 %v989, %v985
  %v1094 = vpack.c.b16 %v994, %v990
  %v1095 = vpack.c.b16 %v995, %v991
  %v1096 = vpack.c.b16 %v996, %v992
  %v1097 = vpack.c.b16 %v997, %v993
  %v1098 = vpack.c.b16 %v1002, %v998
  %v1099 = vpack.c.b16 %v1003, %v999
  %v1100 = vpack.c.b16 %v1004, %v1000
  %v1101 = vpack.c.b16 %v1005, %v1001
  %v1102 = vpack.c.b16 %v1010, %v1006
  %v1103 = vpack.c.b16 %v1011, %v1007
  %v1104 = vpack.c.b16 %v1012, %v1008
  %v1105 = vpack.c.b16 %v1013, %v1009
  %v1106 = vpack.c.b16 %v1018, %v1014
  %v1107 = vpack.c.b16 %v1019, %v1015
  %v1108 = vpack.c.b16 %v1020, %v1016
  %v1109 = vpack.c.b16 %v1021, %v1017
  %v1110 = vpack.c.b16 %v1026, %v1022
  %v1111 = vpack.c.b16 %v1027, %v1023
  %v1112 = vpack.c.b16 %v1028, %v1024
  %v1113 = vpack.c.b16 %v1029, %v1025
  %v1114 = vpack.c.b16 %v1034, %v1030
  %v1115 = vpack.c.b16 %v1035, %v1031
  %v1116 = vpack.c.b16 %v1036, %v1032
  %v1117 = vpack.c.b16 %v1037, %v1033
  %v1118 = vpack.c.b16 %v1042, %v1038
  %v1119 = vpack.c.b16 %v1043, %v1039
  %v1120 = vpack.c.b16 %v1044, %v1040
  %v1121 = vpack.c.b16 %v1045, %v1041
  %v1122 = vpack.c.b16 %v1050, %v1046
  %v1123 = vpack.c.b16 %v1051, %v1047
  %v1124 = vpack.c.b16 %v1052, %v1048
  %v1125 = vpack.c.b16 %v1053, %v1049
  %v1126 = vpack.c.b16 %v1058, %v1054
  %v1127 = vpack.c.b16 %v1059, %v1055
  %v1128 = vpack.c.b16 %v1060, %v1056
  %v1129 = vpack.c.b16 %v1061, %v1057
  %v1130 = vpack.c.b16 %v1066, %v1062
  %v1131 = vpack.c.b16 %v1067, %v1063
  %v1132 = vpack.c.b16 %v1068, %v1064
  %v1133 = vpack.c.b16 %v1069, %v1065
  %1198 = vmatprep.subr.bf16.mxu0 %v625
  %1199 = vmatpush1.bf16.msra.mxu0 %v624
  %1200 = vmatprep.subr.bf16.mxu0 %v629
  %1201 = vmatpush1.bf16.msra.mxu0 %v628
  %1202 = vmatprep.subr.bf16.mxu0 %v633
  %1203 = vmatpush1.bf16.msra.mxu0 %v632
  %1204 = vmatprep.subr.bf16.mxu0 %v637
  %1205 = vmatpush1.bf16.msra.mxu0 %v636
  %1206 = vmatprep.subr.bf16.mxu0 %v641
  %1207 = vmatpush1.bf16.msra.mxu0 %v640
  %1208 = vmatprep.subr.bf16.mxu0 %v645
  %1209 = vmatpush1.bf16.msra.mxu0 %v644
  %1210 = vmatprep.subr.bf16.mxu0 %v649
  %1211 = vmatpush1.bf16.msra.mxu0 %v648
  %1212 = vmatprep.subr.bf16.mxu0 %v653
  %1213 = vmatpush1.bf16.msra.mxu0 %v652
  %1214 = vmatprep.subr.bf16.mxu0 %v657
  %1215 = vmatpush1.bf16.msra.mxu0 %v656
  %1216 = vmatprep.subr.bf16.mxu0 %v661
  %1217 = vmatpush1.bf16.msra.mxu0 %v660
  %1218 = vmatprep.subr.bf16.mxu0 %v665
  %1219 = vmatpush1.bf16.msra.mxu0 %v664
  %1220 = vmatprep.subr.bf16.mxu0 %v669
  %1221 = vmatpush1.bf16.msra.mxu0 %v668
  %1222 = vmatprep.subr.bf16.mxu0 %v673
  %1223 = vmatpush1.bf16.msra.mxu0 %v672
  %1224 = vmatprep.subr.bf16.mxu0 %v677
  %1225 = vmatpush1.bf16.msra.mxu0 %v676
  %1226 = vmatprep.subr.bf16.mxu0 %v681
  %1227 = vmatpush1.bf16.msra.mxu0 %v680
  %1228 = vmatprep.subr.bf16.mxu0 %v685
  %1229 = vmatpush1.bf16.msra.mxu0 %v684
  %1230 = vmatprep.mubr.bf16.mxu0 %v875
  %1231 = vmatmul.mubr.bf16.gmra.mrb[0].mxu0 %v874
  %v1232 = vpop.f32.mrb[0].mxu0
  %v1233 = vadd.f32 0.0, %v1232
  %v1234 = vpop.f32.mrb[0].mxu0
  %v1235 = vadd.f32 0.0, %v1234
  %v1236 = vpop.f32.mrb[0].mxu0
  %v1237 = vpop.f32.mrb[0].mxu0
  %1238 = vdwg.mxu0
  %1239 = vmatprep.subr.bf16.mxu0 %v627
  %1240 = vmatpush1.bf16.msra.mxu0 %v626
  %1241 = vmatprep.subr.bf16.mxu0 %v631
  %1242 = vmatpush1.bf16.msra.mxu0 %v630
  %1243 = vmatprep.subr.bf16.mxu0 %v635
  %1244 = vmatpush1.bf16.msra.mxu0 %v634
  %1245 = vmatprep.subr.bf16.mxu0 %v639
  %1246 = vmatpush1.bf16.msra.mxu0 %v638
  %1247 = vmatprep.subr.bf16.mxu0 %v643
  %1248 = vmatpush1.bf16.msra.mxu0 %v642
  %1249 = vmatprep.subr.bf16.mxu0 %v647
  %1250 = vmatpush1.bf16.msra.mxu0 %v646
  %1251 = vmatprep.subr.bf16.mxu0 %v651
  %1252 = vmatpush1.bf16.msra.mxu0 %v650
  %1253 = vmatprep.subr.bf16.mxu0 %v655
  %1254 = vmatpush1.bf16.msra.mxu0 %v654
  %1255 = vmatprep.subr.bf16.mxu0 %v659
  %1256 = vmatpush1.bf16.msra.mxu0 %v658
  %1257 = vmatprep.subr.bf16.mxu0 %v663
  %1258 = vmatpush1.bf16.msra.mxu0 %v662
  %1259 = vmatprep.subr.bf16.mxu0 %v667
  %1260 = vmatpush1.bf16.msra.mxu0 %v666
  %1261 = vmatprep.subr.bf16.mxu0 %v671
  %1262 = vmatpush1.bf16.msra.mxu0 %v670
  %1263 = vmatprep.subr.bf16.mxu0 %v675
  %1264 = vmatpush1.bf16.msra.mxu0 %v674
  %1265 = vmatprep.subr.bf16.mxu0 %v679
  %1266 = vmatpush1.bf16.msra.mxu0 %v678
  %1267 = vmatprep.subr.bf16.mxu0 %v683
  %1268 = vmatpush1.bf16.msra.mxu0 %v682
  %1269 = vmatprep.subr.bf16.mxu0 %v687
  %1270 = vmatpush1.bf16.msra.mxu0 %v686
  %1271 = vmatprep.mubr.bf16.mxu0 %v875
  %1272 = vmatmul.mubr.bf16.gmra.mrb[0].mxu0 %v874
  %v1273 = vpop.f32.mrb[0].mxu0
  %v1274 = vadd.f32 0.0, %v1273
  %v1275 = vpop.f32.mrb[0].mxu0
  %v1276 = vadd.f32 0.0, %v1275
  %v1277 = vpop.f32.mrb[0].mxu0
  %v1278 = vpop.f32.mrb[0].mxu0
  %1279 = vdwg.mxu0
  %1280 = vmatprep.subr.bf16.mxu0 %v1071
  %1281 = vmatpush1.bf16.msra.mxu0 %v1070
  %1282 = vmatprep.subr.bf16.mxu0 %v1075
  %1283 = vmatpush1.bf16.msra.mxu0 %v1074
  %1284 = vmatprep.subr.bf16.mxu0 %v1079
  %1285 = vmatpush1.bf16.msra.mxu0 %v1078
  %1286 = vmatprep.subr.bf16.mxu0 %v1083
  %1287 = vmatpush1.bf16.msra.mxu0 %v1082
  %1288 = vmatprep.subr.bf16.mxu0 %v1087
  %1289 = vmatpush1.bf16.msra.mxu0 %v1086
  %1290 = vmatprep.subr.bf16.mxu0 %v1091
  %1291 = vmatpush1.bf16.msra.mxu0 %v1090
  %1292 = vmatprep.subr.bf16.mxu0 %v1095
  %1293 = vmatpush1.bf16.msra.mxu0 %v1094
  %1294 = vmatprep.subr.bf16.mxu0 %v1099
  %1295 = vmatpush1.bf16.msra.mxu0 %v1098
  %1296 = vmatprep.subr.bf16.mxu0 %v1103
  %1297 = vmatpush1.bf16.msra.mxu0 %v1102
  %1298 = vmatprep.subr.bf16.mxu0 %v1107
  %1299 = vmatpush1.bf16.msra.mxu0 %v1106
  %1300 = vmatprep.subr.bf16.mxu0 %v1111
  %1301 = vmatpush1.bf16.msra.mxu0 %v1110
  %1302 = vmatprep.subr.bf16.mxu0 %v1115
  %1303 = vmatpush1.bf16.msra.mxu0 %v1114
  %1304 = vmatprep.subr.bf16.mxu0 %v1119
  %1305 = vmatpush1.bf16.msra.mxu0 %v1118
  %1306 = vmatprep.subr.bf16.mxu0 %v1123
  %1307 = vmatpush1.bf16.msra.mxu0 %v1122
  %1308 = vmatprep.subr.bf16.mxu0 %v1127
  %1309 = vmatpush1.bf16.msra.mxu0 %v1126
  %1310 = vmatprep.subr.bf16.mxu0 %v1131
  %1311 = vmatpush1.bf16.msra.mxu0 %v1130
  %1312 = vmatprep.mubr.bf16.mxu0 %v875
  %1313 = vmatmul.mubr.bf16.gmra.mrb[0].mxu0 %v874
  %v1314 = vpop.f32.mrb[0].mxu0
  %v1315 = vadd.f32 0.0, %v1314
  %v1316 = vpop.f32.mrb[0].mxu0
  %v1317 = vadd.f32 0.0, %v1316
  %v1318 = vpop.f32.mrb[0].mxu0
  %v1319 = vpop.f32.mrb[0].mxu0
  %1320 = vdwg.mxu0
  %1321 = vmatprep.subr.bf16.mxu0 %v1073
  %1322 = vmatpush1.bf16.msra.mxu0 %v1072
  %1323 = vmatprep.subr.bf16.mxu0 %v1077
  %1324 = vmatpush1.bf16.msra.mxu0 %v1076
  %1325 = vmatprep.subr.bf16.mxu0 %v1081
  %1326 = vmatpush1.bf16.msra.mxu0 %v1080
  %1327 = vmatprep.subr.bf16.mxu0 %v1085
  %1328 = vmatpush1.bf16.msra.mxu0 %v1084
  %1329 = vmatprep.subr.bf16.mxu0 %v1089
  %1330 = vmatpush1.bf16.msra.mxu0 %v1088
  %1331 = vmatprep.subr.bf16.mxu0 %v1093
  %1332 = vmatpush1.bf16.msra.mxu0 %v1092
  %1333 = vmatprep.subr.bf16.mxu0 %v1097
  %1334 = vmatpush1.bf16.msra.mxu0 %v1096
  %1335 = vmatprep.subr.bf16.mxu0 %v1101
  %1336 = vmatpush1.bf16.msra.mxu0 %v1100
  %1337 = vmatprep.subr.bf16.mxu0 %v1105
  %1338 = vmatpush1.bf16.msra.mxu0 %v1104
  %1339 = vmatprep.subr.bf16.mxu0 %v1109
  %1340 = vmatpush1.bf16.msra.mxu0 %v1108
  %1341 = vmatprep.subr.bf16.mxu0 %v1113
  %1342 = vmatpush1.bf16.msra.mxu0 %v1112
  %1343 = vmatprep.subr.bf16.mxu0 %v1117
  %1344 = vmatpush1.bf16.msra.mxu0 %v1116
  %1345 = vmatprep.subr.bf16.mxu0 %v1121
  %1346 = vmatpush1.bf16.msra.mxu0 %v1120
  %1347 = vmatprep.subr.bf16.mxu0 %v1125
  %1348 = vmatpush1.bf16.msra.mxu0 %v1124
  %1349 = vmatprep.subr.bf16.mxu0 %v1129
  %1350 = vmatpush1.bf16.msra.mxu0 %v1128
  %1351 = vmatprep.subr.bf16.mxu0 %v1133
  %1352 = vmatpush1.bf16.msra.mxu0 %v1132
  %1353 = vmatprep.mubr.bf16.mxu0 %v875
  %1354 = vmatmul.mubr.bf16.gmra.mrb[0].mxu0 %v874
  %v1355 = vpop.f32.mrb[0].mxu0
  %v1356 = vadd.f32 0.0, %v1355
  %v1357 = vpop.f32.mrb[0].mxu0
  %v1358 = vadd.f32 0.0, %v1357
  %v1359 = vpop.f32.mrb[0].mxu0
  %v1360 = vpop.f32.mrb[0].mxu0
  %1361 = vdwg.mxu0
  %v1362 = vld [vmem:[#allocation2 + $0x20] sm:$0xff]
  %v1363 = vld [vmem:[#allocation2 + $0x28] sm:$0xff]
  %v1364 = vld [vmem:[#allocation2 + $0x30] sm:$0xff]
  %v1365 = vld [vmem:[#allocation2 + $0x38] sm:$0xff]
  %v1366 = vadd.f32 %v1362, %v1233
  %v1367 = vadd.f32 %v1363, %v1235
  %v1368 = vadd.f32 %v1364, %v1274
  %v1369 = vadd.f32 %v1365, %v1276
  %v1370 = vld [vmem:[#allocation5] sm:$0xff]
  %v1371 = vxor.u32 %v1366, 2147483648
  %v1372 = vxor.u32 %v1367, 2147483648
  %v1373 = vmul.f32 %v1371, 1.442695
  %v1374 = vpow.pop %v1373
  %v1375 = vmul.f32 %v1372, 1.442695
  %v1376 = vpow.pop %v1375
  %v1377 = vadd.f32 %v1374, 1.0
  %v1378 = vadd.f32 %v1376, 1.0
  %v1379 = vrcp.pop %v1377
  %v1380 = vmul.f32 1.0, %v1379
  %v1381 = vrcp.pop %v1378
  %v1382 = vmul.f32 1.0, %v1381
  %v1383 = vtanh.pop %v1368
  %v1384 = vxor.u32 %v1369, 2147483648
  %v1385 = vmul.f32 %v1384, 1.442695
  %v1386 = vpow.pop %v1385
  %v1387 = vadd.f32 %v1386, 1.0
  %v1388 = vrcp.pop %v1387
  %v1389 = vmul.f32 1.0, %v1388
  %v1390 = vmul.f32 %v1382, %v1370
  %v1391 = vmul.f32 %v1380, %v1383
  %v1392 = vadd.f32 %v1390, %v1391
  %v1393 = vtanh.pop %v1392
  %v1394 = vmul.f32 %v1389, %v1393
  %1395 = vst [vmem:[#allocation5] sm:$0xff] %v1392
  %v1396 = vpack.c.bf16 %v1394, %v1394
  %1397 = vst [vmem:[#allocation4] sm:$0xf] %v1396
  %v1399 = vlaneseq
  %v1400 = vshrl.u32 %v1399, 7
  %v1401 = vsub.s32 0, %v1400
  %v1402 = vrot.slane %v423, %v1401
  %v1403 = vlaneseq
  %v1404 = vshrl.u32 %v1403, 7
  %v1405 = vsub.s32 1, %v1404
  %v1406 = vrot.slane %v423, %v1405
  %v1407 = vlaneseq
  %v1408 = vshrl.u32 %v1407, 7
  %v1409 = vsub.s32 2, %v1408
  %v1410 = vrot.slane %v423, %v1409
  %v1411 = vlaneseq
  %v1412 = vshrl.u32 %v1411, 7
  %v1413 = vsub.s32 3, %v1412
  %v1414 = vrot.slane %v423, %v1413
  %v1419 = vadd.f32 %v1315, %v1402
  %v1420 = vadd.f32 %v1317, %v1406
  %v1421 = vadd.f32 %v1356, %v1410
  %v1422 = vadd.f32 %v1358, %v1414
  %v1423 = vld [vmem:[#allocation6] sm:$0xff]
  %v1424 = vxor.u32 %v1419, 2147483648
  %v1425 = vxor.u32 %v1420, 2147483648
  %v1426 = vmul.f32 %v1424, 1.442695
  %v1427 = vpow.pop %v1426
  %v1428 = vmul.f32 %v1425, 1.442695
  %v1429 = vpow.pop %v1428
  %v1430 = vadd.f32 %v1427, 1.0
  %v1431 = vadd.f32 %v1429, 1.0
  %v1432 = vrcp.pop %v1430
  %v1433 = vmul.f32 1.0, %v1432
  %v1434 = vrcp.pop %v1431
  %v1435 = vmul.f32 1.0, %v1434
  %v1436 = vtanh.pop %v1421
  %v1437 = vxor.u32 %v1422, 2147483648
  %v1438 = vmul.f32 %v1437, 1.442695
  %v1439 = vpow.pop %v1438
  %v1440 = vadd.f32 %v1439, 1.0
  %v1441 = vrcp.pop %v1440
  %v1442 = vmul.f32 1.0, %v1441
  %v1443 = vmul.f32 %v1435, %v1423
  %v1444 = vmul.f32 %v1433, %v1436
  %v1445 = vadd.f32 %v1443, %v1444
  %v1446 = vtanh.pop %v1445
  %v1447 = vmul.f32 %v1442, %v1446
  %1448 = vst [vmem:[#allocation6] sm:$0xff] %v1445
  %1449 = vst [vmem:[#allocation3] sm:$0xff] %v1447
  %v1450 = vpack.c.bf16 %v1447, %v1447
  %1451 = vst [vmem:[#allocation4 + $0x4] sm:$0xf] %v1450
  %v1452 = vld [vmem:[#allocation4] sm:$0xff]
  %v1454 = vunpack.c.l.b16 %v1452
  %v1455 = vunpack.c.h.b16 %v1452
  %v1456 = vpack.c.b16 %v1454, %v1454
  %v1457 = vpack.c.b16 %v1455, %v1455
  %1460 = vmatprep.subr.bf16.mxu0 %v625
  %1461 = vmatpush1.bf16.msra.mxu0 %v624
  %1462 = vmatprep.subr.bf16.mxu0 %v629
  %1463 = vmatpush1.bf16.msra.mxu0 %v628
  %1464 = vmatprep.subr.bf16.mxu0 %v633
  %1465 = vmatpush1.bf16.msra.mxu0 %v632
  %1466 = vmatprep.subr.bf16.mxu0 %v637
  %1467 = vmatpush1.bf16.msra.mxu0 %v636
  %1468 = vmatprep.subr.bf16.mxu0 %v641
  %1469 = vmatpush1.bf16.msra.mxu0 %v640
  %1470 = vmatprep.subr.bf16.mxu0 %v645
  %1471 = vmatpush1.bf16.msra.mxu0 %v644
  %1472 = vmatprep.subr.bf16.mxu0 %v649
  %1473 = vmatpush1.bf16.msra.mxu0 %v648
  %1474 = vmatprep.subr.bf16.mxu0 %v653
  %1475 = vmatpush1.bf16.msra.mxu0 %v652
  %1476 = vmatprep.subr.bf16.mxu0 %v657
  %1477 = vmatpush1.bf16.msra.mxu0 %v656
  %1478 = vmatprep.subr.bf16.mxu0 %v661
  %1479 = vmatpush1.bf16.msra.mxu0 %v660
  %1480 = vmatprep.subr.bf16.mxu0 %v665
  %1481 = vmatpush1.bf16.msra.mxu0 %v664
  %1482 = vmatprep.subr.bf16.mxu0 %v669
  %1483 = vmatpush1.bf16.msra.mxu0 %v668
  %1484 = vmatprep.subr.bf16.mxu0 %v673
  %1485 = vmatpush1.bf16.msra.mxu0 %v672
  %1486 = vmatprep.subr.bf16.mxu0 %v677
  %1487 = vmatpush1.bf16.msra.mxu0 %v676
  %1488 = vmatprep.subr.bf16.mxu0 %v681
  %1489 = vmatpush1.bf16.msra.mxu0 %v680
  %1490 = vmatprep.subr.bf16.mxu0 %v685
  %1491 = vmatpush1.bf16.msra.mxu0 %v684
  %1492 = vmatprep.mubr.bf16.mxu0 %v1457
  %1493 = vmatmul.mubr.bf16.gmra.mrb[0].mxu0 %v1456
  %v1494 = vpop.f32.mrb[0].mxu0
  %v1495 = vadd.f32 0.0, %v1494
  %v1496 = vpop.f32.mrb[0].mxu0
  %v1497 = vadd.f32 0.0, %v1496
  %v1498 = vpop.f32.mrb[0].mxu0
  %v1499 = vpop.f32.mrb[0].mxu0
  %1500 = vdwg.mxu0
  %1501 = vmatprep.subr.bf16.mxu0 %v627
  %1502 = vmatpush1.bf16.msra.mxu0 %v626
  %1503 = vmatprep.subr.bf16.mxu0 %v631
  %1504 = vmatpush1.bf16.msra.mxu0 %v630
  %1505 = vmatprep.subr.bf16.mxu0 %v635
  %1506 = vmatpush1.bf16.msra.mxu0 %v634
  %1507 = vmatprep.subr.bf16.mxu0 %v639
  %1508 = vmatpush1.bf16.msra.mxu0 %v638
  %1509 = vmatprep.subr.bf16.mxu0 %v643
  %1510 = vmatpush1.bf16.msra.mxu0 %v642
  %1511 = vmatprep.subr.bf16.mxu0 %v647
  %1512 = vmatpush1.bf16.msra.mxu0 %v646
  %1513 = vmatprep.subr.bf16.mxu0 %v651
  %1514 = vmatpush1.bf16.msra.mxu0 %v650
  %1515 = vmatprep.subr.bf16.mxu0 %v655
  %1516 = vmatpush1.bf16.msra.mxu0 %v654
  %1517 = vmatprep.subr.bf16.mxu0 %v659
  %1518 = vmatpush1.bf16.msra.mxu0 %v658
  %1519 = vmatprep.subr.bf16.mxu0 %v663
  %1520 = vmatpush1.bf16.msra.mxu0 %v662
  %1521 = vmatprep.subr.bf16.mxu0 %v667
  %1522 = vmatpush1.bf16.msra.mxu0 %v666
  %1523 = vmatprep.subr.bf16.mxu0 %v671
  %1524 = vmatpush1.bf16.msra.mxu0 %v670
  %1525 = vmatprep.subr.bf16.mxu0 %v675
  %1526 = vmatpush1.bf16.msra.mxu0 %v674
  %1527 = vmatprep.subr.bf16.mxu0 %v679
  %1528 = vmatpush1.bf16.msra.mxu0 %v678
  %1529 = vmatprep.subr.bf16.mxu0 %v683
  %1530 = vmatpush1.bf16.msra.mxu0 %v682
  %1531 = vmatprep.subr.bf16.mxu0 %v687
  %1532 = vmatpush1.bf16.msra.mxu0 %v686
  %1533 = vmatprep.mubr.bf16.mxu0 %v1457
  %1534 = vmatmul.mubr.bf16.gmra.mrb[0].mxu0 %v1456
  %v1535 = vpop.f32.mrb[0].mxu0
  %v1536 = vadd.f32 0.0, %v1535
  %v1537 = vpop.f32.mrb[0].mxu0
  %v1538 = vadd.f32 0.0, %v1537
  %v1539 = vpop.f32.mrb[0].mxu0
  %v1540 = vpop.f32.mrb[0].mxu0
  %1541 = vdwg.mxu0
  %1542 = vmatprep.subr.bf16.mxu0 %v1071
  %1543 = vmatpush1.bf16.msra.mxu0 %v1070
  %1544 = vmatprep.subr.bf16.mxu0 %v1075
  %1545 = vmatpush1.bf16.msra.mxu0 %v1074
  %1546 = vmatprep.subr.bf16.mxu0 %v1079
  %1547 = vmatpush1.bf16.msra.mxu0 %v1078
  %1548 = vmatprep.subr.bf16.mxu0 %v1083
  %1549 = vmatpush1.bf16.msra.mxu0 %v1082
  %1550 = vmatprep.subr.bf16.mxu0 %v1087
  %1551 = vmatpush1.bf16.msra.mxu0 %v1086
  %1552 = vmatprep.subr.bf16.mxu0 %v1091
  %1553 = vmatpush1.bf16.msra.mxu0 %v1090
  %1554 = vmatprep.subr.bf16.mxu0 %v1095
  %1555 = vmatpush1.bf16.msra.mxu0 %v1094
  %1556 = vmatprep.subr.bf16.mxu0 %v1099
  %1557 = vmatpush1.bf16.msra.mxu0 %v1098
  %1558 = vmatprep.subr.bf16.mxu0 %v1103
  %1559 = vmatpush1.bf16.msra.mxu0 %v1102
  %1560 = vmatprep.subr.bf16.mxu0 %v1107
  %1561 = vmatpush1.bf16.msra.mxu0 %v1106
  %1562 = vmatprep.subr.bf16.mxu0 %v1111
  %1563 = vmatpush1.bf16.msra.mxu0 %v1110
  %1564 = vmatprep.subr.bf16.mxu0 %v1115
  %1565 = vmatpush1.bf16.msra.mxu0 %v1114
  %1566 = vmatprep.subr.bf16.mxu0 %v1119
  %1567 = vmatpush1.bf16.msra.mxu0 %v1118
  %1568 = vmatprep.subr.bf16.mxu0 %v1123
  %1569 = vmatpush1.bf16.msra.mxu0 %v1122
  %1570 = vmatprep.subr.bf16.mxu0 %v1127
  %1571 = vmatpush1.bf16.msra.mxu0 %v1126
  %1572 = vmatprep.subr.bf16.mxu0 %v1131
  %1573 = vmatpush1.bf16.msra.mxu0 %v1130
  %1574 = vmatprep.mubr.bf16.mxu0 %v1457
  %1575 = vmatmul.mubr.bf16.gmra.mrb[0].mxu0 %v1456
  %v1576 = vpop.f32.mrb[0].mxu0
  %v1577 = vadd.f32 0.0, %v1576
  %v1578 = vpop.f32.mrb[0].mxu0
  %v1579 = vadd.f32 0.0, %v1578
  %v1580 = vpop.f32.mrb[0].mxu0
  %v1581 = vpop.f32.mrb[0].mxu0
  %1582 = vdwg.mxu0
  %1583 = vmatprep.subr.bf16.mxu0 %v1073
  %1584 = vmatpush1.bf16.msra.mxu0 %v1072
  %1585 = vmatprep.subr.bf16.mxu0 %v1077
  %1586 = vmatpush1.bf16.msra.mxu0 %v1076
  %1587 = vmatprep.subr.bf16.mxu0 %v1081
  %1588 = vmatpush1.bf16.msra.mxu0 %v1080
  %1589 = vmatprep.subr.bf16.mxu0 %v1085
  %1590 = vmatpush1.bf16.msra.mxu0 %v1084
  %1591 = vmatprep.subr.bf16.mxu0 %v1089
  %1592 = vmatpush1.bf16.msra.mxu0 %v1088
  %1593 = vmatprep.subr.bf16.mxu0 %v1093
  %1594 = vmatpush1.bf16.msra.mxu0 %v1092
  %1595 = vmatprep.subr.bf16.mxu0 %v1097
  %1596 = vmatpush1.bf16.msra.mxu0 %v1096
  %1597 = vmatprep.subr.bf16.mxu0 %v1101
  %1598 = vmatpush1.bf16.msra.mxu0 %v1100
  %1599 = vmatprep.subr.bf16.mxu0 %v1105
  %1600 = vmatpush1.bf16.msra.mxu0 %v1104
  %1601 = vmatprep.subr.bf16.mxu0 %v1109
  %1602 = vmatpush1.bf16.msra.mxu0 %v1108
  %1603 = vmatprep.subr.bf16.mxu0 %v1113
  %1604 = vmatpush1.bf16.msra.mxu0 %v1112
  %1605 = vmatprep.subr.bf16.mxu0 %v1117
  %1606 = vmatpush1.bf16.msra.mxu0 %v1116
  %1607 = vmatprep.subr.bf16.mxu0 %v1121
  %1608 = vmatpush1.bf16.msra.mxu0 %v1120
  %1609 = vmatprep.subr.bf16.mxu0 %v1125
  %1610 = vmatpush1.bf16.msra.mxu0 %v1124
  %1611 = vmatprep.subr.bf16.mxu0 %v1129
  %1612 = vmatpush1.bf16.msra.mxu0 %v1128
  %1613 = vmatprep.subr.bf16.mxu0 %v1133
  %1614 = vmatpush1.bf16.msra.mxu0 %v1132
  %1615 = vmatprep.mubr.bf16.mxu0 %v1457
  %1616 = vmatmul.mubr.bf16.gmra.mrb[0].mxu0 %v1456
  %v1617 = vpop.f32.mrb[0].mxu0
  %v1618 = vadd.f32 0.0, %v1617
  %v1619 = vpop.f32.mrb[0].mxu0
  %v1620 = vadd.f32 0.0, %v1619
  %v1621 = vpop.f32.mrb[0].mxu0
  %v1622 = vpop.f32.mrb[0].mxu0
  %1623 = vdwg.mxu0
  %v1624 = vld [vmem:[#allocation2 + $0x40] sm:$0xff]
  %v1625 = vld [vmem:[#allocation2 + $0x48] sm:$0xff]
  %v1626 = vld [vmem:[#allocation2 + $0x50] sm:$0xff]
  %v1627 = vld [vmem:[#allocation2 + $0x58] sm:$0xff]
  %v1628 = vadd.f32 %v1624, %v1495
  %v1629 = vadd.f32 %v1625, %v1497
  %v1630 = vadd.f32 %v1626, %v1536
  %v1631 = vadd.f32 %v1627, %v1538
  %v1632 = vld [vmem:[#allocation5] sm:$0xff]
  %v1633 = vxor.u32 %v1628, 2147483648
  %v1634 = vxor.u32 %v1629, 2147483648
  %v1635 = vmul.f32 %v1633, 1.442695
  %v1636 = vpow.pop %v1635
  %v1637 = vmul.f32 %v1634, 1.442695
  %v1638 = vpow.pop %v1637
  %v1639 = vadd.f32 %v1636, 1.0
  %v1640 = vadd.f32 %v1638, 1.0
  %v1641 = vrcp.pop %v1639
  %v1642 = vmul.f32 1.0, %v1641
  %v1643 = vrcp.pop %v1640
  %v1644 = vmul.f32 1.0, %v1643
  %v1645 = vtanh.pop %v1630
  %v1646 = vxor.u32 %v1631, 2147483648
  %v1647 = vmul.f32 %v1646, 1.442695
  %v1648 = vpow.pop %v1647
  %v1649 = vadd.f32 %v1648, 1.0
  %v1650 = vrcp.pop %v1649
  %v1651 = vmul.f32 1.0, %v1650
  %v1652 = vmul.f32 %v1644, %v1632
  %v1653 = vmul.f32 %v1642, %v1645
  %v1654 = vadd.f32 %v1652, %v1653
  %v1655 = vtanh.pop %v1654
  %v1656 = vmul.f32 %v1651, %v1655
  %1657 = vst [vmem:[#allocation5] sm:$0xff] %v1654
  %v1658 = vpack.c.bf16 %v1656, %v1656
  %1659 = vst [vmem:[#allocation4] sm:$0xf] %v1658
  %v1660 = vadd.f32 %v1577, %v1402
  %v1661 = vadd.f32 %v1579, %v1406
  %v1662 = vadd.f32 %v1618, %v1410
  %v1663 = vadd.f32 %v1620, %v1414
  %v1664 = vld [vmem:[#allocation6] sm:$0xff]
  %v1665 = vxor.u32 %v1660, 2147483648
  %v1666 = vxor.u32 %v1661, 2147483648
  %v1667 = vmul.f32 %v1665, 1.442695
  %v1668 = vpow.pop %v1667
  %v1669 = vmul.f32 %v1666, 1.442695
  %v1670 = vpow.pop %v1669
  %v1671 = vadd.f32 %v1668, 1.0
  %v1672 = vadd.f32 %v1670, 1.0
  %v1673 = vrcp.pop %v1671
  %v1674 = vmul.f32 1.0, %v1673
  %v1675 = vrcp.pop %v1672
  %v1676 = vmul.f32 1.0, %v1675
  %v1677 = vtanh.pop %v1662
  %v1678 = vxor.u32 %v1663, 2147483648
  %v1679 = vmul.f32 %v1678, 1.442695
  %v1680 = vpow.pop %v1679
  %v1681 = vadd.f32 %v1680, 1.0
  %v1682 = vrcp.pop %v1681
  %v1683 = vmul.f32 1.0, %v1682
  %v1684 = vmul.f32 %v1676, %v1664
  %v1685 = vmul.f32 %v1674, %v1677
  %v1686 = vadd.f32 %v1684, %v1685
  %v1687 = vtanh.pop %v1686
  %v1688 = vmul.f32 %v1683, %v1687
  %1689 = vst [vmem:[#allocation6] sm:$0xff] %v1686
  %1690 = vst [vmem:[#allocation3 + $0x8] sm:$0xff] %v1688
  %v1691 = vpack.c.bf16 %v1688, %v1688
  %1692 = vst [vmem:[#allocation4 + $0x4] sm:$0xf] %v1691
  %v1693 = vld [vmem:[#allocation4] sm:$0xff]
  %v1695 = vunpack.c.l.b16 %v1693
  %v1696 = vunpack.c.h.b16 %v1693
  %v1697 = vpack.c.b16 %v1695, %v1695
  %v1698 = vpack.c.b16 %v1696, %v1696
  %1701 = vmatprep.subr.bf16.mxu0 %v625
  %1702 = vmatpush1.bf16.msra.mxu0 %v624
  %1703 = vmatprep.subr.bf16.mxu0 %v629
  %1704 = vmatpush1.bf16.msra.mxu0 %v628
  %1705 = vmatprep.subr.bf16.mxu0 %v633
  %1706 = vmatpush1.bf16.msra.mxu0 %v632
  %1707 = vmatprep.subr.bf16.mxu0 %v637
  %1708 = vmatpush1.bf16.msra.mxu0 %v636
  %1709 = vmatprep.subr.bf16.mxu0 %v641
  %1710 = vmatpush1.bf16.msra.mxu0 %v640
  %1711 = vmatprep.subr.bf16.mxu0 %v645
  %1712 = vmatpush1.bf16.msra.mxu0 %v644
  %1713 = vmatprep.subr.bf16.mxu0 %v649
  %1714 = vmatpush1.bf16.msra.mxu0 %v648
  %1715 = vmatprep.subr.bf16.mxu0 %v653
  %1716 = vmatpush1.bf16.msra.mxu0 %v652
  %1717 = vmatprep.subr.bf16.mxu0 %v657
  %1718 = vmatpush1.bf16.msra.mxu0 %v656
  %1719 = vmatprep.subr.bf16.mxu0 %v661
  %1720 = vmatpush1.bf16.msra.mxu0 %v660
  %1721 = vmatprep.subr.bf16.mxu0 %v665
  %1722 = vmatpush1.bf16.msra.mxu0 %v664
  %1723 = vmatprep.subr.bf16.mxu0 %v669
  %1724 = vmatpush1.bf16.msra.mxu0 %v668
  %1725 = vmatprep.subr.bf16.mxu0 %v673
  %1726 = vmatpush1.bf16.msra.mxu0 %v672
  %1727 = vmatprep.subr.bf16.mxu0 %v677
  %1728 = vmatpush1.bf16.msra.mxu0 %v676
  %1729 = vmatprep.subr.bf16.mxu0 %v681
  %1730 = vmatpush1.bf16.msra.mxu0 %v680
  %1731 = vmatprep.subr.bf16.mxu0 %v685
  %1732 = vmatpush1.bf16.msra.mxu0 %v684
  %1733 = vmatprep.mubr.bf16.mxu0 %v1698
  %1734 = vmatmul.mubr.bf16.gmra.mrb[0].mxu0 %v1697
  %v1735 = vpop.f32.mrb[0].mxu0
  %v1736 = vadd.f32 0.0, %v1735
  %v1737 = vpop.f32.mrb[0].mxu0
  %v1738 = vadd.f32 0.0, %v1737
  %v1739 = vpop.f32.mrb[0].mxu0
  %v1740 = vpop.f32.mrb[0].mxu0
  %1741 = vdwg.mxu0
  %1742 = vmatprep.subr.bf16.mxu0 %v627
  %1743 = vmatpush1.bf16.msra.mxu0 %v626
  %1744 = vmatprep.subr.bf16.mxu0 %v631
  %1745 = vmatpush1.bf16.msra.mxu0 %v630
  %1746 = vmatprep.subr.bf16.mxu0 %v635
  %1747 = vmatpush1.bf16.msra.mxu0 %v634
  %1748 = vmatprep.subr.bf16.mxu0 %v639
  %1749 = vmatpush1.bf16.msra.mxu0 %v638
  %1750 = vmatprep.subr.bf16.mxu0 %v643
  %1751 = vmatpush1.bf16.msra.mxu0 %v642
  %1752 = vmatprep.subr.bf16.mxu0 %v647
  %1753 = vmatpush1.bf16.msra.mxu0 %v646
  %1754 = vmatprep.subr.bf16.mxu0 %v651
  %1755 = vmatpush1.bf16.msra.mxu0 %v650
  %1756 = vmatprep.subr.bf16.mxu0 %v655
  %1757 = vmatpush1.bf16.msra.mxu0 %v654
  %1758 = vmatprep.subr.bf16.mxu0 %v659
  %1759 = vmatpush1.bf16.msra.mxu0 %v658
  %1760 = vmatprep.subr.bf16.mxu0 %v663
  %1761 = vmatpush1.bf16.msra.mxu0 %v662
  %1762 = vmatprep.subr.bf16.mxu0 %v667
  %1763 = vmatpush1.bf16.msra.mxu0 %v666
  %1764 = vmatprep.subr.bf16.mxu0 %v671
  %1765 = vmatpush1.bf16.msra.mxu0 %v670
  %1766 = vmatprep.subr.bf16.mxu0 %v675
  %1767 = vmatpush1.bf16.msra.mxu0 %v674
  %1768 = vmatprep.subr.bf16.mxu0 %v679
  %1769 = vmatpush1.bf16.msra.mxu0 %v678
  %1770 = vmatprep.subr.bf16.mxu0 %v683
  %1771 = vmatpush1.bf16.msra.mxu0 %v682
  %1772 = vmatprep.subr.bf16.mxu0 %v687
  %1773 = vmatpush1.bf16.msra.mxu0 %v686
  %1774 = vmatprep.mubr.bf16.mxu0 %v1698
  %1775 = vmatmul.mubr.bf16.gmra.mrb[0].mxu0 %v1697
  %v1776 = vpop.f32.mrb[0].mxu0
  %v1777 = vadd.f32 0.0, %v1776
  %v1778 = vpop.f32.mrb[0].mxu0
  %v1779 = vadd.f32 0.0, %v1778
  %v1780 = vpop.f32.mrb[0].mxu0
  %v1781 = vpop.f32.mrb[0].mxu0
  %1782 = vdwg.mxu0
  %1783 = vmatprep.subr.bf16.mxu0 %v1071
  %1784 = vmatpush1.bf16.msra.mxu0 %v1070
  %1785 = vmatprep.subr.bf16.mxu0 %v1075
  %1786 = vmatpush1.bf16.msra.mxu0 %v1074
  %1787 = vmatprep.subr.bf16.mxu0 %v1079
  %1788 = vmatpush1.bf16.msra.mxu0 %v1078
  %1789 = vmatprep.subr.bf16.mxu0 %v1083
  %1790 = vmatpush1.bf16.msra.mxu0 %v1082
  %1791 = vmatprep.subr.bf16.mxu0 %v1087
  %1792 = vmatpush1.bf16.msra.mxu0 %v1086
  %1793 = vmatprep.subr.bf16.mxu0 %v1091
  %1794 = vmatpush1.bf16.msra.mxu0 %v1090
  %1795 = vmatprep.subr.bf16.mxu0 %v1095
  %1796 = vmatpush1.bf16.msra.mxu0 %v1094
  %1797 = vmatprep.subr.bf16.mxu0 %v1099
  %1798 = vmatpush1.bf16.msra.mxu0 %v1098
  %1799 = vmatprep.subr.bf16.mxu0 %v1103
  %1800 = vmatpush1.bf16.msra.mxu0 %v1102
  %1801 = vmatprep.subr.bf16.mxu0 %v1107
  %1802 = vmatpush1.bf16.msra.mxu0 %v1106
  %1803 = vmatprep.subr.bf16.mxu0 %v1111
  %1804 = vmatpush1.bf16.msra.mxu0 %v1110
  %1805 = vmatprep.subr.bf16.mxu0 %v1115
  %1806 = vmatpush1.bf16.msra.mxu0 %v1114
  %1807 = vmatprep.subr.bf16.mxu0 %v1119
  %1808 = vmatpush1.bf16.msra.mxu0 %v1118
  %1809 = vmatprep.subr.bf16.mxu0 %v1123
  %1810 = vmatpush1.bf16.msra.mxu0 %v1122
  %1811 = vmatprep.subr.bf16.mxu0 %v1127
  %1812 = vmatpush1.bf16.msra.mxu0 %v1126
  %1813 = vmatprep.subr.bf16.mxu0 %v1131
  %1814 = vmatpush1.bf16.msra.mxu0 %v1130
  %1815 = vmatprep.mubr.bf16.mxu0 %v1698
  %1816 = vmatmul.mubr.bf16.gmra.mrb[0].mxu0 %v1697
  %v1817 = vpop.f32.mrb[0].mxu0
  %v1818 = vadd.f32 0.0, %v1817
  %v1819 = vpop.f32.mrb[0].mxu0
  %v1820 = vadd.f32 0.0, %v1819
  %v1821 = vpop.f32.mrb[0].mxu0
  %v1822 = vpop.f32.mrb[0].mxu0
  %1823 = vdwg.mxu0
  %1824 = vmatprep.subr.bf16.mxu0 %v1073
  %1825 = vmatpush1.bf16.msra.mxu0 %v1072
  %1826 = vmatprep.subr.bf16.mxu0 %v1077
  %1827 = vmatpush1.bf16.msra.mxu0 %v1076
  %1828 = vmatprep.subr.bf16.mxu0 %v1081
  %1829 = vmatpush1.bf16.msra.mxu0 %v1080
  %1830 = vmatprep.subr.bf16.mxu0 %v1085
  %1831 = vmatpush1.bf16.msra.mxu0 %v1084
  %1832 = vmatprep.subr.bf16.mxu0 %v1089
  %1833 = vmatpush1.bf16.msra.mxu0 %v1088
  %1834 = vmatprep.subr.bf16.mxu0 %v1093
  %1835 = vmatpush1.bf16.msra.mxu0 %v1092
  %1836 = vmatprep.subr.bf16.mxu0 %v1097
  %1837 = vmatpush1.bf16.msra.mxu0 %v1096
  %1838 = vmatprep.subr.bf16.mxu0 %v1101
  %1839 = vmatpush1.bf16.msra.mxu0 %v1100
  %1840 = vmatprep.subr.bf16.mxu0 %v1105
  %1841 = vmatpush1.bf16.msra.mxu0 %v1104
  %1842 = vmatprep.subr.bf16.mxu0 %v1109
  %1843 = vmatpush1.bf16.msra.mxu0 %v1108
  %1844 = vmatprep.subr.bf16.mxu0 %v1113
  %1845 = vmatpush1.bf16.msra.mxu0 %v1112
  %1846 = vmatprep.subr.bf16.mxu0 %v1117
  %1847 = vmatpush1.bf16.msra.mxu0 %v1116
  %1848 = vmatprep.subr.bf16.mxu0 %v1121
  %1849 = vmatpush1.bf16.msra.mxu0 %v1120
  %1850 = vmatprep.subr.bf16.mxu0 %v1125
  %1851 = vmatpush1.bf16.msra.mxu0 %v1124
  %1852 = vmatprep.subr.bf16.mxu0 %v1129
  %1853 = vmatpush1.bf16.msra.mxu0 %v1128
  %1854 = vmatprep.subr.bf16.mxu0 %v1133
  %1855 = vmatpush1.bf16.msra.mxu0 %v1132
  %1856 = vmatprep.mubr.bf16.mxu0 %v1698
  %1857 = vmatmul.mubr.bf16.gmra.mrb[0].mxu0 %v1697
  %v1858 = vpop.f32.mrb[0].mxu0
  %v1859 = vadd.f32 0.0, %v1858
  %v1860 = vpop.f32.mrb[0].mxu0
  %v1861 = vadd.f32 0.0, %v1860
  %v1862 = vpop.f32.mrb[0].mxu0
  %v1863 = vpop.f32.mrb[0].mxu0
  %1864 = vdwg.mxu0
  %v1865 = vld [vmem:[#allocation2 + $0x60] sm:$0xff]
  %v1866 = vld [vmem:[#allocation2 + $0x68] sm:$0xff]
  %v1867 = vld [vmem:[#allocation2 + $0x70] sm:$0xff]
  %v1868 = vld [vmem:[#allocation2 + $0x78] sm:$0xff]
  %v1869 = vadd.f32 %v1865, %v1736
  %v1870 = vadd.f32 %v1866, %v1738
  %v1871 = vadd.f32 %v1867, %v1777
  %v1872 = vadd.f32 %v1868, %v1779
  %v1873 = vld [vmem:[#allocation5] sm:$0xff]
  %v1874 = vxor.u32 %v1869, 2147483648
  %v1875 = vxor.u32 %v1870, 2147483648
  %v1876 = vmul.f32 %v1874, 1.442695
  %v1877 = vpow.pop %v1876
  %v1878 = vmul.f32 %v1875, 1.442695
  %v1879 = vpow.pop %v1878
  %v1880 = vadd.f32 %v1877, 1.0
  %v1881 = vadd.f32 %v1879, 1.0
  %v1882 = vrcp.pop %v1880
  %v1883 = vmul.f32 1.0, %v1882
  %v1884 = vrcp.pop %v1881
  %v1885 = vmul.f32 1.0, %v1884
  %v1886 = vtanh.pop %v1871
  %v1887 = vxor.u32 %v1872, 2147483648
  %v1888 = vmul.f32 %v1887, 1.442695
  %v1889 = vpow.pop %v1888
  %v1890 = vadd.f32 %v1889, 1.0
  %v1891 = vrcp.pop %v1890
  %v1892 = vmul.f32 1.0, %v1891
  %v1893 = vmul.f32 %v1885, %v1873
  %v1894 = vmul.f32 %v1883, %v1886
  %v1895 = vadd.f32 %v1893, %v1894
  %v1896 = vtanh.pop %v1895
  %v1897 = vmul.f32 %v1892, %v1896
  %1898 = vst [vmem:[#allocation5] sm:$0xff] %v1895
  %v1899 = vpack.c.bf16 %v1897, %v1897
  %1900 = vst [vmem:[#allocation4] sm:$0xf] %v1899
  %v1901 = vadd.f32 %v1818, %v1402
  %v1902 = vadd.f32 %v1820, %v1406
  %v1903 = vadd.f32 %v1859, %v1410
  %v1904 = vadd.f32 %v1861, %v1414
  %v1905 = vld [vmem:[#allocation6] sm:$0xff]
  %v1906 = vxor.u32 %v1901, 2147483648
  %v1907 = vxor.u32 %v1902, 2147483648
  %v1908 = vmul.f32 %v1906, 1.442695
  %v1909 = vpow.pop %v1908
  %v1910 = vmul.f32 %v1907, 1.442695
  %v1911 = vpow.pop %v1910
  %v1912 = vadd.f32 %v1909, 1.0
  %v1913 = vadd.f32 %v1911, 1.0
  %v1914 = vrcp.pop %v1912
  %v1915 = vmul.f32 1.0, %v1914
  %v1916 = vrcp.pop %v1913
  %v1917 = vmul.f32 1.0, %v1916
  %v1918 = vtanh.pop %v1903
  %v1919 = vxor.u32 %v1904, 2147483648
  %v1920 = vmul.f32 %v1919, 1.442695
  %v1921 = vpow.pop %v1920
  %v1922 = vadd.f32 %v1921, 1.0
  %v1923 = vrcp.pop %v1922
  %v1924 = vmul.f32 1.0, %v1923
  %v1925 = vmul.f32 %v1917, %v1905
  %v1926 = vmul.f32 %v1915, %v1918
  %v1927 = vadd.f32 %v1925, %v1926
  %v1928 = vtanh.pop %v1927
  %v1929 = vmul.f32 %v1924, %v1928
  %1930 = vst [vmem:[#allocation6] sm:$0xff] %v1927
  %1931 = vst [vmem:[#allocation3 + $0x10] sm:$0xff] %v1929
  %v1932 = vpack.c.bf16 %v1929, %v1929
  %1933 = vst [vmem:[#allocation4 + $0x4] sm:$0xf] %v1932
  %v1934 = vld [vmem:[#allocation4] sm:$0xff]
  %v1936 = vunpack.c.l.b16 %v1934
  %v1937 = vunpack.c.h.b16 %v1934
  %v1938 = vpack.c.b16 %v1936, %v1936
  %v1939 = vpack.c.b16 %v1937, %v1937
  %1942 = vmatprep.subr.bf16.mxu0 %v625
  %1943 = vmatpush1.bf16.msra.mxu0 %v624
  %1944 = vmatprep.subr.bf16.mxu0 %v629
  %1945 = vmatpush1.bf16.msra.mxu0 %v628
  %1946 = vmatprep.subr.bf16.mxu0 %v633
  %1947 = vmatpush1.bf16.msra.mxu0 %v632
  %1948 = vmatprep.subr.bf16.mxu0 %v637
  %1949 = vmatpush1.bf16.msra.mxu0 %v636
  %1950 = vmatprep.subr.bf16.mxu0 %v641
  %1951 = vmatpush1.bf16.msra.mxu0 %v640
  %1952 = vmatprep.subr.bf16.mxu0 %v645
  %1953 = vmatpush1.bf16.msra.mxu0 %v644
  %1954 = vmatprep.subr.bf16.mxu0 %v649
  %1955 = vmatpush1.bf16.msra.mxu0 %v648
  %1956 = vmatprep.subr.bf16.mxu0 %v653
  %1957 = vmatpush1.bf16.msra.mxu0 %v652
  %1958 = vmatprep.subr.bf16.mxu0 %v657
  %1959 = vmatpush1.bf16.msra.mxu0 %v656
  %1960 = vmatprep.subr.bf16.mxu0 %v661
  %1961 = vmatpush1.bf16.msra.mxu0 %v660
  %1962 = vmatprep.subr.bf16.mxu0 %v665
  %1963 = vmatpush1.bf16.msra.mxu0 %v664
  %1964 = vmatprep.subr.bf16.mxu0 %v669
  %1965 = vmatpush1.bf16.msra.mxu0 %v668
  %1966 = vmatprep.subr.bf16.mxu0 %v673
  %1967 = vmatpush1.bf16.msra.mxu0 %v672
  %1968 = vmatprep.subr.bf16.mxu0 %v677
  %1969 = vmatpush1.bf16.msra.mxu0 %v676
  %1970 = vmatprep.subr.bf16.mxu0 %v681
  %1971 = vmatpush1.bf16.msra.mxu0 %v680
  %1972 = vmatprep.subr.bf16.mxu0 %v685
  %1973 = vmatpush1.bf16.msra.mxu0 %v684
  %1974 = vmatprep.mubr.bf16.mxu0 %v1939
  %1975 = vmatmul.mubr.bf16.gmra.mrb[0].mxu0 %v1938
  %v1976 = vpop.f32.mrb[0].mxu0
  %v1977 = vadd.f32 0.0, %v1976
  %v1978 = vpop.f32.mrb[0].mxu0
  %v1979 = vadd.f32 0.0, %v1978
  %v1980 = vpop.f32.mrb[0].mxu0
  %v1981 = vpop.f32.mrb[0].mxu0
  %1982 = vdwg.mxu0
  %1983 = vmatprep.subr.bf16.mxu0 %v627
  %1984 = vmatpush1.bf16.msra.mxu0 %v626
  %1985 = vmatprep.subr.bf16.mxu0 %v631
  %1986 = vmatpush1.bf16.msra.mxu0 %v630
  %1987 = vmatprep.subr.bf16.mxu0 %v635
  %1988 = vmatpush1.bf16.msra.mxu0 %v634
  %1989 = vmatprep.subr.bf16.mxu0 %v639
  %1990 = vmatpush1.bf16.msra.mxu0 %v638
  %1991 = vmatprep.subr.bf16.mxu0 %v643
  %1992 = vmatpush1.bf16.msra.mxu0 %v642
  %1993 = vmatprep.subr.bf16.mxu0 %v647
  %1994 = vmatpush1.bf16.msra.mxu0 %v646
  %1995 = vmatprep.subr.bf16.mxu0 %v651
  %1996 = vmatpush1.bf16.msra.mxu0 %v650
  %1997 = vmatprep.subr.bf16.mxu0 %v655
  %1998 = vmatpush1.bf16.msra.mxu0 %v654
  %1999 = vmatprep.subr.bf16.mxu0 %v659
  %2000 = vmatpush1.bf16.msra.mxu0 %v658
  %2001 = vmatprep.subr.bf16.mxu0 %v663
  %2002 = vmatpush1.bf16.msra.mxu0 %v662
  %2003 = vmatprep.subr.bf16.mxu0 %v667
  %2004 = vmatpush1.bf16.msra.mxu0 %v666
  %2005 = vmatprep.subr.bf16.mxu0 %v671
  %2006 = vmatpush1.bf16.msra.mxu0 %v670
  %2007 = vmatprep.subr.bf16.mxu0 %v675
  %2008 = vmatpush1.bf16.msra.mxu0 %v674
  %2009 = vmatprep.subr.bf16.mxu0 %v679
  %2010 = vmatpush1.bf16.msra.mxu0 %v678
  %2011 = vmatprep.subr.bf16.mxu0 %v683
  %2012 = vmatpush1.bf16.msra.mxu0 %v682
  %2013 = vmatprep.subr.bf16.mxu0 %v687
  %2014 = vmatpush1.bf16.msra.mxu0 %v686
  %2015 = vmatprep.mubr.bf16.mxu0 %v1939
  %2016 = vmatmul.mubr.bf16.gmra.mrb[0].mxu0 %v1938
  %v2017 = vpop.f32.mrb[0].mxu0
  %v2018 = vadd.f32 0.0, %v2017
  %v2019 = vpop.f32.mrb[0].mxu0
  %v2020 = vadd.f32 0.0, %v2019
  %v2021 = vpop.f32.mrb[0].mxu0
  %v2022 = vpop.f32.mrb[0].mxu0
  %2023 = vdwg.mxu0
  %2024 = vmatprep.subr.bf16.mxu0 %v1071
  %2025 = vmatpush1.bf16.msra.mxu0 %v1070
  %2026 = vmatprep.subr.bf16.mxu0 %v1075
  %2027 = vmatpush1.bf16.msra.mxu0 %v1074
  %2028 = vmatprep.subr.bf16.mxu0 %v1079
  %2029 = vmatpush1.bf16.msra.mxu0 %v1078
  %2030 = vmatprep.subr.bf16.mxu0 %v1083
  %2031 = vmatpush1.bf16.msra.mxu0 %v1082
  %2032 = vmatprep.subr.bf16.mxu0 %v1087
  %2033 = vmatpush1.bf16.msra.mxu0 %v1086
  %2034 = vmatprep.subr.bf16.mxu0 %v1091
  %2035 = vmatpush1.bf16.msra.mxu0 %v1090
  %2036 = vmatprep.subr.bf16.mxu0 %v1095
  %2037 = vmatpush1.bf16.msra.mxu0 %v1094
  %2038 = vmatprep.subr.bf16.mxu0 %v1099
  %2039 = vmatpush1.bf16.msra.mxu0 %v1098
  %2040 = vmatprep.subr.bf16.mxu0 %v1103
  %2041 = vmatpush1.bf16.msra.mxu0 %v1102
  %2042 = vmatprep.subr.bf16.mxu0 %v1107
  %2043 = vmatpush1.bf16.msra.mxu0 %v1106
  %2044 = vmatprep.subr.bf16.mxu0 %v1111
  %2045 = vmatpush1.bf16.msra.mxu0 %v1110
  %2046 = vmatprep.subr.bf16.mxu0 %v1115
  %2047 = vmatpush1.bf16.msra.mxu0 %v1114
  %2048 = vmatprep.subr.bf16.mxu0 %v1119
  %2049 = vmatpush1.bf16.msra.mxu0 %v1118
  %2050 = vmatprep.subr.bf16.mxu0 %v1123
  %2051 = vmatpush1.bf16.msra.mxu0 %v1122
  %2052 = vmatprep.subr.bf16.mxu0 %v1127
  %2053 = vmatpush1.bf16.msra.mxu0 %v1126
  %2054 = vmatprep.subr.bf16.mxu0 %v1131
  %2055 = vmatpush1.bf16.msra.mxu0 %v1130
  %2056 = vmatprep.mubr.bf16.mxu0 %v1939
  %2057 = vmatmul.mubr.bf16.gmra.mrb[0].mxu0 %v1938
  %v2058 = vpop.f32.mrb[0].mxu0
  %v2059 = vadd.f32 0.0, %v2058
  %v2060 = vpop.f32.mrb[0].mxu0
  %v2061 = vadd.f32 0.0, %v2060
  %v2062 = vpop.f32.mrb[0].mxu0
  %v2063 = vpop.f32.mrb[0].mxu0
  %2064 = vdwg.mxu0
  %2065 = vmatprep.subr.bf16.mxu0 %v1073
  %2066 = vmatpush1.bf16.msra.mxu0 %v1072
  %2067 = vmatprep.subr.bf16.mxu0 %v1077
  %2068 = vmatpush1.bf16.msra.mxu0 %v1076
  %2069 = vmatprep.subr.bf16.mxu0 %v1081
  %2070 = vmatpush1.bf16.msra.mxu0 %v1080
  %2071 = vmatprep.subr.bf16.mxu0 %v1085
  %2072 = vmatpush1.bf16.msra.mxu0 %v1084
  %2073 = vmatprep.subr.bf16.mxu0 %v1089
  %2074 = vmatpush1.bf16.msra.mxu0 %v1088
  %2075 = vmatprep.subr.bf16.mxu0 %v1093
  %2076 = vmatpush1.bf16.msra.mxu0 %v1092
  %2077 = vmatprep.subr.bf16.mxu0 %v1097
  %2078 = vmatpush1.bf16.msra.mxu0 %v1096
  %2079 = vmatprep.subr.bf16.mxu0 %v1101
  %2080 = vmatpush1.bf16.msra.mxu0 %v1100
  %2081 = vmatprep.subr.bf16.mxu0 %v1105
  %2082 = vmatpush1.bf16.msra.mxu0 %v1104
  %2083 = vmatprep.subr.bf16.mxu0 %v1109
  %2084 = vmatpush1.bf16.msra.mxu0 %v1108
  %2085 = vmatprep.subr.bf16.mxu0 %v1113
  %2086 = vmatpush1.bf16.msra.mxu0 %v1112
  %2087 = vmatprep.subr.bf16.mxu0 %v1117
  %2088 = vmatpush1.bf16.msra.mxu0 %v1116
  %2089 = vmatprep.subr.bf16.mxu0 %v1121
  %2090 = vmatpush1.bf16.msra.mxu0 %v1120
  %2091 = vmatprep.subr.bf16.mxu0 %v1125
  %2092 = vmatpush1.bf16.msra.mxu0 %v1124
  %2093 = vmatprep.subr.bf16.mxu0 %v1129
  %2094 = vmatpush1.bf16.msra.mxu0 %v1128
  %2095 = vmatprep.subr.bf16.mxu0 %v1133
  %2096 = vmatpush1.bf16.msra.mxu0 %v1132
  %2097 = vmatprep.mubr.bf16.mxu0 %v1939
  %2098 = vmatmul.mubr.bf16.gmra.mrb[0].mxu0 %v1938
  %v2099 = vpop.f32.mrb[0].mxu0
  %v2100 = vadd.f32 0.0, %v2099
  %v2101 = vpop.f32.mrb[0].mxu0
  %v2102 = vadd.f32 0.0, %v2101
  %v2103 = vpop.f32.mrb[0].mxu0
  %v2104 = vpop.f32.mrb[0].mxu0
  %2105 = vdwg.mxu0
  %v2106 = vld [vmem:[#allocation2 + $0x80] sm:$0xff]
  %v2107 = vld [vmem:[#allocation2 + $0x88] sm:$0xff]
  %v2108 = vld [vmem:[#allocation2 + $0x90] sm:$0xff]
  %v2109 = vld [vmem:[#allocation2 + $0x98] sm:$0xff]
  %v2110 = vadd.f32 %v2106, %v1977
  %v2111 = vadd.f32 %v2107, %v1979
  %v2112 = vadd.f32 %v2108, %v2018
  %v2113 = vadd.f32 %v2109, %v2020
  %v2114 = vld [vmem:[#allocation5] sm:$0xff]
  %v2115 = vxor.u32 %v2110, 2147483648
  %v2116 = vxor.u32 %v2111, 2147483648
  %v2117 = vmul.f32 %v2115, 1.442695
  %v2118 = vpow.pop %v2117
  %v2119 = vmul.f32 %v2116, 1.442695
  %v2120 = vpow.pop %v2119
  %v2121 = vadd.f32 %v2118, 1.0
  %v2122 = vadd.f32 %v2120, 1.0
  %v2123 = vrcp.pop %v2121
  %v2124 = vmul.f32 1.0, %v2123
  %v2125 = vrcp.pop %v2122
  %v2126 = vmul.f32 1.0, %v2125
  %v2127 = vtanh.pop %v2112
  %v2128 = vxor.u32 %v2113, 2147483648
  %v2129 = vmul.f32 %v2128, 1.442695
  %v2130 = vpow.pop %v2129
  %v2131 = vadd.f32 %v2130, 1.0
  %v2132 = vrcp.pop %v2131
  %v2133 = vmul.f32 1.0, %v2132
  %v2134 = vmul.f32 %v2126, %v2114
  %v2135 = vmul.f32 %v2124, %v2127
  %v2136 = vadd.f32 %v2134, %v2135
  %v2137 = vtanh.pop %v2136
  %v2138 = vmul.f32 %v2133, %v2137
  %2139 = vst [vmem:[#allocation5] sm:$0xff] %v2136
  %v2140 = vpack.c.bf16 %v2138, %v2138
  %2141 = vst [vmem:[#allocation4] sm:$0xf] %v2140
  %v2142 = vadd.f32 %v2059, %v1402
  %v2143 = vadd.f32 %v2061, %v1406
  %v2144 = vadd.f32 %v2100, %v1410
  %v2145 = vadd.f32 %v2102, %v1414
  %v2146 = vld [vmem:[#allocation6] sm:$0xff]
  %v2147 = vxor.u32 %v2142, 2147483648
  %v2148 = vxor.u32 %v2143, 2147483648
  %v2149 = vmul.f32 %v2147, 1.442695
  %v2150 = vpow.pop %v2149
  %v2151 = vmul.f32 %v2148, 1.442695
  %v2152 = vpow.pop %v2151
  %v2153 = vadd.f32 %v2150, 1.0
  %v2154 = vadd.f32 %v2152, 1.0
  %v2155 = vrcp.pop %v2153
  %v2156 = vmul.f32 1.0, %v2155
  %v2157 = vrcp.pop %v2154
  %v2158 = vmul.f32 1.0, %v2157
  %v2159 = vtanh.pop %v2144
  %v2160 = vxor.u32 %v2145, 2147483648
  %v2161 = vmul.f32 %v2160, 1.442695
  %v2162 = vpow.pop %v2161
  %v2163 = vadd.f32 %v2162, 1.0
  %v2164 = vrcp.pop %v2163
  %v2165 = vmul.f32 1.0, %v2164
  %v2166 = vmul.f32 %v2158, %v2146
  %v2167 = vmul.f32 %v2156, %v2159
  %v2168 = vadd.f32 %v2166, %v2167
  %v2169 = vtanh.pop %v2168
  %v2170 = vmul.f32 %v2165, %v2169
  %2171 = vst [vmem:[#allocation6] sm:$0xff] %v2168
  %2172 = vst [vmem:[#allocation3 + $0x18] sm:$0xff] %v2170
  %v2173 = vpack.c.bf16 %v2170, %v2170
  %2174 = vst [vmem:[#allocation4 + $0x4] sm:$0xf] %v2173
  %v2175 = vld [vmem:[#allocation4] sm:$0xff]
  %v2177 = vunpack.c.l.b16 %v2175
  %v2178 = vunpack.c.h.b16 %v2175
  %v2179 = vpack.c.b16 %v2177, %v2177
  %v2180 = vpack.c.b16 %v2178, %v2178
  %2183 = vmatprep.subr.bf16.mxu0 %v625
  %2184 = vmatpush1.bf16.msra.mxu0 %v624
  %2185 = vmatprep.subr.bf16.mxu0 %v629
  %2186 = vmatpush1.bf16.msra.mxu0 %v628
  %2187 = vmatprep.subr.bf16.mxu0 %v633
  %2188 = vmatpush1.bf16.msra.mxu0 %v632
  %2189 = vmatprep.subr.bf16.mxu0 %v637
  %2190 = vmatpush1.bf16.msra.mxu0 %v636
  %2191 = vmatprep.subr.bf16.mxu0 %v641
  %2192 = vmatpush1.bf16.msra.mxu0 %v640
  %2193 = vmatprep.subr.bf16.mxu0 %v645
  %2194 = vmatpush1.bf16.msra.mxu0 %v644
  %2195 = vmatprep.subr.bf16.mxu0 %v649
  %2196 = vmatpush1.bf16.msra.mxu0 %v648
  %2197 = vmatprep.subr.bf16.mxu0 %v653
  %2198 = vmatpush1.bf16.msra.mxu0 %v652
  %2199 = vmatprep.subr.bf16.mxu0 %v657
  %2200 = vmatpush1.bf16.msra.mxu0 %v656
  %2201 = vmatprep.subr.bf16.mxu0 %v661
  %2202 = vmatpush1.bf16.msra.mxu0 %v660
  %2203 = vmatprep.subr.bf16.mxu0 %v665
  %2204 = vmatpush1.bf16.msra.mxu0 %v664
  %2205 = vmatprep.subr.bf16.mxu0 %v669
  %2206 = vmatpush1.bf16.msra.mxu0 %v668
  %2207 = vmatprep.subr.bf16.mxu0 %v673
  %2208 = vmatpush1.bf16.msra.mxu0 %v672
  %2209 = vmatprep.subr.bf16.mxu0 %v677
  %2210 = vmatpush1.bf16.msra.mxu0 %v676
  %2211 = vmatprep.subr.bf16.mxu0 %v681
  %2212 = vmatpush1.bf16.msra.mxu0 %v680
  %2213 = vmatprep.subr.bf16.mxu0 %v685
  %2214 = vmatpush1.bf16.msra.mxu0 %v684
  %2215 = vmatprep.mubr.bf16.mxu0 %v2180
  %2216 = vmatmul.mubr.bf16.gmra.mrb[0].mxu0 %v2179
  %v2217 = vpop.f32.mrb[0].mxu0
  %v2218 = vadd.f32 0.0, %v2217
  %v2219 = vpop.f32.mrb[0].mxu0
  %v2220 = vadd.f32 0.0, %v2219
  %v2221 = vpop.f32.mrb[0].mxu0
  %v2222 = vpop.f32.mrb[0].mxu0
  %2223 = vdwg.mxu0
  %2224 = vmatprep.subr.bf16.mxu0 %v627
  %2225 = vmatpush1.bf16.msra.mxu0 %v626
  %2226 = vmatprep.subr.bf16.mxu0 %v631
  %2227 = vmatpush1.bf16.msra.mxu0 %v630
  %2228 = vmatprep.subr.bf16.mxu0 %v635
  %2229 = vmatpush1.bf16.msra.mxu0 %v634
  %2230 = vmatprep.subr.bf16.mxu0 %v639
  %2231 = vmatpush1.bf16.msra.mxu0 %v638
  %2232 = vmatprep.subr.bf16.mxu0 %v643
  %2233 = vmatpush1.bf16.msra.mxu0 %v642
  %2234 = vmatprep.subr.bf16.mxu0 %v647
  %2235 = vmatpush1.bf16.msra.mxu0 %v646
  %2236 = vmatprep.subr.bf16.mxu0 %v651
  %2237 = vmatpush1.bf16.msra.mxu0 %v650
  %2238 = vmatprep.subr.bf16.mxu0 %v655
  %2239 = vmatpush1.bf16.msra.mxu0 %v654
  %2240 = vmatprep.subr.bf16.mxu0 %v659
  %2241 = vmatpush1.bf16.msra.mxu0 %v658
  %2242 = vmatprep.subr.bf16.mxu0 %v663
  %2243 = vmatpush1.bf16.msra.mxu0 %v662
  %2244 = vmatprep.subr.bf16.mxu0 %v667
  %2245 = vmatpush1.bf16.msra.mxu0 %v666
  %2246 = vmatprep.subr.bf16.mxu0 %v671
  %2247 = vmatpush1.bf16.msra.mxu0 %v670
  %2248 = vmatprep.subr.bf16.mxu0 %v675
  %2249 = vmatpush1.bf16.msra.mxu0 %v674
  %2250 = vmatprep.subr.bf16.mxu0 %v679
  %2251 = vmatpush1.bf16.msra.mxu0 %v678
  %2252 = vmatprep.subr.bf16.mxu0 %v683
  %2253 = vmatpush1.bf16.msra.mxu0 %v682
  %2254 = vmatprep.subr.bf16.mxu0 %v687
  %2255 = vmatpush1.bf16.msra.mxu0 %v686
  %2256 = vmatprep.mubr.bf16.mxu0 %v2180
  %2257 = vmatmul.mubr.bf16.gmra.mrb[0].mxu0 %v2179
  %v2258 = vpop.f32.mrb[0].mxu0
  %v2259 = vadd.f32 0.0, %v2258
  %v2260 = vpop.f32.mrb[0].mxu0
  %v2261 = vadd.f32 0.0, %v2260
  %v2262 = vpop.f32.mrb[0].mxu0
  %v2263 = vpop.f32.mrb[0].mxu0
  %2264 = vdwg.mxu0
  %2265 = vmatprep.subr.bf16.mxu0 %v1071
  %2266 = vmatpush1.bf16.msra.mxu0 %v1070
  %2267 = vmatprep.subr.bf16.mxu0 %v1075
  %2268 = vmatpush1.bf16.msra.mxu0 %v1074
  %2269 = vmatprep.subr.bf16.mxu0 %v1079
  %2270 = vmatpush1.bf16.msra.mxu0 %v1078
  %2271 = vmatprep.subr.bf16.mxu0 %v1083
  %2272 = vmatpush1.bf16.msra.mxu0 %v1082
  %2273 = vmatprep.subr.bf16.mxu0 %v1087
  %2274 = vmatpush1.bf16.msra.mxu0 %v1086
  %2275 = vmatprep.subr.bf16.mxu0 %v1091
  %2276 = vmatpush1.bf16.msra.mxu0 %v1090
  %2277 = vmatprep.subr.bf16.mxu0 %v1095
  %2278 = vmatpush1.bf16.msra.mxu0 %v1094
  %2279 = vmatprep.subr.bf16.mxu0 %v1099
  %2280 = vmatpush1.bf16.msra.mxu0 %v1098
  %2281 = vmatprep.subr.bf16.mxu0 %v1103
  %2282 = vmatpush1.bf16.msra.mxu0 %v1102
  %2283 = vmatprep.subr.bf16.mxu0 %v1107
  %2284 = vmatpush1.bf16.msra.mxu0 %v1106
  %2285 = vmatprep.subr.bf16.mxu0 %v1111
  %2286 = vmatpush1.bf16.msra.mxu0 %v1110
  %2287 = vmatprep.subr.bf16.mxu0 %v1115
  %2288 = vmatpush1.bf16.msra.mxu0 %v1114
  %2289 = vmatprep.subr.bf16.mxu0 %v1119
  %2290 = vmatpush1.bf16.msra.mxu0 %v1118
  %2291 = vmatprep.subr.bf16.mxu0 %v1123
  %2292 = vmatpush1.bf16.msra.mxu0 %v1122
  %2293 = vmatprep.subr.bf16.mxu0 %v1127
  %2294 = vmatpush1.bf16.msra.mxu0 %v1126
  %2295 = vmatprep.subr.bf16.mxu0 %v1131
  %2296 = vmatpush1.bf16.msra.mxu0 %v1130
  %2297 = vmatprep.mubr.bf16.mxu0 %v2180
  %2298 = vmatmul.mubr.bf16.gmra.mrb[0].mxu0 %v2179
  %v2299 = vpop.f32.mrb[0].mxu0
  %v2300 = vadd.f32 0.0, %v2299
  %v2301 = vpop.f32.mrb[0].mxu0
  %v2302 = vadd.f32 0.0, %v2301
  %v2303 = vpop.f32.mrb[0].mxu0
  %v2304 = vpop.f32.mrb[0].mxu0
  %2305 = vdwg.mxu0
  %2306 = vmatprep.subr.bf16.mxu0 %v1073
  %2307 = vmatpush1.bf16.msra.mxu0 %v1072
  %2308 = vmatprep.subr.bf16.mxu0 %v1077
  %2309 = vmatpush1.bf16.msra.mxu0 %v1076
  %2310 = vmatprep.subr.bf16.mxu0 %v1081
  %2311 = vmatpush1.bf16.msra.mxu0 %v1080
  %2312 = vmatprep.subr.bf16.mxu0 %v1085
  %2313 = vmatpush1.bf16.msra.mxu0 %v1084
  %2314 = vmatprep.subr.bf16.mxu0 %v1089
  %2315 = vmatpush1.bf16.msra.mxu0 %v1088
  %2316 = vmatprep.subr.bf16.mxu0 %v1093
  %2317 = vmatpush1.bf16.msra.mxu0 %v1092
  %2318 = vmatprep.subr.bf16.mxu0 %v1097
  %2319 = vmatpush1.bf16.msra.mxu0 %v1096
  %2320 = vmatprep.subr.bf16.mxu0 %v1101
  %2321 = vmatpush1.bf16.msra.mxu0 %v1100
  %2322 = vmatprep.subr.bf16.mxu0 %v1105
  %2323 = vmatpush1.bf16.msra.mxu0 %v1104
  %2324 = vmatprep.subr.bf16.mxu0 %v1109
  %2325 = vmatpush1.bf16.msra.mxu0 %v1108
  %2326 = vmatprep.subr.bf16.mxu0 %v1113
  %2327 = vmatpush1.bf16.msra.mxu0 %v1112
  %2328 = vmatprep.subr.bf16.mxu0 %v1117
  %2329 = vmatpush1.bf16.msra.mxu0 %v1116
  %2330 = vmatprep.subr.bf16.mxu0 %v1121
  %2331 = vmatpush1.bf16.msra.mxu0 %v1120
  %2332 = vmatprep.subr.bf16.mxu0 %v1125
  %2333 = vmatpush1.bf16.msra.mxu0 %v1124
  %2334 = vmatprep.subr.bf16.mxu0 %v1129
  %2335 = vmatpush1.bf16.msra.mxu0 %v1128
  %2336 = vmatprep.subr.bf16.mxu0 %v1133
  %2337 = vmatpush1.bf16.msra.mxu0 %v1132
  %2338 = vmatprep.mubr.bf16.mxu0 %v2180
  %2339 = vmatmul.mubr.bf16.gmra.mrb[0].mxu0 %v2179
  %v2340 = vpop.f32.mrb[0].mxu0
  %v2341 = vadd.f32 0.0, %v2340
  %v2342 = vpop.f32.mrb[0].mxu0
  %v2343 = vadd.f32 0.0, %v2342
  %v2344 = vpop.f32.mrb[0].mxu0
  %v2345 = vpop.f32.mrb[0].mxu0
  %2346 = vdwg.mxu0
  %v2347 = vld [vmem:[#allocation2 + $0xa0] sm:$0xff]
  %v2348 = vld [vmem:[#allocation2 + $0xa8] sm:$0xff]
  %v2349 = vld [vmem:[#allocation2 + $0xb0] sm:$0xff]
  %v2350 = vld [vmem:[#allocation2 + $0xb8] sm:$0xff]
  %v2351 = vadd.f32 %v2347, %v2218
  %v2352 = vadd.f32 %v2348, %v2220
  %v2353 = vadd.f32 %v2349, %v2259
  %v2354 = vadd.f32 %v2350, %v2261
  %v2355 = vld [vmem:[#allocation5] sm:$0xff]
  %v2356 = vxor.u32 %v2351, 2147483648
  %v2357 = vxor.u32 %v2352, 2147483648
  %v2358 = vmul.f32 %v2356, 1.442695
  %v2359 = vpow.pop %v2358
  %v2360 = vmul.f32 %v2357, 1.442695
  %v2361 = vpow.pop %v2360
  %v2362 = vadd.f32 %v2359, 1.0
  %v2363 = vadd.f32 %v2361, 1.0
  %v2364 = vrcp.pop %v2362
  %v2365 = vmul.f32 1.0, %v2364
  %v2366 = vrcp.pop %v2363
  %v2367 = vmul.f32 1.0, %v2366
  %v2368 = vtanh.pop %v2353
  %v2369 = vxor.u32 %v2354, 2147483648
  %v2370 = vmul.f32 %v2369, 1.442695
  %v2371 = vpow.pop %v2370
  %v2372 = vadd.f32 %v2371, 1.0
  %v2373 = vrcp.pop %v2372
  %v2374 = vmul.f32 1.0, %v2373
  %v2375 = vmul.f32 %v2367, %v2355
  %v2376 = vmul.f32 %v2365, %v2368
  %v2377 = vadd.f32 %v2375, %v2376
  %v2378 = vtanh.pop %v2377
  %v2379 = vmul.f32 %v2374, %v2378
  %2380 = vst [vmem:[#allocation5] sm:$0xff] %v2377
  %v2381 = vpack.c.bf16 %v2379, %v2379
  %2382 = vst [vmem:[#allocation4] sm:$0xf] %v2381
  %v2383 = vadd.f32 %v2300, %v1402
  %v2384 = vadd.f32 %v2302, %v1406
  %v2385 = vadd.f32 %v2341, %v1410
  %v2386 = vadd.f32 %v2343, %v1414
  %v2387 = vld [vmem:[#allocation6] sm:$0xff]
  %v2388 = vxor.u32 %v2383, 2147483648
  %v2389 = vxor.u32 %v2384, 2147483648
  %v2390 = vmul.f32 %v2388, 1.442695
  %v2391 = vpow.pop %v2390
  %v2392 = vmul.f32 %v2389, 1.442695
  %v2393 = vpow.pop %v2392
  %v2394 = vadd.f32 %v2391, 1.0
  %v2395 = vadd.f32 %v2393, 1.0
  %v2396 = vrcp.pop %v2394
  %v2397 = vmul.f32 1.0, %v2396
  %v2398 = vrcp.pop %v2395
  %v2399 = vmul.f32 1.0, %v2398
  %v2400 = vtanh.pop %v2385
  %v2401 = vxor.u32 %v2386, 2147483648
  %v2402 = vmul.f32 %v2401, 1.442695
  %v2403 = vpow.pop %v2402
  %v2404 = vadd.f32 %v2403, 1.0
  %v2405 = vrcp.pop %v2404
  %v2406 = vmul.f32 1.0, %v2405
  %v2407 = vmul.f32 %v2399, %v2387
  %v2408 = vmul.f32 %v2397, %v2400
  %v2409 = vadd.f32 %v2407, %v2408
  %v2410 = vtanh.pop %v2409
  %v2411 = vmul.f32 %v2406, %v2410
  %2412 = vst [vmem:[#allocation6] sm:$0xff] %v2409
  %2413 = vst [vmem:[#allocation3 + $0x20] sm:$0xff] %v2411
  %v2414 = vpack.c.bf16 %v2411, %v2411
  %2415 = vst [vmem:[#allocation4 + $0x4] sm:$0xf] %v2414
  %v2416 = vld [vmem:[#allocation4] sm:$0xff]
  %v2418 = vunpack.c.l.b16 %v2416
  %v2419 = vunpack.c.h.b16 %v2416
  %v2420 = vpack.c.b16 %v2418, %v2418
  %v2421 = vpack.c.b16 %v2419, %v2419
  %2424 = vmatprep.subr.bf16.mxu0 %v625
  %2425 = vmatpush1.bf16.msra.mxu0 %v624
  %2426 = vmatprep.subr.bf16.mxu0 %v629
  %2427 = vmatpush1.bf16.msra.mxu0 %v628
  %2428 = vmatprep.subr.bf16.mxu0 %v633
  %2429 = vmatpush1.bf16.msra.mxu0 %v632
  %2430 = vmatprep.subr.bf16.mxu0 %v637
  %2431 = vmatpush1.bf16.msra.mxu0 %v636
  %2432 = vmatprep.subr.bf16.mxu0 %v641
  %2433 = vmatpush1.bf16.msra.mxu0 %v640
  %2434 = vmatprep.subr.bf16.mxu0 %v645
  %2435 = vmatpush1.bf16.msra.mxu0 %v644
  %2436 = vmatprep.subr.bf16.mxu0 %v649
  %2437 = vmatpush1.bf16.msra.mxu0 %v648
  %2438 = vmatprep.subr.bf16.mxu0 %v653
  %2439 = vmatpush1.bf16.msra.mxu0 %v652
  %2440 = vmatprep.subr.bf16.mxu0 %v657
  %2441 = vmatpush1.bf16.msra.mxu0 %v656
  %2442 = vmatprep.subr.bf16.mxu0 %v661
  %2443 = vmatpush1.bf16.msra.mxu0 %v660
  %2444 = vmatprep.subr.bf16.mxu0 %v665
  %2445 = vmatpush1.bf16.msra.mxu0 %v664
  %2446 = vmatprep.subr.bf16.mxu0 %v669
  %2447 = vmatpush1.bf16.msra.mxu0 %v668
  %2448 = vmatprep.subr.bf16.mxu0 %v673
  %2449 = vmatpush1.bf16.msra.mxu0 %v672
  %2450 = vmatprep.subr.bf16.mxu0 %v677
  %2451 = vmatpush1.bf16.msra.mxu0 %v676
  %2452 = vmatprep.subr.bf16.mxu0 %v681
  %2453 = vmatpush1.bf16.msra.mxu0 %v680
  %2454 = vmatprep.subr.bf16.mxu0 %v685
  %2455 = vmatpush1.bf16.msra.mxu0 %v684
  %2456 = vmatprep.mubr.bf16.mxu0 %v2421
  %2457 = vmatmul.mubr.bf16.gmra.mrb[0].mxu0 %v2420
  %v2458 = vpop.f32.mrb[0].mxu0
  %v2459 = vadd.f32 0.0, %v2458
  %v2460 = vpop.f32.mrb[0].mxu0
  %v2461 = vadd.f32 0.0, %v2460
  %v2462 = vpop.f32.mrb[0].mxu0
  %v2463 = vpop.f32.mrb[0].mxu0
  %2464 = vdwg.mxu0
  %2465 = vmatprep.subr.bf16.mxu0 %v627
  %2466 = vmatpush1.bf16.msra.mxu0 %v626
  %2467 = vmatprep.subr.bf16.mxu0 %v631
  %2468 = vmatpush1.bf16.msra.mxu0 %v630
  %2469 = vmatprep.subr.bf16.mxu0 %v635
  %2470 = vmatpush1.bf16.msra.mxu0 %v634
  %2471 = vmatprep.subr.bf16.mxu0 %v639
  %2472 = vmatpush1.bf16.msra.mxu0 %v638
  %2473 = vmatprep.subr.bf16.mxu0 %v643
  %2474 = vmatpush1.bf16.msra.mxu0 %v642
  %2475 = vmatprep.subr.bf16.mxu0 %v647
  %2476 = vmatpush1.bf16.msra.mxu0 %v646
  %2477 = vmatprep.subr.bf16.mxu0 %v651
  %2478 = vmatpush1.bf16.msra.mxu0 %v650
  %2479 = vmatprep.subr.bf16.mxu0 %v655
  %2480 = vmatpush1.bf16.msra.mxu0 %v654
  %2481 = vmatprep.subr.bf16.mxu0 %v659
  %2482 = vmatpush1.bf16.msra.mxu0 %v658
  %2483 = vmatprep.subr.bf16.mxu0 %v663
  %2484 = vmatpush1.bf16.msra.mxu0 %v662
  %2485 = vmatprep.subr.bf16.mxu0 %v667
  %2486 = vmatpush1.bf16.msra.mxu0 %v666
  %2487 = vmatprep.subr.bf16.mxu0 %v671
  %2488 = vmatpush1.bf16.msra.mxu0 %v670
  %2489 = vmatprep.subr.bf16.mxu0 %v675
  %2490 = vmatpush1.bf16.msra.mxu0 %v674
  %2491 = vmatprep.subr.bf16.mxu0 %v679
  %2492 = vmatpush1.bf16.msra.mxu0 %v678
  %2493 = vmatprep.subr.bf16.mxu0 %v683
  %2494 = vmatpush1.bf16.msra.mxu0 %v682
  %2495 = vmatprep.subr.bf16.mxu0 %v687
  %2496 = vmatpush1.bf16.msra.mxu0 %v686
  %2497 = vmatprep.mubr.bf16.mxu0 %v2421
  %2498 = vmatmul.mubr.bf16.gmra.mrb[0].mxu0 %v2420
  %v2499 = vpop.f32.mrb[0].mxu0
  %v2500 = vadd.f32 0.0, %v2499
  %v2501 = vpop.f32.mrb[0].mxu0
  %v2502 = vadd.f32 0.0, %v2501
  %v2503 = vpop.f32.mrb[0].mxu0
  %v2504 = vpop.f32.mrb[0].mxu0
  %2505 = vdwg.mxu0
  %2506 = vmatprep.subr.bf16.mxu0 %v1071
  %2507 = vmatpush1.bf16.msra.mxu0 %v1070
  %2508 = vmatprep.subr.bf16.mxu0 %v1075
  %2509 = vmatpush1.bf16.msra.mxu0 %v1074
  %2510 = vmatprep.subr.bf16.mxu0 %v1079
  %2511 = vmatpush1.bf16.msra.mxu0 %v1078
  %2512 = vmatprep.subr.bf16.mxu0 %v1083
  %2513 = vmatpush1.bf16.msra.mxu0 %v1082
  %2514 = vmatprep.subr.bf16.mxu0 %v1087
  %2515 = vmatpush1.bf16.msra.mxu0 %v1086
  %2516 = vmatprep.subr.bf16.mxu0 %v1091
  %2517 = vmatpush1.bf16.msra.mxu0 %v1090
  %2518 = vmatprep.subr.bf16.mxu0 %v1095
  %2519 = vmatpush1.bf16.msra.mxu0 %v1094
  %2520 = vmatprep.subr.bf16.mxu0 %v1099
  %2521 = vmatpush1.bf16.msra.mxu0 %v1098
  %2522 = vmatprep.subr.bf16.mxu0 %v1103
  %2523 = vmatpush1.bf16.msra.mxu0 %v1102
  %2524 = vmatprep.subr.bf16.mxu0 %v1107
  %2525 = vmatpush1.bf16.msra.mxu0 %v1106
  %2526 = vmatprep.subr.bf16.mxu0 %v1111
  %2527 = vmatpush1.bf16.msra.mxu0 %v1110
  %2528 = vmatprep.subr.bf16.mxu0 %v1115
  %2529 = vmatpush1.bf16.msra.mxu0 %v1114
  %2530 = vmatprep.subr.bf16.mxu0 %v1119
  %2531 = vmatpush1.bf16.msra.mxu0 %v1118
  %2532 = vmatprep.subr.bf16.mxu0 %v1123
  %2533 = vmatpush1.bf16.msra.mxu0 %v1122
  %2534 = vmatprep.subr.bf16.mxu0 %v1127
  %2535 = vmatpush1.bf16.msra.mxu0 %v1126
  %2536 = vmatprep.subr.bf16.mxu0 %v1131
  %2537 = vmatpush1.bf16.msra.mxu0 %v1130
  %2538 = vmatprep.mubr.bf16.mxu0 %v2421
  %2539 = vmatmul.mubr.bf16.gmra.mrb[0].mxu0 %v2420
  %v2540 = vpop.f32.mrb[0].mxu0
  %v2541 = vadd.f32 0.0, %v2540
  %v2542 = vpop.f32.mrb[0].mxu0
  %v2543 = vadd.f32 0.0, %v2542
  %v2544 = vpop.f32.mrb[0].mxu0
  %v2545 = vpop.f32.mrb[0].mxu0
  %2546 = vdwg.mxu0
  %2547 = vmatprep.subr.bf16.mxu0 %v1073
  %2548 = vmatpush1.bf16.msra.mxu0 %v1072
  %2549 = vmatprep.subr.bf16.mxu0 %v1077
  %2550 = vmatpush1.bf16.msra.mxu0 %v1076
  %2551 = vmatprep.subr.bf16.mxu0 %v1081
  %2552 = vmatpush1.bf16.msra.mxu0 %v1080
  %2553 = vmatprep.subr.bf16.mxu0 %v1085
  %2554 = vmatpush1.bf16.msra.mxu0 %v1084
  %2555 = vmatprep.subr.bf16.mxu0 %v1089
  %2556 = vmatpush1.bf16.msra.mxu0 %v1088
  %2557 = vmatprep.subr.bf16.mxu0 %v1093
  %2558 = vmatpush1.bf16.msra.mxu0 %v1092
  %2559 = vmatprep.subr.bf16.mxu0 %v1097
  %2560 = vmatpush1.bf16.msra.mxu0 %v1096
  %2561 = vmatprep.subr.bf16.mxu0 %v1101
  %2562 = vmatpush1.bf16.msra.mxu0 %v1100
  %2563 = vmatprep.subr.bf16.mxu0 %v1105
  %2564 = vmatpush1.bf16.msra.mxu0 %v1104
  %2565 = vmatprep.subr.bf16.mxu0 %v1109
  %2566 = vmatpush1.bf16.msra.mxu0 %v1108
  %2567 = vmatprep.subr.bf16.mxu0 %v1113
  %2568 = vmatpush1.bf16.msra.mxu0 %v1112
  %2569 = vmatprep.subr.bf16.mxu0 %v1117
  %2570 = vmatpush1.bf16.msra.mxu0 %v1116
  %2571 = vmatprep.subr.bf16.mxu0 %v1121
  %2572 = vmatpush1.bf16.msra.mxu0 %v1120
  %2573 = vmatprep.subr.bf16.mxu0 %v1125
  %2574 = vmatpush1.bf16.msra.mxu0 %v1124
  %2575 = vmatprep.subr.bf16.mxu0 %v1129
  %2576 = vmatpush1.bf16.msra.mxu0 %v1128
  %2577 = vmatprep.subr.bf16.mxu0 %v1133
  %2578 = vmatpush1.bf16.msra.mxu0 %v1132
  %2579 = vmatprep.mubr.bf16.mxu0 %v2421
  %2580 = vmatmul.mubr.bf16.gmra.mrb[0].mxu0 %v2420
  %v2581 = vpop.f32.mrb[0].mxu0
  %v2582 = vadd.f32 0.0, %v2581
  %v2583 = vpop.f32.mrb[0].mxu0
  %v2584 = vadd.f32 0.0, %v2583
  %v2585 = vpop.f32.mrb[0].mxu0
  %v2586 = vpop.f32.mrb[0].mxu0
  %2587 = vdwg.mxu0
  %v2588 = vld [vmem:[#allocation2 + $0xc0] sm:$0xff]
  %v2589 = vld [vmem:[#allocation2 + $0xc8] sm:$0xff]
  %v2590 = vld [vmem:[#allocation2 + $0xd0] sm:$0xff]
  %v2591 = vld [vmem:[#allocation2 + $0xd8] sm:$0xff]
  %v2592 = vadd.f32 %v2588, %v2459
  %v2593 = vadd.f32 %v2589, %v2461
  %v2594 = vadd.f32 %v2590, %v2500
  %v2595 = vadd.f32 %v2591, %v2502
  %v2596 = vld [vmem:[#allocation5] sm:$0xff]
  %v2597 = vxor.u32 %v2592, 2147483648
  %v2598 = vxor.u32 %v2593, 2147483648
  %v2599 = vmul.f32 %v2597, 1.442695
  %v2600 = vpow.pop %v2599
  %v2601 = vmul.f32 %v2598, 1.442695
  %v2602 = vpow.pop %v2601
  %v2603 = vadd.f32 %v2600, 1.0
  %v2604 = vadd.f32 %v2602, 1.0
  %v2605 = vrcp.pop %v2603
  %v2606 = vmul.f32 1.0, %v2605
  %v2607 = vrcp.pop %v2604
  %v2608 = vmul.f32 1.0, %v2607
  %v2609 = vtanh.pop %v2594
  %v2610 = vxor.u32 %v2595, 2147483648
  %v2611 = vmul.f32 %v2610, 1.442695
  %v2612 = vpow.pop %v2611
  %v2613 = vadd.f32 %v2612, 1.0
  %v2614 = vrcp.pop %v2613
  %v2615 = vmul.f32 1.0, %v2614
  %v2616 = vmul.f32 %v2608, %v2596
  %v2617 = vmul.f32 %v2606, %v2609
  %v2618 = vadd.f32 %v2616, %v2617
  %v2619 = vtanh.pop %v2618
  %v2620 = vmul.f32 %v2615, %v2619
  %2621 = vst [vmem:[#allocation5] sm:$0xff] %v2618
  %v2622 = vpack.c.bf16 %v2620, %v2620
  %2623 = vst [vmem:[#allocation4] sm:$0xf] %v2622
  %v2624 = vadd.f32 %v2541, %v1402
  %v2625 = vadd.f32 %v2543, %v1406
  %v2626 = vadd.f32 %v2582, %v1410
  %v2627 = vadd.f32 %v2584, %v1414
  %v2628 = vld [vmem:[#allocation6] sm:$0xff]
  %v2629 = vxor.u32 %v2624, 2147483648
  %v2630 = vxor.u32 %v2625, 2147483648
  %v2631 = vmul.f32 %v2629, 1.442695
  %v2632 = vpow.pop %v2631
  %v2633 = vmul.f32 %v2630, 1.442695
  %v2634 = vpow.pop %v2633
  %v2635 = vadd.f32 %v2632, 1.0
  %v2636 = vadd.f32 %v2634, 1.0
  %v2637 = vrcp.pop %v2635
  %v2638 = vmul.f32 1.0, %v2637
  %v2639 = vrcp.pop %v2636
  %v2640 = vmul.f32 1.0, %v2639
  %v2641 = vtanh.pop %v2626
  %v2642 = vxor.u32 %v2627, 2147483648
  %v2643 = vmul.f32 %v2642, 1.442695
  %v2644 = vpow.pop %v2643
  %v2645 = vadd.f32 %v2644, 1.0
  %v2646 = vrcp.pop %v2645
  %v2647 = vmul.f32 1.0, %v2646
  %v2648 = vmul.f32 %v2640, %v2628
  %v2649 = vmul.f32 %v2638, %v2641
  %v2650 = vadd.f32 %v2648, %v2649
  %v2651 = vtanh.pop %v2650
  %v2652 = vmul.f32 %v2647, %v2651
  %2653 = vst [vmem:[#allocation6] sm:$0xff] %v2650
  %2654 = vst [vmem:[#allocation3 + $0x28] sm:$0xff] %v2652
  %v2655 = vpack.c.bf16 %v2652, %v2652
  %2656 = vst [vmem:[#allocation4 + $0x4] sm:$0xf] %v2655
  %v2657 = vld [vmem:[#allocation4] sm:$0xff]
  %v2659 = vunpack.c.l.b16 %v2657
  %v2660 = vunpack.c.h.b16 %v2657
  %v2661 = vpack.c.b16 %v2659, %v2659
  %v2662 = vpack.c.b16 %v2660, %v2660
  %2665 = vmatprep.subr.bf16.mxu0 %v625
  %2666 = vmatpush1.bf16.msra.mxu0 %v624
  %2667 = vmatprep.subr.bf16.mxu0 %v629
  %2668 = vmatpush1.bf16.msra.mxu0 %v628
  %2669 = vmatprep.subr.bf16.mxu0 %v633
  %2670 = vmatpush1.bf16.msra.mxu0 %v632
  %2671 = vmatprep.subr.bf16.mxu0 %v637
  %2672 = vmatpush1.bf16.msra.mxu0 %v636
  %2673 = vmatprep.subr.bf16.mxu0 %v641
  %2674 = vmatpush1.bf16.msra.mxu0 %v640
  %2675 = vmatprep.subr.bf16.mxu0 %v645
  %2676 = vmatpush1.bf16.msra.mxu0 %v644
  %2677 = vmatprep.subr.bf16.mxu0 %v649
  %2678 = vmatpush1.bf16.msra.mxu0 %v648
  %2679 = vmatprep.subr.bf16.mxu0 %v653
  %2680 = vmatpush1.bf16.msra.mxu0 %v652
  %2681 = vmatprep.subr.bf16.mxu0 %v657
  %2682 = vmatpush1.bf16.msra.mxu0 %v656
  %2683 = vmatprep.subr.bf16.mxu0 %v661
  %2684 = vmatpush1.bf16.msra.mxu0 %v660
  %2685 = vmatprep.subr.bf16.mxu0 %v665
  %2686 = vmatpush1.bf16.msra.mxu0 %v664
  %2687 = vmatprep.subr.bf16.mxu0 %v669
  %2688 = vmatpush1.bf16.msra.mxu0 %v668
  %2689 = vmatprep.subr.bf16.mxu0 %v673
  %2690 = vmatpush1.bf16.msra.mxu0 %v672
  %2691 = vmatprep.subr.bf16.mxu0 %v677
  %2692 = vmatpush1.bf16.msra.mxu0 %v676
  %2693 = vmatprep.subr.bf16.mxu0 %v681
  %2694 = vmatpush1.bf16.msra.mxu0 %v680
  %2695 = vmatprep.subr.bf16.mxu0 %v685
  %2696 = vmatpush1.bf16.msra.mxu0 %v684
  %2697 = vmatprep.mubr.bf16.mxu0 %v2662
  %2698 = vmatmul.mubr.bf16.gmra.mrb[0].mxu0 %v2661
  %v2699 = vpop.f32.mrb[0].mxu0
  %v2700 = vadd.f32 0.0, %v2699
  %v2701 = vpop.f32.mrb[0].mxu0
  %v2702 = vadd.f32 0.0, %v2701
  %v2703 = vpop.f32.mrb[0].mxu0
  %v2704 = vpop.f32.mrb[0].mxu0
  %2705 = vdwg.mxu0
  %2706 = vmatprep.subr.bf16.mxu0 %v627
  %2707 = vmatpush1.bf16.msra.mxu0 %v626
  %2708 = vmatprep.subr.bf16.mxu0 %v631
  %2709 = vmatpush1.bf16.msra.mxu0 %v630
  %2710 = vmatprep.subr.bf16.mxu0 %v635
  %2711 = vmatpush1.bf16.msra.mxu0 %v634
  %2712 = vmatprep.subr.bf16.mxu0 %v639
  %2713 = vmatpush1.bf16.msra.mxu0 %v638
  %2714 = vmatprep.subr.bf16.mxu0 %v643
  %2715 = vmatpush1.bf16.msra.mxu0 %v642
  %2716 = vmatprep.subr.bf16.mxu0 %v647
  %2717 = vmatpush1.bf16.msra.mxu0 %v646
  %2718 = vmatprep.subr.bf16.mxu0 %v651
  %2719 = vmatpush1.bf16.msra.mxu0 %v650
  %2720 = vmatprep.subr.bf16.mxu0 %v655
  %2721 = vmatpush1.bf16.msra.mxu0 %v654
  %2722 = vmatprep.subr.bf16.mxu0 %v659
  %2723 = vmatpush1.bf16.msra.mxu0 %v658
  %2724 = vmatprep.subr.bf16.mxu0 %v663
  %2725 = vmatpush1.bf16.msra.mxu0 %v662
  %2726 = vmatprep.subr.bf16.mxu0 %v667
  %2727 = vmatpush1.bf16.msra.mxu0 %v666
  %2728 = vmatprep.subr.bf16.mxu0 %v671
  %2729 = vmatpush1.bf16.msra.mxu0 %v670
  %2730 = vmatprep.subr.bf16.mxu0 %v675
  %2731 = vmatpush1.bf16.msra.mxu0 %v674
  %2732 = vmatprep.subr.bf16.mxu0 %v679
  %2733 = vmatpush1.bf16.msra.mxu0 %v678
  %2734 = vmatprep.subr.bf16.mxu0 %v683
  %2735 = vmatpush1.bf16.msra.mxu0 %v682
  %2736 = vmatprep.subr.bf16.mxu0 %v687
  %2737 = vmatpush1.bf16.msra.mxu0 %v686
  %2738 = vmatprep.mubr.bf16.mxu0 %v2662
  %2739 = vmatmul.mubr.bf16.gmra.mrb[0].mxu0 %v2661
  %v2740 = vpop.f32.mrb[0].mxu0
  %v2741 = vadd.f32 0.0, %v2740
  %v2742 = vpop.f32.mrb[0].mxu0
  %v2743 = vadd.f32 0.0, %v2742
  %v2744 = vpop.f32.mrb[0].mxu0
  %v2745 = vpop.f32.mrb[0].mxu0
  %2746 = vdwg.mxu0
  %2747 = vmatprep.subr.bf16.mxu0 %v1071
  %2748 = vmatpush1.bf16.msra.mxu0 %v1070
  %2749 = vmatprep.subr.bf16.mxu0 %v1075
  %2750 = vmatpush1.bf16.msra.mxu0 %v1074
  %2751 = vmatprep.subr.bf16.mxu0 %v1079
  %2752 = vmatpush1.bf16.msra.mxu0 %v1078
  %2753 = vmatprep.subr.bf16.mxu0 %v1083
  %2754 = vmatpush1.bf16.msra.mxu0 %v1082
  %2755 = vmatprep.subr.bf16.mxu0 %v1087
  %2756 = vmatpush1.bf16.msra.mxu0 %v1086
  %2757 = vmatprep.subr.bf16.mxu0 %v1091
  %2758 = vmatpush1.bf16.msra.mxu0 %v1090
  %2759 = vmatprep.subr.bf16.mxu0 %v1095
  %2760 = vmatpush1.bf16.msra.mxu0 %v1094
  %2761 = vmatprep.subr.bf16.mxu0 %v1099
  %2762 = vmatpush1.bf16.msra.mxu0 %v1098
  %2763 = vmatprep.subr.bf16.mxu0 %v1103
  %2764 = vmatpush1.bf16.msra.mxu0 %v1102
  %2765 = vmatprep.subr.bf16.mxu0 %v1107
  %2766 = vmatpush1.bf16.msra.mxu0 %v1106
  %2767 = vmatprep.subr.bf16.mxu0 %v1111
  %2768 = vmatpush1.bf16.msra.mxu0 %v1110
  %2769 = vmatprep.subr.bf16.mxu0 %v1115
  %2770 = vmatpush1.bf16.msra.mxu0 %v1114
  %2771 = vmatprep.subr.bf16.mxu0 %v1119
  %2772 = vmatpush1.bf16.msra.mxu0 %v1118
  %2773 = vmatprep.subr.bf16.mxu0 %v1123
  %2774 = vmatpush1.bf16.msra.mxu0 %v1122
  %2775 = vmatprep.subr.bf16.mxu0 %v1127
  %2776 = vmatpush1.bf16.msra.mxu0 %v1126
  %2777 = vmatprep.subr.bf16.mxu0 %v1131
  %2778 = vmatpush1.bf16.msra.mxu0 %v1130
  %2779 = vmatprep.mubr.bf16.mxu0 %v2662
  %2780 = vmatmul.mubr.bf16.gmra.mrb[0].mxu0 %v2661
  %v2781 = vpop.f32.mrb[0].mxu0
  %v2782 = vadd.f32 0.0, %v2781
  %v2783 = vpop.f32.mrb[0].mxu0
  %v2784 = vadd.f32 0.0, %v2783
  %v2785 = vpop.f32.mrb[0].mxu0
  %v2786 = vpop.f32.mrb[0].mxu0
  %2787 = vdwg.mxu0
  %2788 = vmatprep.subr.bf16.mxu0 %v1073
  %2789 = vmatpush1.bf16.msra.mxu0 %v1072
  %2790 = vmatprep.subr.bf16.mxu0 %v1077
  %2791 = vmatpush1.bf16.msra.mxu0 %v1076
  %2792 = vmatprep.subr.bf16.mxu0 %v1081
  %2793 = vmatpush1.bf16.msra.mxu0 %v1080
  %2794 = vmatprep.subr.bf16.mxu0 %v1085
  %2795 = vmatpush1.bf16.msra.mxu0 %v1084
  %2796 = vmatprep.subr.bf16.mxu0 %v1089
  %2797 = vmatpush1.bf16.msra.mxu0 %v1088
  %2798 = vmatprep.subr.bf16.mxu0 %v1093
  %2799 = vmatpush1.bf16.msra.mxu0 %v1092
  %2800 = vmatprep.subr.bf16.mxu0 %v1097
  %2801 = vmatpush1.bf16.msra.mxu0 %v1096
  %2802 = vmatprep.subr.bf16.mxu0 %v1101
  %2803 = vmatpush1.bf16.msra.mxu0 %v1100
  %2804 = vmatprep.subr.bf16.mxu0 %v1105
  %2805 = vmatpush1.bf16.msra.mxu0 %v1104
  %2806 = vmatprep.subr.bf16.mxu0 %v1109
  %2807 = vmatpush1.bf16.msra.mxu0 %v1108
  %2808 = vmatprep.subr.bf16.mxu0 %v1113
  %2809 = vmatpush1.bf16.msra.mxu0 %v1112
  %2810 = vmatprep.subr.bf16.mxu0 %v1117
  %2811 = vmatpush1.bf16.msra.mxu0 %v1116
  %2812 = vmatprep.subr.bf16.mxu0 %v1121
  %2813 = vmatpush1.bf16.msra.mxu0 %v1120
  %2814 = vmatprep.subr.bf16.mxu0 %v1125
  %2815 = vmatpush1.bf16.msra.mxu0 %v1124
  %2816 = vmatprep.subr.bf16.mxu0 %v1129
  %2817 = vmatpush1.bf16.msra.mxu0 %v1128
  %2818 = vmatprep.subr.bf16.mxu0 %v1133
  %2819 = vmatpush1.bf16.msra.mxu0 %v1132
  %2820 = vmatprep.mubr.bf16.mxu0 %v2662
  %2821 = vmatmul.mubr.bf16.gmra.mrb[0].mxu0 %v2661
  %v2822 = vpop.f32.mrb[0].mxu0
  %v2823 = vadd.f32 0.0, %v2822
  %v2824 = vpop.f32.mrb[0].mxu0
  %v2825 = vadd.f32 0.0, %v2824
  %v2826 = vpop.f32.mrb[0].mxu0
  %v2827 = vpop.f32.mrb[0].mxu0
  %2828 = vdwg.mxu0
  %v2829 = vld [vmem:[#allocation2 + $0xe0] sm:$0xff]
  %v2830 = vld [vmem:[#allocation2 + $0xe8] sm:$0xff]
  %v2831 = vld [vmem:[#allocation2 + $0xf0] sm:$0xff]
  %v2832 = vld [vmem:[#allocation2 + $0xf8] sm:$0xff]
  %v2833 = vadd.f32 %v2829, %v2700
  %v2834 = vadd.f32 %v2830, %v2702
  %v2835 = vadd.f32 %v2831, %v2741
  %v2836 = vadd.f32 %v2832, %v2743
  %v2837 = vld [vmem:[#allocation5] sm:$0xff]
  %v2838 = vxor.u32 %v2833, 2147483648
  %v2839 = vxor.u32 %v2834, 2147483648
  %v2840 = vmul.f32 %v2838, 1.442695
  %v2841 = vpow.pop %v2840
  %v2842 = vmul.f32 %v2839, 1.442695
  %v2843 = vpow.pop %v2842
  %v2844 = vadd.f32 %v2841, 1.0
  %v2845 = vadd.f32 %v2843, 1.0
  %v2846 = vrcp.pop %v2844
  %v2847 = vmul.f32 1.0, %v2846
  %v2848 = vrcp.pop %v2845
  %v2849 = vmul.f32 1.0, %v2848
  %v2850 = vtanh.pop %v2835
  %v2851 = vxor.u32 %v2836, 2147483648
  %v2852 = vmul.f32 %v2851, 1.442695
  %v2853 = vpow.pop %v2852
  %v2854 = vadd.f32 %v2853, 1.0
  %v2855 = vrcp.pop %v2854
  %v2856 = vmul.f32 1.0, %v2855
  %v2857 = vmul.f32 %v2849, %v2837
  %v2858 = vmul.f32 %v2847, %v2850
  %v2859 = vadd.f32 %v2857, %v2858
  %v2860 = vtanh.pop %v2859
  %v2861 = vmul.f32 %v2856, %v2860
  %2862 = vst [vmem:[#allocation5] sm:$0xff] %v2859
  %v2863 = vpack.c.bf16 %v2861, %v2861
  %2864 = vst [vmem:[#allocation4] sm:$0xf] %v2863
  %v2865 = vadd.f32 %v2782, %v1402
  %v2866 = vadd.f32 %v2784, %v1406
  %v2867 = vadd.f32 %v2823, %v1410
  %v2868 = vadd.f32 %v2825, %v1414
  %v2869 = vld [vmem:[#allocation6] sm:$0xff]
  %v2870 = vxor.u32 %v2865, 2147483648
  %v2871 = vxor.u32 %v2866, 2147483648
  %v2872 = vmul.f32 %v2870, 1.442695
  %v2873 = vpow.pop %v2872
  %v2874 = vmul.f32 %v2871, 1.442695
  %v2875 = vpow.pop %v2874
  %v2876 = vadd.f32 %v2873, 1.0
  %v2877 = vadd.f32 %v2875, 1.0
  %v2878 = vrcp.pop %v2876
  %v2879 = vmul.f32 1.0, %v2878
  %v2880 = vrcp.pop %v2877
  %v2881 = vmul.f32 1.0, %v2880
  %v2882 = vtanh.pop %v2867
  %v2883 = vxor.u32 %v2868, 2147483648
  %v2884 = vmul.f32 %v2883, 1.442695
  %v2885 = vpow.pop %v2884
  %v2886 = vadd.f32 %v2885, 1.0
  %v2887 = vrcp.pop %v2886
  %v2888 = vmul.f32 1.0, %v2887
  %v2889 = vmul.f32 %v2881, %v2869
  %v2890 = vmul.f32 %v2879, %v2882
  %v2891 = vadd.f32 %v2889, %v2890
  %v2892 = vtanh.pop %v2891
  %v2893 = vmul.f32 %v2888, %v2892
  %2894 = vst [vmem:[#allocation6] sm:$0xff] %v2891
  %2895 = vst [vmem:[#allocation3 + $0x30] sm:$0xff] %v2893
  %v2896 = vpack.c.bf16 %v2893, %v2893
  %2897 = vst [vmem:[#allocation4 + $0x4] sm:$0xf] %v2896
  %v2898 = vld [vmem:[#allocation4] sm:$0xff]
  %v2900 = vunpack.c.l.b16 %v2898
  %v2901 = vunpack.c.h.b16 %v2898
  %v2902 = vpack.c.b16 %v2900, %v2900
  %v2903 = vpack.c.b16 %v2901, %v2901
  %2906 = vmatprep.subr.bf16.mxu0 %v1071
  %2907 = vmatpush1.bf16.msra.mxu0 %v1070
  %2908 = vmatprep.subr.bf16.mxu0 %v1075
  %2909 = vmatpush1.bf16.msra.mxu0 %v1074
  %2910 = vmatprep.subr.bf16.mxu0 %v1079
  %2911 = vmatpush1.bf16.msra.mxu0 %v1078
  %2912 = vmatprep.subr.bf16.mxu0 %v1083
  %2913 = vmatpush1.bf16.msra.mxu0 %v1082
  %2914 = vmatprep.subr.bf16.mxu0 %v1087
  %2915 = vmatpush1.bf16.msra.mxu0 %v1086
  %2916 = vmatprep.subr.bf16.mxu0 %v1091
  %2917 = vmatpush1.bf16.msra.mxu0 %v1090
  %2918 = vmatprep.subr.bf16.mxu0 %v1095
  %2919 = vmatpush1.bf16.msra.mxu0 %v1094
  %2920 = vmatprep.subr.bf16.mxu0 %v1099
  %2921 = vmatpush1.bf16.msra.mxu0 %v1098
  %2922 = vmatprep.subr.bf16.mxu0 %v1103
  %2923 = vmatpush1.bf16.msra.mxu0 %v1102
  %2924 = vmatprep.subr.bf16.mxu0 %v1107
  %2925 = vmatpush1.bf16.msra.mxu0 %v1106
  %2926 = vmatprep.subr.bf16.mxu0 %v1111
  %2927 = vmatpush1.bf16.msra.mxu0 %v1110
  %2928 = vmatprep.subr.bf16.mxu0 %v1115
  %2929 = vmatpush1.bf16.msra.mxu0 %v1114
  %2930 = vmatprep.subr.bf16.mxu0 %v1119
  %2931 = vmatpush1.bf16.msra.mxu0 %v1118
  %2932 = vmatprep.subr.bf16.mxu0 %v1123
  %2933 = vmatpush1.bf16.msra.mxu0 %v1122
  %2934 = vmatprep.subr.bf16.mxu0 %v1127
  %2935 = vmatpush1.bf16.msra.mxu0 %v1126
  %2936 = vmatprep.subr.bf16.mxu0 %v1131
  %2937 = vmatpush1.bf16.msra.mxu0 %v1130
  %2938 = vmatprep.mubr.bf16.mxu0 %v2903
  %2939 = vmatmul.mubr.bf16.gmra.mrb[0].mxu0 %v2902
  %v2940 = vpop.f32.mrb[0].mxu0
  %v2941 = vadd.f32 0.0, %v2940
  %v2942 = vpop.f32.mrb[0].mxu0
  %v2943 = vadd.f32 0.0, %v2942
  %v2944 = vpop.f32.mrb[0].mxu0
  %v2945 = vpop.f32.mrb[0].mxu0
  %2946 = vdwg.mxu0
  %2947 = vmatprep.subr.bf16.mxu0 %v1073
  %2948 = vmatpush1.bf16.msra.mxu0 %v1072
  %2949 = vmatprep.subr.bf16.mxu0 %v1077
  %2950 = vmatpush1.bf16.msra.mxu0 %v1076
  %2951 = vmatprep.subr.bf16.mxu0 %v1081
  %2952 = vmatpush1.bf16.msra.mxu0 %v1080
  %2953 = vmatprep.subr.bf16.mxu0 %v1085
  %2954 = vmatpush1.bf16.msra.mxu0 %v1084
  %2955 = vmatprep.subr.bf16.mxu0 %v1089
  %2956 = vmatpush1.bf16.msra.mxu0 %v1088
  %2957 = vmatprep.subr.bf16.mxu0 %v1093
  %2958 = vmatpush1.bf16.msra.mxu0 %v1092
  %2959 = vmatprep.subr.bf16.mxu0 %v1097
  %2960 = vmatpush1.bf16.msra.mxu0 %v1096
  %2961 = vmatprep.subr.bf16.mxu0 %v1101
  %2962 = vmatpush1.bf16.msra.mxu0 %v1100
  %2963 = vmatprep.subr.bf16.mxu0 %v1105
  %2964 = vmatpush1.bf16.msra.mxu0 %v1104
  %2965 = vmatprep.subr.bf16.mxu0 %v1109
  %2966 = vmatpush1.bf16.msra.mxu0 %v1108
  %2967 = vmatprep.subr.bf16.mxu0 %v1113
  %2968 = vmatpush1.bf16.msra.mxu0 %v1112
  %2969 = vmatprep.subr.bf16.mxu0 %v1117
  %2970 = vmatpush1.bf16.msra.mxu0 %v1116
  %2971 = vmatprep.subr.bf16.mxu0 %v1121
  %2972 = vmatpush1.bf16.msra.mxu0 %v1120
  %2973 = vmatprep.subr.bf16.mxu0 %v1125
  %2974 = vmatpush1.bf16.msra.mxu0 %v1124
  %2975 = vmatprep.subr.bf16.mxu0 %v1129
  %2976 = vmatpush1.bf16.msra.mxu0 %v1128
  %2977 = vmatprep.subr.bf16.mxu0 %v1133
  %2978 = vmatpush1.bf16.msra.mxu0 %v1132
  %2979 = vmatprep.mubr.bf16.mxu0 %v2903
  %2980 = vmatmul.mubr.bf16.gmra.mrb[0].mxu0 %v2902
  %v2981 = vpop.f32.mrb[0].mxu0
  %v2982 = vadd.f32 0.0, %v2981
  %v2983 = vpop.f32.mrb[0].mxu0
  %v2984 = vadd.f32 0.0, %v2983
  %v2985 = vpop.f32.mrb[0].mxu0
  %v2986 = vpop.f32.mrb[0].mxu0
  %2987 = vdwg.mxu0
  %v2988 = vadd.f32 %v2941, %v1402
  %v2989 = vadd.f32 %v2943, %v1406
  %v2990 = vadd.f32 %v2982, %v1410
  %v2991 = vadd.f32 %v2984, %v1414
  %v2992 = vld [vmem:[#allocation6] sm:$0xff]
  %v2993 = vxor.u32 %v2988, 2147483648
  %v2994 = vxor.u32 %v2989, 2147483648
  %v2995 = vmul.f32 %v2993, 1.442695
  %v2996 = vpow.pop %v2995
  %v2997 = vmul.f32 %v2994, 1.442695
  %v2998 = vpow.pop %v2997
  %v2999 = vadd.f32 %v2996, 1.0
  %v3000 = vadd.f32 %v2998, 1.0
  %v3001 = vrcp.pop %v2999
  %v3002 = vmul.f32 1.0, %v3001
  %v3003 = vrcp.pop %v3000
  %v3004 = vmul.f32 1.0, %v3003
  %v3005 = vtanh.pop %v2990
  %v3006 = vxor.u32 %v2991, 2147483648
  %v3007 = vmul.f32 %v3006, 1.442695
  %v3008 = vpow.pop %v3007
  %v3009 = vadd.f32 %v3008, 1.0
  %v3010 = vrcp.pop %v3009
  %v3011 = vmul.f32 1.0, %v3010
  %v3012 = vmul.f32 %v3004, %v2992
  %v3013 = vmul.f32 %v3002, %v3005
  %v3014 = vadd.f32 %v3012, %v3013
  %v3015 = vtanh.pop %v3014
  %v3016 = vmul.f32 %v3011, %v3015
  %3017 = vst [vmem:[#allocation6] sm:$0xff] %v3014
  %3018 = vst [vmem:[#allocation3 + $0x38] sm:$0xff] %v3016
  %v3019 = vpack.c.bf16 %v3016, %v3016
  %3020 = vst [vmem:[#allocation4 + $0x4] sm:$0xf] %v3019
  %v3021 = vld [vmem:[#allocation3] sm:$0xff]
  %v3022 = vld [vmem:[#allocation3 + $0x8] sm:$0xff]
  %v3023 = vld [vmem:[#allocation3 + $0x10] sm:$0xff]
  %v3024 = vld [vmem:[#allocation3 + $0x18] sm:$0xff]
  %v3025 = vld [vmem:[#allocation3 + $0x20] sm:$0xff]
  %v3026 = vld [vmem:[#allocation3 + $0x28] sm:$0xff]
  %v3027 = vld [vmem:[#allocation3 + $0x30] sm:$0xff]
  %v3028 = vld [vmem:[#allocation3 + $0x38] sm:$0xff]
  %v3029 = vpack.c.bf16 %v3022, %v3021
  %v3030 = vpack.c.bf16 %v3024, %v3023
  %v3031 = vpack.c.bf16 %v3026, %v3025
  %v3032 = vpack.c.bf16 %v3028, %v3027
  %v3033 = vld [vmem:[%s5] sm:$0xf]
  %v3034 = vld [vmem:[%s5 + $0x4] sm:$0xf]
  %v3035 = vld [vmem:[%s5 + $0x8] sm:$0xf]
  %v3036 = vld [vmem:[%s5 + $0xc] sm:$0xf]
  %v3037 = vld [vmem:[%s5 + $0x10] sm:$0xf]
  %v3038 = vld [vmem:[%s5 + $0x14] sm:$0xf]
  %v3039 = vld [vmem:[%s5 + $0x18] sm:$0xf]
  %v3040 = vld [vmem:[%s5 + $0x1c] sm:$0xf]
  %v3041 = vld [vmem:[%s5 + $0x20] sm:$0xf]
  %v3042 = vld [vmem:[%s5 + $0x24] sm:$0xf]
  %v3043 = vld [vmem:[%s5 + $0x28] sm:$0xf]
  %v3044 = vld [vmem:[%s5 + $0x2c] sm:$0xf]
  %v3045 = vld [vmem:[%s5 + $0x30] sm:$0xf]
  %v3046 = vld [vmem:[%s5 + $0x34] sm:$0xf]
  %v3047 = vld [vmem:[%s5 + $0x38] sm:$0xf]
  %v3048 = vld [vmem:[%s5 + $0x3c] sm:$0xf]
  %v3049 = vld [vmem:[%s6] sm:$0x1]
  %v3051 = vlaneseq
  %v3052 = vshrl.u32 %v3051, 7
  %v3053 = vsub.s32 0, %v3052
  %v3054 = vrot.slane %v3049, %v3053
  %v3072 = vunpack.c.l.b16 %v3033
  %v3073 = vunpack.c.l.b16 %v3034
  %v3074 = vunpack.c.l.b16 %v3035
  %v3075 = vunpack.c.l.b16 %v3036
  %v3076 = vunpack.c.l.b16 %v3037
  %v3077 = vunpack.c.l.b16 %v3038
  %v3078 = vunpack.c.l.b16 %v3039
  %v3079 = vunpack.c.l.b16 %v3040
  %v3080 = vunpack.c.l.b16 %v3041
  %v3081 = vunpack.c.l.b16 %v3042
  %v3082 = vunpack.c.l.b16 %v3043
  %v3083 = vunpack.c.l.b16 %v3044
  %v3084 = vunpack.c.l.b16 %v3045
  %v3085 = vunpack.c.l.b16 %v3046
  %v3086 = vunpack.c.l.b16 %v3047
  %v3087 = vunpack.c.l.b16 %v3048
  %v3088 = vpack.c.b16 %v3073, %v3072
  %v3089 = vpack.c.b16 %v3075, %v3074
  %v3090 = vpack.c.b16 %v3077, %v3076
  %v3091 = vpack.c.b16 %v3079, %v3078
  %v3092 = vpack.c.b16 %v3081, %v3080
  %v3093 = vpack.c.b16 %v3083, %v3082
  %v3094 = vpack.c.b16 %v3085, %v3084
  %v3095 = vpack.c.b16 %v3087, %v3086
  %3104 = vmatprep.subr.bf16.mxu0 0
  %3105 = vmatpush1.bf16.msra.mxu0 %v3088
  %3106 = vmatprep.subr.bf16.mxu0 0
  %3107 = vmatpush1.bf16.msra.mxu0 %v3089
  %3108 = vmatprep.subr.bf16.mxu0 0
  %3109 = vmatpush1.bf16.msra.mxu0 %v3090
  %3110 = vmatprep.subr.bf16.mxu0 0
  %3111 = vmatpush1.bf16.msra.mxu0 %v3091
  %3112 = vmatprep.subr.bf16.mxu0 0
  %3113 = vmatpush1.bf16.msra.mxu0 %v3092
  %3114 = vmatprep.subr.bf16.mxu0 0
  %3115 = vmatpush1.bf16.msra.mxu0 %v3093
  %3116 = vmatprep.subr.bf16.mxu0 0
  %3117 = vmatpush1.bf16.msra.mxu0 %v3094
  %3118 = vmatprep.subr.bf16.mxu0 0
  %3119 = vmatpush1.bf16.msra.mxu0 %v3095
  %3120 = vmatprep.subr.bf16.mxu0 0
  %3121 = vmatpush1.bf16.msra.mxu0 0
  %3122 = vmatprep.subr.bf16.mxu0 0
  %3123 = vmatpush1.bf16.msra.mxu0 0
  %3124 = vmatprep.subr.bf16.mxu0 0
  %3125 = vmatpush1.bf16.msra.mxu0 0
  %3126 = vmatprep.subr.bf16.mxu0 0
  %3127 = vmatpush1.bf16.msra.mxu0 0
  %3128 = vmatprep.subr.bf16.mxu0 0
  %3129 = vmatpush1.bf16.msra.mxu0 0
  %3130 = vmatprep.subr.bf16.mxu0 0
  %3131 = vmatpush1.bf16.msra.mxu0 0
  %3132 = vmatprep.subr.bf16.mxu0 0
  %3133 = vmatpush1.bf16.msra.mxu0 0
  %3134 = vmatprep.subr.bf16.mxu0 0
  %3135 = vmatpush1.bf16.msra.mxu0 0
  %3136 = vmatprep.mubr.bf16.mxu0 0
  %3137 = vmatmul.mubr.bf16.gmra.mrb[0].mxu0 %v3029
  %v3138 = vpop.f32.mrb[0].mxu0
  %v3139 = vadd.f32 %v3054, %v3138
  %v3140 = vpop.f32.mrb[0].mxu0
  %v3141 = vpop.f32.mrb[0].mxu0
  %v3142 = vadd.f32 %v3054, %v3141
  %v3143 = vpop.f32.mrb[0].mxu0
  %3144 = vmatprep.mubr.bf16.mxu0 0
  %3145 = vmatmul.mubr.bf16.gmra.mrb[0].mxu0 %v3030
  %v3146 = vpop.f32.mrb[0].mxu0
  %v3147 = vadd.f32 %v3054, %v3146
  %v3148 = vpop.f32.mrb[0].mxu0
  %v3149 = vpop.f32.mrb[0].mxu0
  %v3150 = vadd.f32 %v3054, %v3149
  %v3151 = vpop.f32.mrb[0].mxu0
  %3152 = vmatprep.mubr.bf16.mxu0 0
  %3153 = vmatmul.mubr.bf16.gmra.mrb[0].mxu0 %v3031
  %v3154 = vpop.f32.mrb[0].mxu0
  %v3155 = vadd.f32 %v3054, %v3154
  %v3156 = vpop.f32.mrb[0].mxu0
  %v3157 = vpop.f32.mrb[0].mxu0
  %v3158 = vadd.f32 %v3054, %v3157
  %v3159 = vpop.f32.mrb[0].mxu0
  %3160 = vmatprep.mubr.bf16.mxu0 0
  %3161 = vmatmul.mubr.bf16.gmra.mrb[0].mxu0 %v3032
  %v3162 = vpop.f32.mrb[0].mxu0
  %v3163 = vadd.f32 %v3054, %v3162
  %v3164 = vpop.f32.mrb[0].mxu0
  %v3165 = vpop.f32.mrb[0].mxu0
  %v3166 = vadd.f32 %v3054, %v3165
  %v3167 = vpop.f32.mrb[0].mxu0
  %3168 = vdwg.mxu0
  %v3169 = vpack.c.bf16 %v3142, %v3139
  %v3170 = vpack.c.bf16 %v3150, %v3147
  %v3171 = vpack.c.bf16 %v3158, %v3155
  %v3172 = vpack.c.bf16 %v3166, %v3163
  %v3177 = vunpack.c.l.b16 %v3169
  %v3178 = vunpack.c.h.b16 %v3169
  %v3179 = vunpack.c.l.b16 %v3170
  %v3180 = vunpack.c.h.b16 %v3170
  %v3181 = vunpack.c.l.b16 %v3171
  %v3182 = vunpack.c.h.b16 %v3171
  %v3183 = vunpack.c.l.b16 %v3172
  %v3184 = vunpack.c.h.b16 %v3172
  %v3185 = vpack.c.b16 %v3177, %v3177
  %v3186 = vpack.c.b16 %v3178, %v3178
  %v3187 = vpack.c.b16 %v3179, %v3179
  %v3188 = vpack.c.b16 %v3180, %v3180
  %v3189 = vpack.c.b16 %v3181, %v3181
  %v3190 = vpack.c.b16 %v3182, %v3182
  %v3191 = vpack.c.b16 %v3183, %v3183
  %v3192 = vpack.c.b16 %v3184, %v3184
  %3201 = vst [vmem:[%s7] sm:$0xf] %v3185
  %3202 = vst [vmem:[%s7 + $0x4] sm:$0xf] %v3186
  %3203 = vst [vmem:[%s7 + $0x8] sm:$0xf] %v3187
  %3204 = vst [vmem:[%s7 + $0xc] sm:$0xf] %v3188
  %3205 = vst [vmem:[%s7 + $0x10] sm:$0xf] %v3189
  %3206 = vst [vmem:[%s7 + $0x14] sm:$0xf] %v3190
  %3207 = vst [vmem:[%s7 + $0x18] sm:$0xf] %v3191
  %3208 = vst [vmem:[%s7 + $0x1c] sm:$0xf] %v3192
  // Predicated region
  $region30: #{ner_lstm_forward.1} parent=0 // pred_check
    _
  $region31: #{ner_lstm_forward.1} parent=0 // pred_check_branch
    %3210 = sbr.rel (0) target = $region33
  $region32: #{ner_lstm_forward.1} parent=0 // pred_region
    _
  $region33: #{ner_lstm_forward.1} parent=0 // pred_fallthru
    _
  // Predicated region
  $region34: #{ner_lstm_forward.1} parent=0 // pred_check
    _
  $region35: #{ner_lstm_forward.1} parent=0 // pred_check_branch
    %3212 = sbr.rel (0) target = $region37
  $region36: #{ner_lstm_forward.1} parent=0 // pred_region
    _
  $region37: #{ner_lstm_forward.1} parent=0 // pred_fallthru
    _

</llo_original>
